<compile_context>
chip_gen: v7x
topology: tpu7x:2x2x1
jax: 0.10.0
libtpu: 0.0.40
codegen_flags: <defaults>
</compile_context>

<pallas_src>
import jax
import jax.numpy as jnp
from jax import lax
from jax.experimental import pallas as pl
from jax.experimental.pallas import tpu as pltpu


def _conv3x3_bias_relu(x, w_t, bias):
    """3x3 'SAME' conv as one (Co,9C)x(9C,M) MXU matmul + bias-add + ReLU.

    x:    (C, Hp, Wp)   activations in the MXU operand dtype (bf16/f32),
                        spatial-minor layout (W on lanes).
    w_t:  (Co, 9*C)     conv weights with BN scale folded in, flattened over
                        (kh, kw, C) and transposed.
    bias: (Co, 1)  f32  folded BN bias (includes the conv bias).
    returns (Co, Hp*Wp) f32.
    """
    C, Hp, Wp = x.shape
    # 1-pixel zero halo built in-register (no padded scratch, no zero stores).
    zr = jnp.zeros((C, 1, Wp), x.dtype)
    zc = jnp.zeros((C, Hp + 2, 1), x.dtype)
    xp = jnp.concatenate([zr, x, zr], axis=1)            # (C, Hp+2, Wp)
    xp = jnp.concatenate([zc, xp, zc], axis=2)           # (C, Hp+2, Wp+2)
    # im2col: 9 shifted views stacked along K (a non-lane axis -> no lane-offset
    # concats).  K index = (dy*3+dx)*C + c, matching the wrapper weight layout.
    taps = [xp[:, dy:dy + Hp, dx:dx + Wp]
            for dy in range(3) for dx in range(3)]
    patch = jnp.concatenate(taps, axis=0)                # (9*C, Hp, Wp)
    patch = patch.reshape(9 * C, Hp * Wp)                # (9*C, M) — M on lanes
    acc = jnp.dot(w_t, patch, preferred_element_type=jnp.float32)   # (Co, M) f32
    return jnp.maximum(acc + bias, 0.0)


def _down_kernel(x_ref, w1_ref, b1_ref, w2_ref, b2_ref, o_ref):
    """One grid step: Bt batch elements. NCHW in, (Bt, Cout, Hp*Wp) out."""
    Bt, Cin, H, W = x_ref.shape
    Cmid = w1_ref.shape[0]
    Hp, Wp = H // 2, W // 2
    cdt = w1_ref.dtype                                   # MXU operand dtype

    w1 = w1_ref[...]                                     # (Cmid, 9*Cin)
    w2 = w2_ref[...]                                     # (Cout, 9*Cmid)
    b1 = b1_ref[...]                                     # (Cmid, 1) f32
    b2 = b2_ref[...]                                     # (Cout, 1) f32

    for b in range(Bt):                                  # static, Bt is small
        x = x_ref[b]                                     # (Cin, H, W) f32
        # MaxPool2d(2): reshape-based pair reductions (no stride-2 lane slices).
        xh = jnp.max(x.reshape(Cin, Hp, 2, W), axis=2)             # pool along H
        pooled = jnp.max(xh.reshape(Cin, Hp, Wp, 2), axis=3)       # pool along W
        pooled = pooled.astype(cdt)                      # bf16 before im2col

        h1 = _conv3x3_bias_relu(pooled, w1, b1)          # (Cmid, M) f32
        h1 = h1.reshape(Cmid, Hp, Wp).astype(cdt)
        h2 = _conv3x3_bias_relu(h1, w2, b2)              # (Cout, M) f32

        o_ref[b] = h2.astype(o_ref.dtype)                # lane-dense store


def _vmem_limit_bytes():
    """Scoped-VMEM limit derived from the chip (v5e/v6e: 128 MiB, v7x: 64 MiB)."""
    cap = 128 * 1024 * 1024
    try:
        cap = int(pltpu.get_tpu_info().vmem_capacity_bytes)
    except Exception:
        pass
    return max(32 * 1024 * 1024, min(cap * 3 // 4, 96 * 1024 * 1024))


def _pick_batch_tile(N, Cin, Cmid, Cout, H, W, cdt, budget_bytes):
    """Largest divisor Bt of N that keeps >= 2 grid steps (2-TC chips) and whose
    per-step live set fits the VMEM budget."""
    Hp, Wp = H // 2, W // 2
    M = Hp * Wp
    isz = jnp.dtype(cdt).itemsize

    def step_bytes(bt):
        x_blk = 2 * bt * Cin * H * W * 4          # input block (double-buffered)
        o_blk = 2 * bt * Cout * M * 4             # output block (double-buffered)
        work = (Cin * M * isz                     # pooled
                + 9 * Cin * M * isz               # conv1 im2col patch
                + 9 * Cmid * M * isz              # conv2 im2col patch
                + (Cmid + Cout) * M * 4)          # h1 + conv accumulator (f32)
        return x_blk + o_blk + 2 * work           # 2x headroom for extra copies

    best = 1
    for bt in range(1, N + 1):
        if N % bt:
            continue
        if N >= 2 and N // bt < 2:                # keep >= 2 steps for megacore
            continue
        if step_bytes(bt) > budget_bytes:
            continue
        best = bt
    return best


def down_forward(x_nchw, w1_hwio, scale1, bias1, w2_hwio, scale2, bias2,
                 *, use_bf16=True):
    """x_nchw: (N, Cin, H, W) float32 -> (N, Cout, H//2, W//2) float32."""
    N, Cin, H, W = x_nchw.shape
    assert H % 2 == 0 and W % 2 == 0, "MaxPool2d(2) path assumes even H and W"
    Cmid = w1_hwio.shape[-1]
    Cout = w2_hwio.shape[-1]
    Hp, Wp = H // 2, W // 2
    M = Hp * Wp

    cdt = jnp.bfloat16 if use_bf16 else jnp.float32
    x = x_nchw.astype(jnp.float32)                 # stays NCHW — no wrapper transpose

    # Fold BN scale into the conv weights (per output channel), flatten over
    # (kh, kw, Cin) and transpose so the kernel matmul is (Co, 9C) x (9C, M).
    w1f = (w1_hwio.reshape(9 * Cin, Cmid) * scale1[None, :]).T.astype(cdt)   # (Cmid, 9*Cin)
    w2f = (w2_hwio.reshape(9 * Cmid, Cout) * scale2[None, :]).T.astype(cdt)  # (Cout, 9*Cmid)
    b1 = bias1.reshape(Cmid, 1).astype(jnp.float32)
    b2 = bias2.reshape(Cout, 1).astype(jnp.float32)

    vmem_limit = _vmem_limit_bytes()
    Bt = _pick_batch_tile(N, Cin, Cmid, Cout, H, W, cdt, vmem_limit // 2)
    Nb = N // Bt

    out = pl.pallas_call(
        _down_kernel,
        out_shape=jax.ShapeDtypeStruct((N, Cout, M), jnp.float32),
        grid_spec=pltpu.PrefetchScalarGridSpec(
            num_scalar_prefetch=0,
            grid=(Nb,),
            in_specs=[
                pl.BlockSpec((Bt, Cin, H, W), lambda b: (b, 0, 0, 0)),
                # Loop-invariant operands (BN-folded weights / biases).
                pl.BlockSpec((Cmid, 9 * Cin), lambda b: (0, 0)),
                pl.BlockSpec((Cmid, 1), lambda b: (0, 0)),
                pl.BlockSpec((Cout, 9 * Cmid), lambda b: (0, 0)),
                pl.BlockSpec((Cout, 1), lambda b: (0, 0)),
            ],
            out_specs=pl.BlockSpec((Bt, Cout, M), lambda b: (b, 0, 0)),
        ),
        compiler_params=pltpu.CompilerParams(
            dimension_semantics=("parallel",),
            vmem_limit_bytes=vmem_limit,
        ),
    )(x, w1f, b1, w2f, b2)

    # (N, Cout, Hp*Wp) -> (N, Cout, Hp, Wp): contiguous reshape, no HBM transpose.
    return out.reshape(N, Cout, Hp, Wp)


def _reference(x_nchw, w1_hwio, scale1, bias1, w2_hwio, scale2, bias2):
    """Pure-JAX reference (NHWC conv / reduce_window)."""
    x = jnp.transpose(x_nchw, (0, 2, 3, 1))
    pooled = lax.reduce_window(x, -jnp.inf, lax.max,
                               (1, 2, 2, 1), (1, 2, 2, 1), "VALID")
    dn = ("NHWC", "HWIO", "NHWC")
    h1 = lax.conv_general_dilated(pooled, w1_hwio, (1, 1), "SAME",
                                  dimension_numbers=dn)
    h1 = jnp.maximum(h1 * scale1 + bias1, 0.0)
    h2 = lax.conv_general_dilated(h1, w2_hwio, (1, 1), "SAME",
                                  dimension_numbers=dn)
    h2 = jnp.maximum(h2 * scale2 + bias2, 0.0)
    return jnp.transpose(h2, (0, 3, 1, 2))


def _make_params(key, in_channels, out_channels):
    """Deterministic synthetic parameters for Down(in_channels, out_channels)."""
    mid_channels = out_channels
    k1, k2, k3, k4 = jax.random.split(key, 4)
    eps = 1e-5

    # Conv weights in PyTorch OIHW, then to HWIO.
    w1_oihw = 0.1 * jax.random.normal(k1, (mid_channels, in_channels, 3, 3), jnp.float32)
    w2_oihw = 0.1 * jax.random.normal(k2, (out_channels, mid_channels, 3, 3), jnp.float32)
    w1_hwio = jnp.transpose(w1_oihw, (2, 3, 1, 0))
    w2_hwio = jnp.transpose(w2_oihw, (2, 3, 1, 0))
    b1_conv = 0.1 * jax.random.normal(k3, (mid_channels,), jnp.float32)
    b2_conv = 0.1 * jax.random.normal(k4, (out_channels,), jnp.float32)

    # BatchNorm (inference mode, default init): gamma=1, beta=0, mean=0, var=1.
    def fold(gamma, beta, mean, var, conv_bias):
        scale = gamma / jnp.sqrt(var + eps)
        bias = beta + scale * (conv_bias - mean)
        return scale, bias

    scale1, bias1 = fold(jnp.ones(mid_channels), jnp.zeros(mid_channels),
                         jnp.zeros(mid_channels), jnp.ones(mid_channels), b1_conv)
    scale2, bias2 = fold(jnp.ones(out_channels), jnp.zeros(out_channels),
                         jnp.zeros(out_channels), jnp.ones(out_channels), b2_conv)
    return w1_hwio, scale1, bias1, w2_hwio, scale2, bias2


if __name__ == "__main__":
    key = jax.random.PRNGKey(0)
    kx, kp = jax.random.split(key)

    N, Cin, H, W = 2, 4, 16, 16     # Down(in_channels=4, out_channels=8)
    Cout = 8
    x = jax.random.normal(kx, (N, Cin, H, W), jnp.float32)
    params = _make_params(kp, Cin, Cout)

    ref = _reference(x, *params)

    # f32 MXU-operand path: tight check against the XLA reference.
    out_f32 = jax.block_until_ready(down_forward(x, *params, use_bf16=False))
    assert out_f32.shape == (N, Cout, H // 2, W // 2), out_f32.shape
    assert jnp.allclose(out_f32, ref, rtol=1e-3, atol=1e-3), \
        float(jnp.max(jnp.abs(out_f32 - ref)))

    # Default path: bf16 im2col / MXU operands, f32 accumulation (looser check).
    out = jax.block_until_ready(down_forward(x, *params))
    assert out.shape == (N, Cout, H // 2, W // 2), out.shape
    assert jnp.allclose(out, ref, rtol=1e-1, atol=1e-1), \
        float(jnp.max(jnp.abs(out - ref)))

    print("KERNEL_OK")
</pallas_src>

<mosaic_0001>
module attributes {stable_mosaic.version = 11 : i64} {
  func.func @_down_kernel(%arg0: i32, %arg1: memref<1x4x16x16xf32, #tpu.memory_space<vmem>>, %arg2: memref<8x36xf32, #tpu.memory_space<vmem>>, %arg3: memref<8x1xf32, #tpu.memory_space<vmem>>, %arg4: memref<8x72xf32, #tpu.memory_space<vmem>>, %arg5: memref<8x1xf32, #tpu.memory_space<vmem>>, %arg6: memref<1x8x64xf32, #tpu.memory_space<vmem>>) attributes {dimension_semantics = [#tpu.dimension_semantics<parallel>], iteration_bounds = array<i64: 2>, scalar_prefetch = 0 : i64, scratch_operands = 0 : i64, tpu.core_type = #tpu.core_type<tc>, window_params = [{transform_indices = @transform_0, window_bounds = array<i64: 1, 4, 16, 16>}, {pipeline_mode = #tpu.pipeline_mode<synchronous>, transform_indices = @transform_1, window_bounds = array<i64: 8, 36>}, {pipeline_mode = #tpu.pipeline_mode<synchronous>, transform_indices = @transform_2, window_bounds = array<i64: 8, 1>}, {pipeline_mode = #tpu.pipeline_mode<synchronous>, transform_indices = @transform_3, window_bounds = array<i64: 8, 72>}, {pipeline_mode = #tpu.pipeline_mode<synchronous>, transform_indices = @transform_4, window_bounds = array<i64: 8, 1>}, {transform_indices = @transform_5, window_bounds = array<i64: 1, 8, 64>}]} {
    %c0 = arith.constant 0 : index
    %c0_0 = arith.constant 0 : index
    %0 = vector.load %arg2[%c0, %c0_0] : memref<8x36xf32, #tpu.memory_space<vmem>>, vector<8x36xf32>
    %c0_1 = arith.constant 0 : index
    %c0_2 = arith.constant 0 : index
    %1 = vector.load %arg4[%c0_1, %c0_2] : memref<8x72xf32, #tpu.memory_space<vmem>>, vector<8x72xf32>
    %c0_3 = arith.constant 0 : index
    %c0_4 = arith.constant 0 : index
    %2 = vector.load %arg3[%c0_3, %c0_4] : memref<8x1xf32, #tpu.memory_space<vmem>>, vector<8x1xf32>
    %c0_5 = arith.constant 0 : index
    %c0_6 = arith.constant 0 : index
    %3 = vector.load %arg5[%c0_5, %c0_6] : memref<8x1xf32, #tpu.memory_space<vmem>>, vector<8x1xf32>
    %c0_7 = arith.constant 0 : index
    %c0_8 = arith.constant 0 : index
    %c0_9 = arith.constant 0 : index
    %c0_10 = arith.constant 0 : index
    %4 = vector.load %arg1[%c0_7, %c0_8, %c0_9, %c0_10] : memref<1x4x16x16xf32, #tpu.memory_space<vmem>>, vector<1x4x16x16xf32>
    %5 = vector.shape_cast %4 : vector<1x4x16x16xf32> to vector<4x16x16xf32>
    %6 = vector.shape_cast %5 : vector<4x16x16xf32> to vector<4x8x2x16xf32>
    %cst = arith.constant dense<0xFF800000> : vector<4x8x16xf32>
    %7 = vector.multi_reduction <maximumf>, %6, %cst [2] : vector<4x8x2x16xf32> to vector<4x8x16xf32>
    %8 = vector.shape_cast %7 : vector<4x8x16xf32> to vector<4x8x8x2xf32>
    %cst_11 = arith.constant dense<0xFF800000> : vector<4x8x8xf32>
    %9 = vector.multi_reduction <maximumf>, %8, %cst_11 [3] : vector<4x8x8x2xf32> to vector<4x8x8xf32>
    %cst_12 = arith.constant 0.000000e+00 : f32
    %10 = vector.broadcast %cst_12 : f32 to vector<4x1x8xf32>
    %cst_13 = arith.constant 0.000000e+00 : f32
    %11 = vector.broadcast %cst_13 : f32 to vector<4x10x1xf32>
    %12 = tpu.concatenate %10, %9, %10 in 1 : vector<4x1x8xf32>, vector<4x8x8xf32>, vector<4x1x8xf32> -> vector<4x10x8xf32>
    %13 = tpu.concatenate %11, %12, %11 in 2 : vector<4x10x1xf32>, vector<4x10x8xf32>, vector<4x10x1xf32> -> vector<4x10x10xf32>
    %14 = vector.extract_strided_slice %13 {offsets = [0, 0, 0], sizes = [4, 8, 8], strides = [1, 1, 1]} : vector<4x10x10xf32> to vector<4x8x8xf32>
    %15 = vector.extract_strided_slice %13 {offsets = [0, 0, 1], sizes = [4, 8, 8], strides = [1, 1, 1]} : vector<4x10x10xf32> to vector<4x8x8xf32>
    %16 = vector.extract_strided_slice %13 {offsets = [0, 0, 2], sizes = [4, 8, 8], strides = [1, 1, 1]} : vector<4x10x10xf32> to vector<4x8x8xf32>
    %17 = vector.extract_strided_slice %13 {offsets = [0, 1, 0], sizes = [4, 8, 8], strides = [1, 1, 1]} : vector<4x10x10xf32> to vector<4x8x8xf32>
    %18 = vector.extract_strided_slice %13 {offsets = [0, 1, 1], sizes = [4, 8, 8], strides = [1, 1, 1]} : vector<4x10x10xf32> to vector<4x8x8xf32>
    %19 = vector.extract_strided_slice %13 {offsets = [0, 1, 2], sizes = [4, 8, 8], strides = [1, 1, 1]} : vector<4x10x10xf32> to vector<4x8x8xf32>
    %20 = vector.extract_strided_slice %13 {offsets = [0, 2, 0], sizes = [4, 8, 8], strides = [1, 1, 1]} : vector<4x10x10xf32> to vector<4x8x8xf32>
    %21 = vector.extract_strided_slice %13 {offsets = [0, 2, 1], sizes = [4, 8, 8], strides = [1, 1, 1]} : vector<4x10x10xf32> to vector<4x8x8xf32>
    %22 = vector.extract_strided_slice %13 {offsets = [0, 2, 2], sizes = [4, 8, 8], strides = [1, 1, 1]} : vector<4x10x10xf32> to vector<4x8x8xf32>
    %23 = tpu.concatenate %14, %15, %16, %17, %18, %19, %20, %21, %22 in 0 : vector<4x8x8xf32>, vector<4x8x8xf32>, vector<4x8x8xf32>, vector<4x8x8xf32>, vector<4x8x8xf32>, vector<4x8x8xf32>, vector<4x8x8xf32>, vector<4x8x8xf32>, vector<4x8x8xf32> -> vector<36x8x8xf32>
    %24 = vector.shape_cast %23 : vector<36x8x8xf32> to vector<36x64xf32>
    %cst_14 = arith.constant dense<0.000000e+00> : vector<8x64xf32>
    %25 = tpu.matmul %0, %24, %cst_14 {dimension_numbers = #tpu.dot_dimension_numbers<[1], [0], [0], [1], [0, 0, 1, 1], [], []>} : vector<8x36xf32>, vector<36x64xf32>, vector<8x64xf32> -> vector<8x64xf32>
    %26 = vector.broadcast %2 : vector<8x1xf32> to vector<8x64xf32>
    %27 = arith.addf %25, %26 : vector<8x64xf32>
    %cst_15 = arith.constant 0.000000e+00 : f32
    %28 = vector.broadcast %cst_15 : f32 to vector<8x64xf32>
    %29 = arith.maximumf %27, %28 : vector<8x64xf32>
    %30 = vector.shape_cast %29 : vector<8x64xf32> to vector<8x8x8xf32>
    %cst_16 = arith.constant 0.000000e+00 : f32
    %31 = vector.broadcast %cst_16 : f32 to vector<8x1x8xf32>
    %cst_17 = arith.constant 0.000000e+00 : f32
    %32 = vector.broadcast %cst_17 : f32 to vector<8x10x1xf32>
    %33 = tpu.concatenate %31, %30, %31 in 1 : vector<8x1x8xf32>, vector<8x8x8xf32>, vector<8x1x8xf32> -> vector<8x10x8xf32>
    %34 = tpu.concatenate %32, %33, %32 in 2 : vector<8x10x1xf32>, vector<8x10x8xf32>, vector<8x10x1xf32> -> vector<8x10x10xf32>
    %35 = vector.extract_strided_slice %34 {offsets = [0, 0, 0], sizes = [8, 8, 8], strides = [1, 1, 1]} : vector<8x10x10xf32> to vector<8x8x8xf32>
    %36 = vector.extract_strided_slice %34 {offsets = [0, 0, 1], sizes = [8, 8, 8], strides = [1, 1, 1]} : vector<8x10x10xf32> to vector<8x8x8xf32>
    %37 = vector.extract_strided_slice %34 {offsets = [0, 0, 2], sizes = [8, 8, 8], strides = [1, 1, 1]} : vector<8x10x10xf32> to vector<8x8x8xf32>
    %38 = vector.extract_strided_slice %34 {offsets = [0, 1, 0], sizes = [8, 8, 8], strides = [1, 1, 1]} : vector<8x10x10xf32> to vector<8x8x8xf32>
    %39 = vector.extract_strided_slice %34 {offsets = [0, 1, 1], sizes = [8, 8, 8], strides = [1, 1, 1]} : vector<8x10x10xf32> to vector<8x8x8xf32>
    %40 = vector.extract_strided_slice %34 {offsets = [0, 1, 2], sizes = [8, 8, 8], strides = [1, 1, 1]} : vector<8x10x10xf32> to vector<8x8x8xf32>
    %41 = vector.extract_strided_slice %34 {offsets = [0, 2, 0], sizes = [8, 8, 8], strides = [1, 1, 1]} : vector<8x10x10xf32> to vector<8x8x8xf32>
    %42 = vector.extract_strided_slice %34 {offsets = [0, 2, 1], sizes = [8, 8, 8], strides = [1, 1, 1]} : vector<8x10x10xf32> to vector<8x8x8xf32>
    %43 = vector.extract_strided_slice %34 {offsets = [0, 2, 2], sizes = [8, 8, 8], strides = [1, 1, 1]} : vector<8x10x10xf32> to vector<8x8x8xf32>
    %44 = tpu.concatenate %35, %36, %37, %38, %39, %40, %41, %42, %43 in 0 : vector<8x8x8xf32>, vector<8x8x8xf32>, vector<8x8x8xf32>, vector<8x8x8xf32>, vector<8x8x8xf32>, vector<8x8x8xf32>, vector<8x8x8xf32>, vector<8x8x8xf32>, vector<8x8x8xf32> -> vector<72x8x8xf32>
    %45 = vector.shape_cast %44 : vector<72x8x8xf32> to vector<72x64xf32>
    %cst_18 = arith.constant dense<0.000000e+00> : vector<8x64xf32>
    %46 = tpu.matmul %1, %45, %cst_18 {dimension_numbers = #tpu.dot_dimension_numbers<[1], [0], [0], [1], [0, 0, 1, 1], [], []>} : vector<8x72xf32>, vector<72x64xf32>, vector<8x64xf32> -> vector<8x64xf32>
    %47 = vector.broadcast %3 : vector<8x1xf32> to vector<8x64xf32>
    %48 = arith.addf %46, %47 : vector<8x64xf32>
    %cst_19 = arith.constant 0.000000e+00 : f32
    %49 = vector.broadcast %cst_19 : f32 to vector<8x64xf32>
    %50 = arith.maximumf %48, %49 : vector<8x64xf32>
    %c0_20 = arith.constant 0 : index
    %c0_21 = arith.constant 0 : index
    %c0_22 = arith.constant 0 : index
    %51 = vector.load %arg6[%c0_20, %c0_21, %c0_22] : memref<1x8x64xf32, #tpu.memory_space<vmem>>, vector<1x8x64xf32>
    %52 = vector.shape_cast %51 : vector<1x8x64xf32> to vector<8x64xf32>
    %53 = vector.shape_cast %50 : vector<8x64xf32> to vector<1x8x64xf32>
    tpu.vector_store %arg6[%c0_20, %c0_21, %c0_22], %53 {strides = array<i32>} : memref<1x8x64xf32, #tpu.memory_space<vmem>>, vector<1x8x64xf32>,
    return
  }
  func.func @transform_0(%arg0: i32) -> (i32, i32, i32, i32) {
    %c0_i32 = arith.constant 0 : i32
    %c0_i32_0 = arith.constant 0 : i32
    %c0_i32_1 = arith.constant 0 : i32
    %c0_i32_2 = arith.constant 0 : i32
    return %arg0, %c0_i32, %c0_i32_0, %c0_i32_1 : i32, i32, i32, i32
  }
  func.func @transform_1(%arg0: i32) -> (i32, i32) {
    %c0_i32 = arith.constant 0 : i32
    %c0_i32_0 = arith.constant 0 : i32
    %c0_i32_1 = arith.constant 0 : i32
    return %c0_i32, %c0_i32_0 : i32, i32
  }
  func.func @transform_2(%arg0: i32) -> (i32, i32) {
    %c0_i32 = arith.constant 0 : i32
    %c0_i32_0 = arith.constant 0 : i32
    %c0_i32_1 = arith.constant 0 : i32
    return %c0_i32, %c0_i32_0 : i32, i32
  }
  func.func @transform_3(%arg0: i32) -> (i32, i32) {
    %c0_i32 = arith.constant 0 : i32
    %c0_i32_0 = arith.constant 0 : i32
    %c0_i32_1 = arith.constant 0 : i32
    return %c0_i32, %c0_i32_0 : i32, i32
  }
  func.func @transform_4(%arg0: i32) -> (i32, i32) {
    %c0_i32 = arith.constant 0 : i32
    %c0_i32_0 = arith.constant 0 : i32
    %c0_i32_1 = arith.constant 0 : i32
    return %c0_i32, %c0_i32_0 : i32, i32
  }
  func.func @transform_5(%arg0: i32) -> (i32, i32, i32) {
    %c0_i32 = arith.constant 0 : i32
    %c0_i32_0 = arith.constant 0 : i32
    %c0_i32_1 = arith.constant 0 : i32
    return %arg0, %c0_i32, %c0_i32_0 : i32, i32, i32
  }
}

</mosaic_0001>

<llo_original>
// kernel: tpu_custom_call.1
$region0: #{tpu_custom_call.1}
  #allocation0 [shape = 'u32[]', space=smem, size = 0x4, offset = 0x4, fixed_abs, tag = 'smem constant byte address 0x4 - core index']
  #allocation1 [shape = 'u32[144,128]{1,0:T(1,128)}', space=vmem, size = 0x12000, scoped, tag = 'internal scratch']
  %s0 = inlined_call_operand.hbm [shape: f32[2,4,16,16], index: 0, kind: input, shape index: {}]
  %s1 = inlined_call_operand.hbm [shape: f32[8,36], index: 1, kind: input, shape index: {}]
  %s2 = inlined_call_operand.hbm [shape: f32[8,1], index: 2, kind: input, shape index: {}]
  %s3 = inlined_call_operand.hbm [shape: f32[8,72], index: 3, kind: input, shape index: {}]
  %s4 = inlined_call_operand.hbm [shape: f32[8,1], index: 4, kind: input, shape index: {}]
  %s5 = inlined_call_operand.hbm [shape: f32[2,8,64], index: 5, kind: output, shape index: {}]
  %s6 = sld [smem:[#allocation0]]
  $region73: #{tpu_custom_call.1} parent=0
    _
  %s8 = ssub.s32 1, %s6
  %s9 = scalar_select 0, %s8, %s6
  $region1: #{tpu_custom_call.1} parent=0
    #allocation2 [shape = 'u8[65536]{0}', space=vmem, size = 0x10000, scoped, tag = 'input window, operand 0']
    #allocation3 [shape = 's32[2]{0}', space=sflag, size = 0x8, scoped, tag = 'scoped memory for tpu_custom_call.1']
    #allocation4 [shape = 's32[2]{0}', space=sflag, size = 0x8, scoped, tag = 'scoped memory for tpu_custom_call.1']
    #allocation5 [shape = 'u8[4096]{0}', space=vmem, size = 0x1000, scoped, tag = 'input window, operand 1, single buffered']
    #allocation6 [shape = 's32[1]{0}', space=sflag, size = 0x4, scoped, tag = 'scoped memory for tpu_custom_call.1']
    #allocation7 [shape = 'u8[4096]{0}', space=vmem, size = 0x1000, scoped, tag = 'input window, operand 2, single buffered']
    #allocation8 [shape = 'u8[4096]{0}', space=vmem, size = 0x1000, scoped, tag = 'input window, operand 3, single buffered']
    #allocation9 [shape = 's32[1]{0}', space=sflag, size = 0x4, scoped, tag = 'scoped memory for tpu_custom_call.1']
    #allocation10 [shape = 'u8[4096]{0}', space=vmem, size = 0x1000, scoped, tag = 'input window, operand 4, single buffered']
    #allocation11 [shape = 'u8[8192]{0}', space=vmem, size = 0x2000, scoped, tag = 'output window, operand 0']
    %10 = vsyncpa [#allocation3], 0
    %s11 = scalar_lea.sflag [#allocation3], 1
    %12 = vsyncpa %s11, 0
    %13 = vsyncpa [#allocation6], 0
    %14 = vsyncpa [#allocation9], 0
    %15 = vsyncpa [#allocation4], 0
    %s16 = scalar_lea.sflag [#allocation4], 1
    %17 = vsyncpa %s16, 0
    loop: start=0, step=1, limit=4
    $region2: #{tpu_custom_call.1} parent=1 // loop_pre_header
      _
    $region3: #{tpu_custom_call.1} parent=1 // loop_header
      %s19 = sphi 0, %s23
      %p20 = scmp.ge.s32.totalorder %s19, 4
      %s29 = sphi 0, %s31
      %s32 = sphi 0, %s29
      %s33 = sphi 0, %s32
      %s49 = sphi 0, %s33
      %s53 = sphi 0, %s53
      %s55 = sphi 0, %s53
      %s56 = sphi 0, %s55
      %s70 = sphi 0, %s56
      %s74 = sphi 0, %s74
      %s76 = sphi 0, %s74
      %s77 = sphi 0, %s76
      %s91 = sphi 0, %s77
      %s95 = sphi 0, %s95
      %s97 = sphi 0, %s95
      %s98 = sphi 0, %s97
      %s112 = sphi 0, %s98
      %s116 = sphi 0, %s116
      %s118 = sphi 0, %s116
      %s119 = sphi 0, %s118
      %s133 = sphi 0, %s119
      %s139 = sphi 0, %s141
      %s142 = sphi 0, %s139
      %s143 = sphi 0, %s142
      %s159 = sphi 0, %s143
    $region4: #{tpu_custom_call.1} parent=1 // loop_header_branch
      %22 = sbr.rel (%p20) target = $region8
    $region5: #{tpu_custom_call.1} parent=1 // loop_body
      %s24 = ssub.s32 %s19, 1
      %s25 = ssub.s32 %s19, 2
      %s26 = sadd.s32 %s19, 1
      %s27 = ssub.s32 %s19, %s26
      %p28 = scmp.eq.s32.totalorder %s27, 0
      %s30 = sadd.s32 %s29, 1
      %s31 = scalar_select %p28, %s29, %s30
      %p34 = pneg %p28
      %p35 = scmp.eq.s32.totalorder %s19, 1
      %p36 = por %p34, %p35
      %p37 = scmp.ne.s32.totalorder %s29, %s32
      %p38 = scmp.eq.s32.totalorder %s19, 0
      %p39 = por %p37, %p38
      %p40 = scmp.ne.s32.totalorder %s29, %s32
      %p41 = scmp.eq.s32.totalorder %s24, 1
      %p42 = por %p40, %p41
      %p43 = scmp.ne.s32.totalorder %s32, %s33
      %p44 = scmp.eq.s32.totalorder %s24, 0
      %p45 = por %p43, %p44
      %p46 = scmp.ne.s32.totalorder %s32, %s33
      %p47 = scmp.eq.s32.totalorder %s25, 1
      %p48 = por %p46, %p47
      %p50 = scmp.ne.s32.totalorder %s33, %s49
      %p51 = scmp.eq.s32.totalorder %s25, 0
      %p52 = por %p50, %p51
      %s54 = sadd.s32 %s53, 1
      %p57 = scmp.eq.s32.totalorder %s19, 1
      %p58 = scmp.ne.s32.totalorder %s53, %s55
      %p59 = scmp.eq.s32.totalorder %s19, 0
      %p60 = por %p58, %p59
      %p61 = scmp.ne.s32.totalorder %s53, %s55
      %p62 = scmp.eq.s32.totalorder %s24, 1
      %p63 = por %p61, %p62
      %p64 = scmp.ne.s32.totalorder %s55, %s56
      %p65 = scmp.eq.s32.totalorder %s24, 0
      %p66 = por %p64, %p65
      %p67 = scmp.ne.s32.totalorder %s55, %s56
      %p68 = scmp.eq.s32.totalorder %s25, 1
      %p69 = por %p67, %p68
      %p71 = scmp.ne.s32.totalorder %s56, %s70
      %p72 = scmp.eq.s32.totalorder %s25, 0
      %p73 = por %p71, %p72
      %s75 = sadd.s32 %s74, 1
      %p78 = scmp.eq.s32.totalorder %s19, 1
      %p79 = scmp.ne.s32.totalorder %s74, %s76
      %p80 = scmp.eq.s32.totalorder %s19, 0
      %p81 = por %p79, %p80
      %p82 = scmp.ne.s32.totalorder %s74, %s76
      %p83 = scmp.eq.s32.totalorder %s24, 1
      %p84 = por %p82, %p83
      %p85 = scmp.ne.s32.totalorder %s76, %s77
      %p86 = scmp.eq.s32.totalorder %s24, 0
      %p87 = por %p85, %p86
      %p88 = scmp.ne.s32.totalorder %s76, %s77
      %p89 = scmp.eq.s32.totalorder %s25, 1
      %p90 = por %p88, %p89
      %p92 = scmp.ne.s32.totalorder %s77, %s91
      %p93 = scmp.eq.s32.totalorder %s25, 0
      %p94 = por %p92, %p93
      %s96 = sadd.s32 %s95, 1
      %p99 = scmp.eq.s32.totalorder %s19, 1
      %p100 = scmp.ne.s32.totalorder %s95, %s97
      %p101 = scmp.eq.s32.totalorder %s19, 0
      %p102 = por %p100, %p101
      %p103 = scmp.ne.s32.totalorder %s95, %s97
      %p104 = scmp.eq.s32.totalorder %s24, 1
      %p105 = por %p103, %p104
      %p106 = scmp.ne.s32.totalorder %s97, %s98
      %p107 = scmp.eq.s32.totalorder %s24, 0
      %p108 = por %p106, %p107
      %p109 = scmp.ne.s32.totalorder %s97, %s98
      %p110 = scmp.eq.s32.totalorder %s25, 1
      %p111 = por %p109, %p110
      %p113 = scmp.ne.s32.totalorder %s98, %s112
      %p114 = scmp.eq.s32.totalorder %s25, 0
      %p115 = por %p113, %p114
      %s117 = sadd.s32 %s116, 1
      %p120 = scmp.eq.s32.totalorder %s19, 1
      %p121 = scmp.ne.s32.totalorder %s116, %s118
      %p122 = scmp.eq.s32.totalorder %s19, 0
      %p123 = por %p121, %p122
      %p124 = scmp.ne.s32.totalorder %s116, %s118
      %p125 = scmp.eq.s32.totalorder %s24, 1
      %p126 = por %p124, %p125
      %p127 = scmp.ne.s32.totalorder %s118, %s119
      %p128 = scmp.eq.s32.totalorder %s24, 0
      %p129 = por %p127, %p128
      %p130 = scmp.ne.s32.totalorder %s118, %s119
      %p131 = scmp.eq.s32.totalorder %s25, 1
      %p132 = por %p130, %p131
      %p134 = scmp.ne.s32.totalorder %s119, %s133
      %p135 = scmp.eq.s32.totalorder %s25, 0
      %p136 = por %p134, %p135
      %s137 = ssub.s32 %s19, %s26
      %p138 = scmp.eq.s32.totalorder %s137, 0
      %s140 = sadd.s32 %s139, 1
      %s141 = scalar_select %p138, %s139, %s140
      %p144 = pneg %p138
      %p145 = scmp.eq.s32.totalorder %s19, 1
      %p146 = por %p144, %p145
      %p147 = scmp.ne.s32.totalorder %s139, %s142
      %p148 = scmp.eq.s32.totalorder %s19, 0
      %p149 = por %p147, %p148
      %p150 = scmp.ne.s32.totalorder %s139, %s142
      %p151 = scmp.eq.s32.totalorder %s24, 1
      %p152 = por %p150, %p151
      %p153 = scmp.ne.s32.totalorder %s142, %s143
      %p154 = scmp.eq.s32.totalorder %s24, 0
      %p155 = por %p153, %p154
      %p156 = scmp.ne.s32.totalorder %s142, %s143
      %p157 = scmp.eq.s32.totalorder %s25, 1
      %p158 = por %p156, %p157
      %p160 = scmp.ne.s32.totalorder %s143, %s159
      %p161 = scmp.eq.s32.totalorder %s25, 0
      %p162 = por %p160, %p161
      %p163 = scmp.le.s32.totalorder 1, %s19
      %p164 = scmp.lt.s32.totalorder %s19, 3
      %p165 = pnand %p163, %p164
      %p166 = pneg %p165
      // Predicated region
      $region9: #{tpu_custom_call.1} parent=5 // pred_check
        _
      $region10: #{tpu_custom_call.1} parent=5 // pred_check_branch
        %168 = sbr.rel (%p165) target = $region12
      $region11: #{tpu_custom_call.1} parent=5 // pred_region
        %s169 = ssub.s32 %s19, 1
        // Predicated region
        $region13: #{tpu_custom_call.1} parent=11 // pred_check
          %p170 = pneg %p66
        $region14: #{tpu_custom_call.1} parent=11 // pred_check_branch
          %172 = sbr.rel (%p170) target = $region16
        $region15: #{tpu_custom_call.1} parent=11 // pred_region
          %s174 = ssub.s32 128, 128
          %175 = vsyncadd [#allocation6], %s174
          %s177 = sshll.u32 [#allocation5], 4
          %s178 = int_to_ptr.vmem [resolvable:$true] %s177
          %180 = dma.hbm_to_vmem [thread:$0]  %s1, 128, %s178, [#allocation6]
        $region16: #{tpu_custom_call.1} parent=11 // pred_fallthru
          _
        // Predicated region
        $region17: #{tpu_custom_call.1} parent=11 // pred_check
          %p181 = pneg %p87
        $region18: #{tpu_custom_call.1} parent=11 // pred_check_branch
          %183 = sbr.rel (%p181) target = $region20
        $region19: #{tpu_custom_call.1} parent=11 // pred_region
          %s185 = ssub.s32 128, 128
          %186 = vsyncadd [#allocation6], %s185
          %s188 = sshll.u32 [#allocation7], 4
          %s189 = int_to_ptr.vmem [resolvable:$true] %s188
          %191 = dma.hbm_to_vmem [thread:$0]  %s2, 128, %s189, [#allocation6]
        $region20: #{tpu_custom_call.1} parent=11 // pred_fallthru
          _
        // Predicated region
        $region21: #{tpu_custom_call.1} parent=11 // pred_check
          %p192 = pneg %p108
        $region22: #{tpu_custom_call.1} parent=11 // pred_check_branch
          %194 = sbr.rel (%p192) target = $region24
        $region23: #{tpu_custom_call.1} parent=11 // pred_region
          %s196 = ssub.s32 128, 128
          %197 = vsyncadd [#allocation9], %s196
          %s199 = sshll.u32 [#allocation8], 4
          %s200 = int_to_ptr.vmem [resolvable:$true] %s199
          %202 = dma.hbm_to_vmem [thread:$0]  %s3, 128, %s200, [#allocation9]
        $region24: #{tpu_custom_call.1} parent=11 // pred_fallthru
          _
        // Predicated region
        $region25: #{tpu_custom_call.1} parent=11 // pred_check
          %p203 = pneg %p129
        $region26: #{tpu_custom_call.1} parent=11 // pred_check_branch
          %205 = sbr.rel (%p203) target = $region28
        $region27: #{tpu_custom_call.1} parent=11 // pred_region
          %s207 = ssub.s32 128, 128
          %208 = vsyncadd [#allocation9], %s207
          %s210 = sshll.u32 [#allocation10], 4
          %s211 = int_to_ptr.vmem [resolvable:$true] %s210
          %213 = dma.hbm_to_vmem [thread:$0]  %s4, 128, %s211, [#allocation9]
        $region28: #{tpu_custom_call.1} parent=11 // pred_fallthru
          _
      $region12: #{tpu_custom_call.1} parent=5 // pred_fallthru
        _
      %p214 = scmp.lt.s32.totalorder %s19, 2
      // Predicated region
      $region29: #{tpu_custom_call.1} parent=5 // pred_check
        %p215 = pneg %p214
      $region30: #{tpu_custom_call.1} parent=5 // pred_check_branch
        %217 = sbr.rel (%p215) target = $region32
      $region31: #{tpu_custom_call.1} parent=5 // pred_region
        // Predicated region
        $region33: #{tpu_custom_call.1} parent=31 // pred_check
          %p218 = pneg %p39
        $region34: #{tpu_custom_call.1} parent=31 // pred_check_branch
          %220 = sbr.rel (%p218) target = $region36
        $region35: #{tpu_custom_call.1} parent=31 // pred_region
          %s221 = sand.u32 %s29, 1
          %s222 = scalar_lea.sflag [#allocation3], %s221
          %s223 = sand.u32 %s29, 1
          %s224 = smul.addr %s223, 64
          %s225 = scalar_lea.vmem [#allocation2], %s224
          %s227 = ssub.s32 1024, 1024
          %228 = vsyncadd %s222, %s227
          %s229 = smul.addr %s19, 8
          %s230 = smul.addr %s229, 128
          %s231 = scalar_lea.hbm %s0, %s230
          %s232 = sshll.u32 %s225, 4
          %s233 = int_to_ptr.vmem [resolvable:$true] %s232
          %238 = dma.hbm_to_vmem [thread:$0]  %s231, 1024, %s233, %s222, 128, 128, 8
        $region36: #{tpu_custom_call.1} parent=31 // pred_fallthru
          _
      $region32: #{tpu_custom_call.1} parent=5 // pred_fallthru
        _
      %p239 = scmp.le.s32.totalorder 1, %s19
      %p240 = scmp.lt.s32.totalorder %s19, 3
      %p241 = pnand %p239, %p240
      %p242 = pneg %p241
      // Predicated region
      $region37: #{tpu_custom_call.1} parent=5 // pred_check
        _
      $region38: #{tpu_custom_call.1} parent=5 // pred_check_branch
        %244 = sbr.rel (%p241) target = $region40
      $region39: #{tpu_custom_call.1} parent=5 // pred_region
        %s245 = ssub.s32 %s19, 1
        %s246 = sand.u32 %s32, 1
        %s247 = scalar_lea.sflag [#allocation3], %s246
        %s248 = sand.u32 %s32, 1
        %s249 = smul.addr %s248, 64
        %s250 = scalar_lea.vmem [#allocation2], %s249
        // Predicated region
        $region41: #{tpu_custom_call.1} parent=39 // pred_check
          %p251 = pneg %p45
        $region42: #{tpu_custom_call.1} parent=39 // pred_check_branch
          %253 = sbr.rel (%p251) target = $region44
        $region43: #{tpu_custom_call.1} parent=39 // pred_region
          %254 = dma.done %s247, 1024
        $region44: #{tpu_custom_call.1} parent=39 // pred_fallthru
          _
        // Predicated region
        $region45: #{tpu_custom_call.1} parent=39 // pred_check
          %p255 = pneg %p66
        $region46: #{tpu_custom_call.1} parent=39 // pred_check_branch
          %257 = sbr.rel (%p255) target = $region48
        $region47: #{tpu_custom_call.1} parent=39 // pred_region
          %258 = dma.done [#allocation6], 128
        $region48: #{tpu_custom_call.1} parent=39 // pred_fallthru
          _
        // Predicated region
        $region49: #{tpu_custom_call.1} parent=39 // pred_check
          %p259 = pneg %p87
        $region50: #{tpu_custom_call.1} parent=39 // pred_check_branch
          %261 = sbr.rel (%p259) target = $region52
        $region51: #{tpu_custom_call.1} parent=39 // pred_region
          %262 = dma.done [#allocation6], 128
        $region52: #{tpu_custom_call.1} parent=39 // pred_fallthru
          _
        // Predicated region
        $region53: #{tpu_custom_call.1} parent=39 // pred_check
          %p263 = pneg %p108
        $region54: #{tpu_custom_call.1} parent=39 // pred_check_branch
          %265 = sbr.rel (%p263) target = $region56
        $region55: #{tpu_custom_call.1} parent=39 // pred_region
          %266 = dma.done [#allocation9], 128
        $region56: #{tpu_custom_call.1} parent=39 // pred_fallthru
          _
        // Predicated region
        $region57: #{tpu_custom_call.1} parent=39 // pred_check
          %p267 = pneg %p129
        $region58: #{tpu_custom_call.1} parent=39 // pred_check_branch
          %269 = sbr.rel (%p267) target = $region60
        $region59: #{tpu_custom_call.1} parent=39 // pred_region
          %270 = dma.done [#allocation9], 128
        $region60: #{tpu_custom_call.1} parent=39 // pred_fallthru
          _
        %s271 = sand.u32 %s32, 1
        %s272 = scalar_lea.sflag [#allocation3], %s271
        %s273 = sand.u32 %s32, 1
        %s274 = smul.addr %s273, 64
        %s275 = scalar_lea.vmem [#allocation2], %s274
        %p276 = pneg %p45
        %p277 = pneg %p42
        %p278 = pneg %p66
        %p279 = pneg %p63
        %p280 = pneg %p87
        %p281 = pneg %p84
        %p282 = pneg %p108
        %p283 = pneg %p105
        %p284 = pneg %p129
        %p285 = pneg %p126
        %p286 = pneg %p155
        %p287 = pneg %p152
        %s288 = sand.u32 %s142, 1
        %s289 = scalar_lea.sflag [#allocation4], %s288
        %s290 = sand.u32 %s142, 1
        %s291 = smul.addr %s290, 8
        %s292 = scalar_lea.vmem [#allocation11], %s291
        %v293 = vld [vmem:[#allocation5] sm:$0xff]
        %v294 = vld [vmem:[#allocation8] sm:$0xff]
        %v295 = vld [vmem:[#allocation7] sm:$0xff]
        %v296 = vld [vmem:[#allocation10] sm:$0xff]
        %v297 = vld [vmem:[%s250] sm:$0xff]
        %v298 = vld [vmem:[%s250 + $0x8] sm:$0xff]
        %v299 = vld [vmem:[%s250 + $0x10] sm:$0xff]
        %v300 = vld [vmem:[%s250 + $0x18] sm:$0xff]
        %v301 = vld [vmem:[%s250 + $0x20] sm:$0xff]
        %v302 = vld [vmem:[%s250 + $0x28] sm:$0xff]
        %v303 = vld [vmem:[%s250 + $0x30] sm:$0xff]
        %v304 = vld [vmem:[%s250 + $0x38] sm:$0xff]
        %v313 = vcombine.high %v297, %v297
        %v315 = vunpack.c.l.s4 1983009808
        %v316 = vunpack.c.0.s8 %v315
        %v317 = vlaneseq
        %v318 = vshrl.u32 %v317, 7
        %v319 = vsub.s32 %v316, %v318
        %v320 = vrot.slane %v297, %v319
        %v322 = vunpack.c.l.s4 1983009808
        %v323 = vunpack.c.0.s8 %v322
        %v324 = vlaneseq
        %v325 = vshrl.u32 %v324, 7
        %v326 = vsub.s32 %v323, %v325
        %v327 = vrot.slane %v313, %v326
        %v328 = vcombine.high %v320, %v320
        %v329 = vcombine.high %v327, %v327
        %v330 = vcombine.high %v298, %v298
        %v332 = vunpack.c.l.s4 1983009808
        %v333 = vunpack.c.0.s8 %v332
        %v334 = vlaneseq
        %v335 = vshrl.u32 %v334, 7
        %v336 = vsub.s32 %v333, %v335
        %v337 = vrot.slane %v298, %v336
        %v339 = vunpack.c.l.s4 1983009808
        %v340 = vunpack.c.0.s8 %v339
        %v341 = vlaneseq
        %v342 = vshrl.u32 %v341, 7
        %v343 = vsub.s32 %v340, %v342
        %v344 = vrot.slane %v330, %v343
        %v345 = vcombine.high %v337, %v337
        %v346 = vcombine.high %v344, %v344
        %v347 = vcombine.high %v299, %v299
        %v349 = vunpack.c.l.s4 1983009808
        %v350 = vunpack.c.0.s8 %v349
        %v351 = vlaneseq
        %v352 = vshrl.u32 %v351, 7
        %v353 = vsub.s32 %v350, %v352
        %v354 = vrot.slane %v299, %v353
        %v356 = vunpack.c.l.s4 1983009808
        %v357 = vunpack.c.0.s8 %v356
        %v358 = vlaneseq
        %v359 = vshrl.u32 %v358, 7
        %v360 = vsub.s32 %v357, %v359
        %v361 = vrot.slane %v347, %v360
        %v362 = vcombine.high %v354, %v354
        %v363 = vcombine.high %v361, %v361
        %v364 = vcombine.high %v300, %v300
        %v366 = vunpack.c.l.s4 1983009808
        %v367 = vunpack.c.0.s8 %v366
        %v368 = vlaneseq
        %v369 = vshrl.u32 %v368, 7
        %v370 = vsub.s32 %v367, %v369
        %v371 = vrot.slane %v300, %v370
        %v373 = vunpack.c.l.s4 1983009808
        %v374 = vunpack.c.0.s8 %v373
        %v375 = vlaneseq
        %v376 = vshrl.u32 %v375, 7
        %v377 = vsub.s32 %v374, %v376
        %v378 = vrot.slane %v364, %v377
        %v379 = vcombine.high %v371, %v371
        %v380 = vcombine.high %v378, %v378
        %v381 = vcombine.high %v301, %v301
        %v383 = vunpack.c.l.s4 1983009808
        %v384 = vunpack.c.0.s8 %v383
        %v385 = vlaneseq
        %v386 = vshrl.u32 %v385, 7
        %v387 = vsub.s32 %v384, %v386
        %v388 = vrot.slane %v301, %v387
        %v390 = vunpack.c.l.s4 1983009808
        %v391 = vunpack.c.0.s8 %v390
        %v392 = vlaneseq
        %v393 = vshrl.u32 %v392, 7
        %v394 = vsub.s32 %v391, %v393
        %v395 = vrot.slane %v381, %v394
        %v396 = vcombine.high %v388, %v388
        %v397 = vcombine.high %v395, %v395
        %v398 = vcombine.high %v302, %v302
        %v400 = vunpack.c.l.s4 1983009808
        %v401 = vunpack.c.0.s8 %v400
        %v402 = vlaneseq
        %v403 = vshrl.u32 %v402, 7
        %v404 = vsub.s32 %v401, %v403
        %v405 = vrot.slane %v302, %v404
        %v407 = vunpack.c.l.s4 1983009808
        %v408 = vunpack.c.0.s8 %v407
        %v409 = vlaneseq
        %v410 = vshrl.u32 %v409, 7
        %v411 = vsub.s32 %v408, %v410
        %v412 = vrot.slane %v398, %v411
        %v413 = vcombine.high %v405, %v405
        %v414 = vcombine.high %v412, %v412
        %v415 = vcombine.high %v303, %v303
        %v417 = vunpack.c.l.s4 1983009808
        %v418 = vunpack.c.0.s8 %v417
        %v419 = vlaneseq
        %v420 = vshrl.u32 %v419, 7
        %v421 = vsub.s32 %v418, %v420
        %v422 = vrot.slane %v303, %v421
        %v424 = vunpack.c.l.s4 1983009808
        %v425 = vunpack.c.0.s8 %v424
        %v426 = vlaneseq
        %v427 = vshrl.u32 %v426, 7
        %v428 = vsub.s32 %v425, %v427
        %v429 = vrot.slane %v415, %v428
        %v430 = vcombine.high %v422, %v422
        %v431 = vcombine.high %v429, %v429
        %v432 = vcombine.high %v304, %v304
        %v434 = vunpack.c.l.s4 1983009808
        %v435 = vunpack.c.0.s8 %v434
        %v436 = vlaneseq
        %v437 = vshrl.u32 %v436, 7
        %v438 = vsub.s32 %v435, %v437
        %v439 = vrot.slane %v304, %v438
        %v441 = vunpack.c.l.s4 1983009808
        %v442 = vunpack.c.0.s8 %v441
        %v443 = vlaneseq
        %v444 = vshrl.u32 %v443, 7
        %v445 = vsub.s32 %v442, %v444
        %v446 = vrot.slane %v432, %v445
        %v447 = vcombine.high %v439, %v439
        %v448 = vcombine.high %v446, %v446
        %vm481 = vcmask 123904
        %v482 = vsel %vm481, %v320, -inf
        %v483 = vrot.slane %v482, 4
        %v484 = vmax.f32 %v482, %v483
        %v485 = vrot.slane %v484, 2
        %v486 = vmax.f32 %v484, %v485
        %v487 = vrot.slane %v486, 1
        %v488 = vmax.f32 %v486, %v487
        %v489 = vsel %vm481, %v328, -inf
        %v490 = vrot.slane %v489, 4
        %v491 = vmax.f32 %v489, %v490
        %v492 = vrot.slane %v491, 2
        %v493 = vmax.f32 %v491, %v492
        %v494 = vrot.slane %v493, 1
        %v495 = vmax.f32 %v493, %v494
        %v496 = vsel %vm481, %v327, -inf
        %v497 = vrot.slane %v496, 4
        %v498 = vmax.f32 %v496, %v497
        %v499 = vrot.slane %v498, 2
        %v500 = vmax.f32 %v498, %v499
        %v501 = vrot.slane %v500, 1
        %v502 = vmax.f32 %v500, %v501
        %v503 = vsel %vm481, %v329, -inf
        %v504 = vrot.slane %v503, 4
        %v505 = vmax.f32 %v503, %v504
        %v506 = vrot.slane %v505, 2
        %v507 = vmax.f32 %v505, %v506
        %v508 = vrot.slane %v507, 1
        %v509 = vmax.f32 %v507, %v508
        %v510 = vsel %vm481, %v337, -inf
        %v511 = vrot.slane %v510, 4
        %v512 = vmax.f32 %v510, %v511
        %v513 = vrot.slane %v512, 2
        %v514 = vmax.f32 %v512, %v513
        %v515 = vrot.slane %v514, 1
        %v516 = vmax.f32 %v514, %v515
        %v517 = vsel %vm481, %v345, -inf
        %v518 = vrot.slane %v517, 4
        %v519 = vmax.f32 %v517, %v518
        %v520 = vrot.slane %v519, 2
        %v521 = vmax.f32 %v519, %v520
        %v522 = vrot.slane %v521, 1
        %v523 = vmax.f32 %v521, %v522
        %v524 = vsel %vm481, %v344, -inf
        %v525 = vrot.slane %v524, 4
        %v526 = vmax.f32 %v524, %v525
        %v527 = vrot.slane %v526, 2
        %v528 = vmax.f32 %v526, %v527
        %v529 = vrot.slane %v528, 1
        %v530 = vmax.f32 %v528, %v529
        %v531 = vsel %vm481, %v346, -inf
        %v532 = vrot.slane %v531, 4
        %v533 = vmax.f32 %v531, %v532
        %v534 = vrot.slane %v533, 2
        %v535 = vmax.f32 %v533, %v534
        %v536 = vrot.slane %v535, 1
        %v537 = vmax.f32 %v535, %v536
        %v538 = vsel %vm481, %v354, -inf
        %v539 = vrot.slane %v538, 4
        %v540 = vmax.f32 %v538, %v539
        %v541 = vrot.slane %v540, 2
        %v542 = vmax.f32 %v540, %v541
        %v543 = vrot.slane %v542, 1
        %v544 = vmax.f32 %v542, %v543
        %v545 = vsel %vm481, %v362, -inf
        %v546 = vrot.slane %v545, 4
        %v547 = vmax.f32 %v545, %v546
        %v548 = vrot.slane %v547, 2
        %v549 = vmax.f32 %v547, %v548
        %v550 = vrot.slane %v549, 1
        %v551 = vmax.f32 %v549, %v550
        %v552 = vsel %vm481, %v361, -inf
        %v553 = vrot.slane %v552, 4
        %v554 = vmax.f32 %v552, %v553
        %v555 = vrot.slane %v554, 2
        %v556 = vmax.f32 %v554, %v555
        %v557 = vrot.slane %v556, 1
        %v558 = vmax.f32 %v556, %v557
        %v559 = vsel %vm481, %v363, -inf
        %v560 = vrot.slane %v559, 4
        %v561 = vmax.f32 %v559, %v560
        %v562 = vrot.slane %v561, 2
        %v563 = vmax.f32 %v561, %v562
        %v564 = vrot.slane %v563, 1
        %v565 = vmax.f32 %v563, %v564
        %v566 = vsel %vm481, %v371, -inf
        %v567 = vrot.slane %v566, 4
        %v568 = vmax.f32 %v566, %v567
        %v569 = vrot.slane %v568, 2
        %v570 = vmax.f32 %v568, %v569
        %v571 = vrot.slane %v570, 1
        %v572 = vmax.f32 %v570, %v571
        %v573 = vsel %vm481, %v379, -inf
        %v574 = vrot.slane %v573, 4
        %v575 = vmax.f32 %v573, %v574
        %v576 = vrot.slane %v575, 2
        %v577 = vmax.f32 %v575, %v576
        %v578 = vrot.slane %v577, 1
        %v579 = vmax.f32 %v577, %v578
        %v580 = vsel %vm481, %v378, -inf
        %v581 = vrot.slane %v580, 4
        %v582 = vmax.f32 %v580, %v581
        %v583 = vrot.slane %v582, 2
        %v584 = vmax.f32 %v582, %v583
        %v585 = vrot.slane %v584, 1
        %v586 = vmax.f32 %v584, %v585
        %v587 = vsel %vm481, %v380, -inf
        %v588 = vrot.slane %v587, 4
        %v589 = vmax.f32 %v587, %v588
        %v590 = vrot.slane %v589, 2
        %v591 = vmax.f32 %v589, %v590
        %v592 = vrot.slane %v591, 1
        %v593 = vmax.f32 %v591, %v592
        %v594 = vsel %vm481, %v388, -inf
        %v595 = vrot.slane %v594, 4
        %v596 = vmax.f32 %v594, %v595
        %v597 = vrot.slane %v596, 2
        %v598 = vmax.f32 %v596, %v597
        %v599 = vrot.slane %v598, 1
        %v600 = vmax.f32 %v598, %v599
        %v601 = vsel %vm481, %v396, -inf
        %v602 = vrot.slane %v601, 4
        %v603 = vmax.f32 %v601, %v602
        %v604 = vrot.slane %v603, 2
        %v605 = vmax.f32 %v603, %v604
        %v606 = vrot.slane %v605, 1
        %v607 = vmax.f32 %v605, %v606
        %v608 = vsel %vm481, %v395, -inf
        %v609 = vrot.slane %v608, 4
        %v610 = vmax.f32 %v608, %v609
        %v611 = vrot.slane %v610, 2
        %v612 = vmax.f32 %v610, %v611
        %v613 = vrot.slane %v612, 1
        %v614 = vmax.f32 %v612, %v613
        %v615 = vsel %vm481, %v397, -inf
        %v616 = vrot.slane %v615, 4
        %v617 = vmax.f32 %v615, %v616
        %v618 = vrot.slane %v617, 2
        %v619 = vmax.f32 %v617, %v618
        %v620 = vrot.slane %v619, 1
        %v621 = vmax.f32 %v619, %v620
        %v622 = vsel %vm481, %v405, -inf
        %v623 = vrot.slane %v622, 4
        %v624 = vmax.f32 %v622, %v623
        %v625 = vrot.slane %v624, 2
        %v626 = vmax.f32 %v624, %v625
        %v627 = vrot.slane %v626, 1
        %v628 = vmax.f32 %v626, %v627
        %v629 = vsel %vm481, %v413, -inf
        %v630 = vrot.slane %v629, 4
        %v631 = vmax.f32 %v629, %v630
        %v632 = vrot.slane %v631, 2
        %v633 = vmax.f32 %v631, %v632
        %v634 = vrot.slane %v633, 1
        %v635 = vmax.f32 %v633, %v634
        %v636 = vsel %vm481, %v412, -inf
        %v637 = vrot.slane %v636, 4
        %v638 = vmax.f32 %v636, %v637
        %v639 = vrot.slane %v638, 2
        %v640 = vmax.f32 %v638, %v639
        %v641 = vrot.slane %v640, 1
        %v642 = vmax.f32 %v640, %v641
        %v643 = vsel %vm481, %v414, -inf
        %v644 = vrot.slane %v643, 4
        %v645 = vmax.f32 %v643, %v644
        %v646 = vrot.slane %v645, 2
        %v647 = vmax.f32 %v645, %v646
        %v648 = vrot.slane %v647, 1
        %v649 = vmax.f32 %v647, %v648
        %v650 = vsel %vm481, %v422, -inf
        %v651 = vrot.slane %v650, 4
        %v652 = vmax.f32 %v650, %v651
        %v653 = vrot.slane %v652, 2
        %v654 = vmax.f32 %v652, %v653
        %v655 = vrot.slane %v654, 1
        %v656 = vmax.f32 %v654, %v655
        %v657 = vsel %vm481, %v430, -inf
        %v658 = vrot.slane %v657, 4
        %v659 = vmax.f32 %v657, %v658
        %v660 = vrot.slane %v659, 2
        %v661 = vmax.f32 %v659, %v660
        %v662 = vrot.slane %v661, 1
        %v663 = vmax.f32 %v661, %v662
        %v664 = vsel %vm481, %v429, -inf
        %v665 = vrot.slane %v664, 4
        %v666 = vmax.f32 %v664, %v665
        %v667 = vrot.slane %v666, 2
        %v668 = vmax.f32 %v666, %v667
        %v669 = vrot.slane %v668, 1
        %v670 = vmax.f32 %v668, %v669
        %v671 = vsel %vm481, %v431, -inf
        %v672 = vrot.slane %v671, 4
        %v673 = vmax.f32 %v671, %v672
        %v674 = vrot.slane %v673, 2
        %v675 = vmax.f32 %v673, %v674
        %v676 = vrot.slane %v675, 1
        %v677 = vmax.f32 %v675, %v676
        %v678 = vsel %vm481, %v439, -inf
        %v679 = vrot.slane %v678, 4
        %v680 = vmax.f32 %v678, %v679
        %v681 = vrot.slane %v680, 2
        %v682 = vmax.f32 %v680, %v681
        %v683 = vrot.slane %v682, 1
        %v684 = vmax.f32 %v682, %v683
        %v685 = vsel %vm481, %v447, -inf
        %v686 = vrot.slane %v685, 4
        %v687 = vmax.f32 %v685, %v686
        %v688 = vrot.slane %v687, 2
        %v689 = vmax.f32 %v687, %v688
        %v690 = vrot.slane %v689, 1
        %v691 = vmax.f32 %v689, %v690
        %v692 = vsel %vm481, %v446, -inf
        %v693 = vrot.slane %v692, 4
        %v694 = vmax.f32 %v692, %v693
        %v695 = vrot.slane %v694, 2
        %v696 = vmax.f32 %v694, %v695
        %v697 = vrot.slane %v696, 1
        %v698 = vmax.f32 %v696, %v697
        %v699 = vsel %vm481, %v448, -inf
        %v700 = vrot.slane %v699, 4
        %v701 = vmax.f32 %v699, %v700
        %v702 = vrot.slane %v701, 2
        %v703 = vmax.f32 %v701, %v702
        %v704 = vrot.slane %v703, 1
        %v705 = vmax.f32 %v703, %v704
        %738 = vrot.lane.b32.xlu0 %v488, 126
        %v739 = vpop.permute.xlu0 %738
        %740 = vrot.lane.b32.xlu0 %v495, 126
        %v741 = vpop.permute.xlu0 %740
        %742 = vrot.lane.b32.xlu0 %v502, 126
        %v743 = vpop.permute.xlu0 %742
        %744 = vrot.lane.b32.xlu0 %v509, 126
        %v745 = vpop.permute.xlu0 %744
        %746 = vrot.lane.b32.xlu0 %v516, 126
        %v747 = vpop.permute.xlu0 %746
        %748 = vrot.lane.b32.xlu0 %v523, 126
        %v749 = vpop.permute.xlu0 %748
        %750 = vrot.lane.b32.xlu0 %v530, 126
        %v751 = vpop.permute.xlu0 %750
        %752 = vrot.lane.b32.xlu0 %v537, 126
        %v753 = vpop.permute.xlu0 %752
        %754 = vrot.lane.b32.xlu0 %v544, 126
        %v755 = vpop.permute.xlu0 %754
        %756 = vrot.lane.b32.xlu0 %v551, 126
        %v757 = vpop.permute.xlu0 %756
        %758 = vrot.lane.b32.xlu0 %v558, 126
        %v759 = vpop.permute.xlu0 %758
        %760 = vrot.lane.b32.xlu0 %v565, 126
        %v761 = vpop.permute.xlu0 %760
        %762 = vrot.lane.b32.xlu0 %v572, 126
        %v763 = vpop.permute.xlu0 %762
        %764 = vrot.lane.b32.xlu0 %v579, 126
        %v765 = vpop.permute.xlu0 %764
        %766 = vrot.lane.b32.xlu0 %v586, 126
        %v767 = vpop.permute.xlu0 %766
        %768 = vrot.lane.b32.xlu0 %v593, 126
        %v769 = vpop.permute.xlu0 %768
        %770 = vrot.lane.b32.xlu0 %v600, 126
        %v771 = vpop.permute.xlu0 %770
        %772 = vrot.lane.b32.xlu0 %v607, 126
        %v773 = vpop.permute.xlu0 %772
        %774 = vrot.lane.b32.xlu0 %v614, 126
        %v775 = vpop.permute.xlu0 %774
        %776 = vrot.lane.b32.xlu0 %v621, 126
        %v777 = vpop.permute.xlu0 %776
        %778 = vrot.lane.b32.xlu0 %v628, 126
        %v779 = vpop.permute.xlu0 %778
        %780 = vrot.lane.b32.xlu0 %v635, 126
        %v781 = vpop.permute.xlu0 %780
        %782 = vrot.lane.b32.xlu0 %v642, 126
        %v783 = vpop.permute.xlu0 %782
        %784 = vrot.lane.b32.xlu0 %v649, 126
        %v785 = vpop.permute.xlu0 %784
        %786 = vrot.lane.b32.xlu0 %v656, 126
        %v787 = vpop.permute.xlu0 %786
        %788 = vrot.lane.b32.xlu0 %v663, 126
        %v789 = vpop.permute.xlu0 %788
        %790 = vrot.lane.b32.xlu0 %v670, 126
        %v791 = vpop.permute.xlu0 %790
        %792 = vrot.lane.b32.xlu0 %v677, 126
        %v793 = vpop.permute.xlu0 %792
        %794 = vrot.lane.b32.xlu0 %v684, 126
        %v795 = vpop.permute.xlu0 %794
        %796 = vrot.lane.b32.xlu0 %v691, 126
        %v797 = vpop.permute.xlu0 %796
        %798 = vrot.lane.b32.xlu0 %v698, 126
        %v799 = vpop.permute.xlu0 %798
        %800 = vrot.lane.b32.xlu0 %v705, 126
        %v801 = vpop.permute.xlu0 %800
        %802 = vrot.lane.b32.xlu0 %v488, 124
        %v803 = vpop.permute.xlu0 %802
        %804 = vrot.lane.b32.xlu0 %v495, 124
        %v805 = vpop.permute.xlu0 %804
        %806 = vrot.lane.b32.xlu0 %v502, 124
        %v807 = vpop.permute.xlu0 %806
        %808 = vrot.lane.b32.xlu0 %v509, 124
        %v809 = vpop.permute.xlu0 %808
        %810 = vrot.lane.b32.xlu0 %v516, 124
        %v811 = vpop.permute.xlu0 %810
        %812 = vrot.lane.b32.xlu0 %v523, 124
        %v813 = vpop.permute.xlu0 %812
        %814 = vrot.lane.b32.xlu0 %v530, 124
        %v815 = vpop.permute.xlu0 %814
        %816 = vrot.lane.b32.xlu0 %v537, 124
        %v817 = vpop.permute.xlu0 %816
        %818 = vrot.lane.b32.xlu0 %v544, 124
        %v819 = vpop.permute.xlu0 %818
        %820 = vrot.lane.b32.xlu0 %v551, 124
        %v821 = vpop.permute.xlu0 %820
        %822 = vrot.lane.b32.xlu0 %v558, 124
        %v823 = vpop.permute.xlu0 %822
        %824 = vrot.lane.b32.xlu0 %v565, 124
        %v825 = vpop.permute.xlu0 %824
        %826 = vrot.lane.b32.xlu0 %v572, 124
        %v827 = vpop.permute.xlu0 %826
        %828 = vrot.lane.b32.xlu0 %v579, 124
        %v829 = vpop.permute.xlu0 %828
        %830 = vrot.lane.b32.xlu0 %v586, 124
        %v831 = vpop.permute.xlu0 %830
        %832 = vrot.lane.b32.xlu0 %v593, 124
        %v833 = vpop.permute.xlu0 %832
        %834 = vrot.lane.b32.xlu0 %v600, 124
        %v835 = vpop.permute.xlu0 %834
        %836 = vrot.lane.b32.xlu0 %v607, 124
        %v837 = vpop.permute.xlu0 %836
        %838 = vrot.lane.b32.xlu0 %v614, 124
        %v839 = vpop.permute.xlu0 %838
        %840 = vrot.lane.b32.xlu0 %v621, 124
        %v841 = vpop.permute.xlu0 %840
        %842 = vrot.lane.b32.xlu0 %v628, 124
        %v843 = vpop.permute.xlu0 %842
        %844 = vrot.lane.b32.xlu0 %v635, 124
        %v845 = vpop.permute.xlu0 %844
        %846 = vrot.lane.b32.xlu0 %v642, 124
        %v847 = vpop.permute.xlu0 %846
        %848 = vrot.lane.b32.xlu0 %v649, 124
        %v849 = vpop.permute.xlu0 %848
        %850 = vrot.lane.b32.xlu0 %v656, 124
        %v851 = vpop.permute.xlu0 %850
        %852 = vrot.lane.b32.xlu0 %v663, 124
        %v853 = vpop.permute.xlu0 %852
        %854 = vrot.lane.b32.xlu0 %v670, 124
        %v855 = vpop.permute.xlu0 %854
        %856 = vrot.lane.b32.xlu0 %v677, 124
        %v857 = vpop.permute.xlu0 %856
        %858 = vrot.lane.b32.xlu0 %v684, 124
        %v859 = vpop.permute.xlu0 %858
        %860 = vrot.lane.b32.xlu0 %v691, 124
        %v861 = vpop.permute.xlu0 %860
        %862 = vrot.lane.b32.xlu0 %v698, 124
        %v863 = vpop.permute.xlu0 %862
        %864 = vrot.lane.b32.xlu0 %v705, 124
        %v865 = vpop.permute.xlu0 %864
        %866 = vrot.lane.b32.xlu0 %v488, 122
        %v867 = vpop.permute.xlu0 %866
        %868 = vrot.lane.b32.xlu0 %v495, 122
        %v869 = vpop.permute.xlu0 %868
        %870 = vrot.lane.b32.xlu0 %v502, 122
        %v871 = vpop.permute.xlu0 %870
        %872 = vrot.lane.b32.xlu0 %v509, 122
        %v873 = vpop.permute.xlu0 %872
        %874 = vrot.lane.b32.xlu0 %v516, 122
        %v875 = vpop.permute.xlu0 %874
        %876 = vrot.lane.b32.xlu0 %v523, 122
        %v877 = vpop.permute.xlu0 %876
        %878 = vrot.lane.b32.xlu0 %v530, 122
        %v879 = vpop.permute.xlu0 %878
        %880 = vrot.lane.b32.xlu0 %v537, 122
        %v881 = vpop.permute.xlu0 %880
        %882 = vrot.lane.b32.xlu0 %v544, 122
        %v883 = vpop.permute.xlu0 %882
        %884 = vrot.lane.b32.xlu0 %v551, 122
        %v885 = vpop.permute.xlu0 %884
        %886 = vrot.lane.b32.xlu0 %v558, 122
        %v887 = vpop.permute.xlu0 %886
        %888 = vrot.lane.b32.xlu0 %v565, 122
        %v889 = vpop.permute.xlu0 %888
        %890 = vrot.lane.b32.xlu0 %v572, 122
        %v891 = vpop.permute.xlu0 %890
        %892 = vrot.lane.b32.xlu0 %v579, 122
        %v893 = vpop.permute.xlu0 %892
        %894 = vrot.lane.b32.xlu0 %v586, 122
        %v895 = vpop.permute.xlu0 %894
        %896 = vrot.lane.b32.xlu0 %v593, 122
        %v897 = vpop.permute.xlu0 %896
        %898 = vrot.lane.b32.xlu0 %v600, 122
        %v899 = vpop.permute.xlu0 %898
        %900 = vrot.lane.b32.xlu0 %v607, 122
        %v901 = vpop.permute.xlu0 %900
        %902 = vrot.lane.b32.xlu0 %v614, 122
        %v903 = vpop.permute.xlu0 %902
        %904 = vrot.lane.b32.xlu0 %v621, 122
        %v905 = vpop.permute.xlu0 %904
        %906 = vrot.lane.b32.xlu0 %v628, 122
        %v907 = vpop.permute.xlu0 %906
        %908 = vrot.lane.b32.xlu0 %v635, 122
        %v909 = vpop.permute.xlu0 %908
        %910 = vrot.lane.b32.xlu0 %v642, 122
        %v911 = vpop.permute.xlu0 %910
        %912 = vrot.lane.b32.xlu0 %v649, 122
        %v913 = vpop.permute.xlu0 %912
        %914 = vrot.lane.b32.xlu0 %v656, 122
        %v915 = vpop.permute.xlu0 %914
        %916 = vrot.lane.b32.xlu0 %v663, 122
        %v917 = vpop.permute.xlu0 %916
        %918 = vrot.lane.b32.xlu0 %v670, 122
        %v919 = vpop.permute.xlu0 %918
        %920 = vrot.lane.b32.xlu0 %v677, 122
        %v921 = vpop.permute.xlu0 %920
        %922 = vrot.lane.b32.xlu0 %v684, 122
        %v923 = vpop.permute.xlu0 %922
        %924 = vrot.lane.b32.xlu0 %v691, 122
        %v925 = vpop.permute.xlu0 %924
        %926 = vrot.lane.b32.xlu0 %v698, 122
        %v927 = vpop.permute.xlu0 %926
        %928 = vrot.lane.b32.xlu0 %v705, 122
        %v929 = vpop.permute.xlu0 %928
        %930 = vrot.lane.b32.xlu0 %v488, 120
        %v931 = vpop.permute.xlu0 %930
        %932 = vrot.lane.b32.xlu0 %v495, 120
        %v933 = vpop.permute.xlu0 %932
        %934 = vrot.lane.b32.xlu0 %v502, 120
        %v935 = vpop.permute.xlu0 %934
        %936 = vrot.lane.b32.xlu0 %v509, 120
        %v937 = vpop.permute.xlu0 %936
        %938 = vrot.lane.b32.xlu0 %v516, 120
        %v939 = vpop.permute.xlu0 %938
        %940 = vrot.lane.b32.xlu0 %v523, 120
        %v941 = vpop.permute.xlu0 %940
        %942 = vrot.lane.b32.xlu0 %v530, 120
        %v943 = vpop.permute.xlu0 %942
        %944 = vrot.lane.b32.xlu0 %v537, 120
        %v945 = vpop.permute.xlu0 %944
        %946 = vrot.lane.b32.xlu0 %v544, 120
        %v947 = vpop.permute.xlu0 %946
        %948 = vrot.lane.b32.xlu0 %v551, 120
        %v949 = vpop.permute.xlu0 %948
        %950 = vrot.lane.b32.xlu0 %v558, 120
        %v951 = vpop.permute.xlu0 %950
        %952 = vrot.lane.b32.xlu0 %v565, 120
        %v953 = vpop.permute.xlu0 %952
        %954 = vrot.lane.b32.xlu0 %v572, 120
        %v955 = vpop.permute.xlu0 %954
        %956 = vrot.lane.b32.xlu0 %v579, 120
        %v957 = vpop.permute.xlu0 %956
        %958 = vrot.lane.b32.xlu0 %v586, 120
        %v959 = vpop.permute.xlu0 %958
        %960 = vrot.lane.b32.xlu0 %v593, 120
        %v961 = vpop.permute.xlu0 %960
        %962 = vrot.lane.b32.xlu0 %v600, 120
        %v963 = vpop.permute.xlu0 %962
        %964 = vrot.lane.b32.xlu0 %v607, 120
        %v965 = vpop.permute.xlu0 %964
        %966 = vrot.lane.b32.xlu0 %v614, 120
        %v967 = vpop.permute.xlu0 %966
        %968 = vrot.lane.b32.xlu0 %v621, 120
        %v969 = vpop.permute.xlu0 %968
        %970 = vrot.lane.b32.xlu0 %v628, 120
        %v971 = vpop.permute.xlu0 %970
        %972 = vrot.lane.b32.xlu0 %v635, 120
        %v973 = vpop.permute.xlu0 %972
        %974 = vrot.lane.b32.xlu0 %v642, 120
        %v975 = vpop.permute.xlu0 %974
        %976 = vrot.lane.b32.xlu0 %v649, 120
        %v977 = vpop.permute.xlu0 %976
        %978 = vrot.lane.b32.xlu0 %v656, 120
        %v979 = vpop.permute.xlu0 %978
        %980 = vrot.lane.b32.xlu0 %v663, 120
        %v981 = vpop.permute.xlu0 %980
        %982 = vrot.lane.b32.xlu0 %v670, 120
        %v983 = vpop.permute.xlu0 %982
        %984 = vrot.lane.b32.xlu0 %v677, 120
        %v985 = vpop.permute.xlu0 %984
        %986 = vrot.lane.b32.xlu0 %v684, 120
        %v987 = vpop.permute.xlu0 %986
        %988 = vrot.lane.b32.xlu0 %v691, 120
        %v989 = vpop.permute.xlu0 %988
        %990 = vrot.lane.b32.xlu0 %v698, 120
        %v991 = vpop.permute.xlu0 %990
        %992 = vrot.lane.b32.xlu0 %v705, 120
        %v993 = vpop.permute.xlu0 %992
        %994 = vrot.lane.b32.xlu0 %v488, 118
        %v995 = vpop.permute.xlu0 %994
        %996 = vrot.lane.b32.xlu0 %v495, 118
        %v997 = vpop.permute.xlu0 %996
        %998 = vrot.lane.b32.xlu0 %v502, 118
        %v999 = vpop.permute.xlu0 %998
        %1000 = vrot.lane.b32.xlu0 %v509, 118
        %v1001 = vpop.permute.xlu0 %1000
        %1002 = vrot.lane.b32.xlu0 %v516, 118
        %v1003 = vpop.permute.xlu0 %1002
        %1004 = vrot.lane.b32.xlu0 %v523, 118
        %v1005 = vpop.permute.xlu0 %1004
        %1006 = vrot.lane.b32.xlu0 %v530, 118
        %v1007 = vpop.permute.xlu0 %1006
        %1008 = vrot.lane.b32.xlu0 %v537, 118
        %v1009 = vpop.permute.xlu0 %1008
        %1010 = vrot.lane.b32.xlu0 %v544, 118
        %v1011 = vpop.permute.xlu0 %1010
        %1012 = vrot.lane.b32.xlu0 %v551, 118
        %v1013 = vpop.permute.xlu0 %1012
        %1014 = vrot.lane.b32.xlu0 %v558, 118
        %v1015 = vpop.permute.xlu0 %1014
        %1016 = vrot.lane.b32.xlu0 %v565, 118
        %v1017 = vpop.permute.xlu0 %1016
        %1018 = vrot.lane.b32.xlu0 %v572, 118
        %v1019 = vpop.permute.xlu0 %1018
        %1020 = vrot.lane.b32.xlu0 %v579, 118
        %v1021 = vpop.permute.xlu0 %1020
        %1022 = vrot.lane.b32.xlu0 %v586, 118
        %v1023 = vpop.permute.xlu0 %1022
        %1024 = vrot.lane.b32.xlu0 %v593, 118
        %v1025 = vpop.permute.xlu0 %1024
        %1026 = vrot.lane.b32.xlu0 %v600, 118
        %v1027 = vpop.permute.xlu0 %1026
        %1028 = vrot.lane.b32.xlu0 %v607, 118
        %v1029 = vpop.permute.xlu0 %1028
        %1030 = vrot.lane.b32.xlu0 %v614, 118
        %v1031 = vpop.permute.xlu0 %1030
        %1032 = vrot.lane.b32.xlu0 %v621, 118
        %v1033 = vpop.permute.xlu0 %1032
        %1034 = vrot.lane.b32.xlu0 %v628, 118
        %v1035 = vpop.permute.xlu0 %1034
        %1036 = vrot.lane.b32.xlu0 %v635, 118
        %v1037 = vpop.permute.xlu0 %1036
        %1038 = vrot.lane.b32.xlu0 %v642, 118
        %v1039 = vpop.permute.xlu0 %1038
        %1040 = vrot.lane.b32.xlu0 %v649, 118
        %v1041 = vpop.permute.xlu0 %1040
        %1042 = vrot.lane.b32.xlu0 %v656, 118
        %v1043 = vpop.permute.xlu0 %1042
        %1044 = vrot.lane.b32.xlu0 %v663, 118
        %v1045 = vpop.permute.xlu0 %1044
        %1046 = vrot.lane.b32.xlu0 %v670, 118
        %v1047 = vpop.permute.xlu0 %1046
        %1048 = vrot.lane.b32.xlu0 %v677, 118
        %v1049 = vpop.permute.xlu0 %1048
        %1050 = vrot.lane.b32.xlu0 %v684, 118
        %v1051 = vpop.permute.xlu0 %1050
        %1052 = vrot.lane.b32.xlu0 %v691, 118
        %v1053 = vpop.permute.xlu0 %1052
        %1054 = vrot.lane.b32.xlu0 %v698, 118
        %v1055 = vpop.permute.xlu0 %1054
        %1056 = vrot.lane.b32.xlu0 %v705, 118
        %v1057 = vpop.permute.xlu0 %1056
        %1058 = vrot.lane.b32.xlu0 %v488, 116
        %v1059 = vpop.permute.xlu0 %1058
        %1060 = vrot.lane.b32.xlu0 %v495, 116
        %v1061 = vpop.permute.xlu0 %1060
        %1062 = vrot.lane.b32.xlu0 %v502, 116
        %v1063 = vpop.permute.xlu0 %1062
        %1064 = vrot.lane.b32.xlu0 %v509, 116
        %v1065 = vpop.permute.xlu0 %1064
        %1066 = vrot.lane.b32.xlu0 %v516, 116
        %v1067 = vpop.permute.xlu0 %1066
        %1068 = vrot.lane.b32.xlu0 %v523, 116
        %v1069 = vpop.permute.xlu0 %1068
        %1070 = vrot.lane.b32.xlu0 %v530, 116
        %v1071 = vpop.permute.xlu0 %1070
        %1072 = vrot.lane.b32.xlu0 %v537, 116
        %v1073 = vpop.permute.xlu0 %1072
        %1074 = vrot.lane.b32.xlu0 %v544, 116
        %v1075 = vpop.permute.xlu0 %1074
        %1076 = vrot.lane.b32.xlu0 %v551, 116
        %v1077 = vpop.permute.xlu0 %1076
        %1078 = vrot.lane.b32.xlu0 %v558, 116
        %v1079 = vpop.permute.xlu0 %1078
        %1080 = vrot.lane.b32.xlu0 %v565, 116
        %v1081 = vpop.permute.xlu0 %1080
        %1082 = vrot.lane.b32.xlu0 %v572, 116
        %v1083 = vpop.permute.xlu0 %1082
        %1084 = vrot.lane.b32.xlu0 %v579, 116
        %v1085 = vpop.permute.xlu0 %1084
        %1086 = vrot.lane.b32.xlu0 %v586, 116
        %v1087 = vpop.permute.xlu0 %1086
        %1088 = vrot.lane.b32.xlu0 %v593, 116
        %v1089 = vpop.permute.xlu0 %1088
        %1090 = vrot.lane.b32.xlu0 %v600, 116
        %v1091 = vpop.permute.xlu0 %1090
        %1092 = vrot.lane.b32.xlu0 %v607, 116
        %v1093 = vpop.permute.xlu0 %1092
        %1094 = vrot.lane.b32.xlu0 %v614, 116
        %v1095 = vpop.permute.xlu0 %1094
        %1096 = vrot.lane.b32.xlu0 %v621, 116
        %v1097 = vpop.permute.xlu0 %1096
        %1098 = vrot.lane.b32.xlu0 %v628, 116
        %v1099 = vpop.permute.xlu0 %1098
        %1100 = vrot.lane.b32.xlu0 %v635, 116
        %v1101 = vpop.permute.xlu0 %1100
        %1102 = vrot.lane.b32.xlu0 %v642, 116
        %v1103 = vpop.permute.xlu0 %1102
        %1104 = vrot.lane.b32.xlu0 %v649, 116
        %v1105 = vpop.permute.xlu0 %1104
        %1106 = vrot.lane.b32.xlu0 %v656, 116
        %v1107 = vpop.permute.xlu0 %1106
        %1108 = vrot.lane.b32.xlu0 %v663, 116
        %v1109 = vpop.permute.xlu0 %1108
        %1110 = vrot.lane.b32.xlu0 %v670, 116
        %v1111 = vpop.permute.xlu0 %1110
        %1112 = vrot.lane.b32.xlu0 %v677, 116
        %v1113 = vpop.permute.xlu0 %1112
        %1114 = vrot.lane.b32.xlu0 %v684, 116
        %v1115 = vpop.permute.xlu0 %1114
        %1116 = vrot.lane.b32.xlu0 %v691, 116
        %v1117 = vpop.permute.xlu0 %1116
        %1118 = vrot.lane.b32.xlu0 %v698, 116
        %v1119 = vpop.permute.xlu0 %1118
        %1120 = vrot.lane.b32.xlu0 %v705, 116
        %v1121 = vpop.permute.xlu0 %1120
        %1122 = vrot.lane.b32.xlu0 %v488, 114
        %v1123 = vpop.permute.xlu0 %1122
        %1124 = vrot.lane.b32.xlu0 %v495, 114
        %v1125 = vpop.permute.xlu0 %1124
        %1126 = vrot.lane.b32.xlu0 %v502, 114
        %v1127 = vpop.permute.xlu0 %1126
        %1128 = vrot.lane.b32.xlu0 %v509, 114
        %v1129 = vpop.permute.xlu0 %1128
        %1130 = vrot.lane.b32.xlu0 %v516, 114
        %v1131 = vpop.permute.xlu0 %1130
        %1132 = vrot.lane.b32.xlu0 %v523, 114
        %v1133 = vpop.permute.xlu0 %1132
        %1134 = vrot.lane.b32.xlu0 %v530, 114
        %v1135 = vpop.permute.xlu0 %1134
        %1136 = vrot.lane.b32.xlu0 %v537, 114
        %v1137 = vpop.permute.xlu0 %1136
        %1138 = vrot.lane.b32.xlu0 %v544, 114
        %v1139 = vpop.permute.xlu0 %1138
        %1140 = vrot.lane.b32.xlu0 %v551, 114
        %v1141 = vpop.permute.xlu0 %1140
        %1142 = vrot.lane.b32.xlu0 %v558, 114
        %v1143 = vpop.permute.xlu0 %1142
        %1144 = vrot.lane.b32.xlu0 %v565, 114
        %v1145 = vpop.permute.xlu0 %1144
        %1146 = vrot.lane.b32.xlu0 %v572, 114
        %v1147 = vpop.permute.xlu0 %1146
        %1148 = vrot.lane.b32.xlu0 %v579, 114
        %v1149 = vpop.permute.xlu0 %1148
        %1150 = vrot.lane.b32.xlu0 %v586, 114
        %v1151 = vpop.permute.xlu0 %1150
        %1152 = vrot.lane.b32.xlu0 %v593, 114
        %v1153 = vpop.permute.xlu0 %1152
        %1154 = vrot.lane.b32.xlu0 %v600, 114
        %v1155 = vpop.permute.xlu0 %1154
        %1156 = vrot.lane.b32.xlu0 %v607, 114
        %v1157 = vpop.permute.xlu0 %1156
        %1158 = vrot.lane.b32.xlu0 %v614, 114
        %v1159 = vpop.permute.xlu0 %1158
        %1160 = vrot.lane.b32.xlu0 %v621, 114
        %v1161 = vpop.permute.xlu0 %1160
        %1162 = vrot.lane.b32.xlu0 %v628, 114
        %v1163 = vpop.permute.xlu0 %1162
        %1164 = vrot.lane.b32.xlu0 %v635, 114
        %v1165 = vpop.permute.xlu0 %1164
        %1166 = vrot.lane.b32.xlu0 %v642, 114
        %v1167 = vpop.permute.xlu0 %1166
        %1168 = vrot.lane.b32.xlu0 %v649, 114
        %v1169 = vpop.permute.xlu0 %1168
        %1170 = vrot.lane.b32.xlu0 %v656, 114
        %v1171 = vpop.permute.xlu0 %1170
        %1172 = vrot.lane.b32.xlu0 %v663, 114
        %v1173 = vpop.permute.xlu0 %1172
        %1174 = vrot.lane.b32.xlu0 %v670, 114
        %v1175 = vpop.permute.xlu0 %1174
        %1176 = vrot.lane.b32.xlu0 %v677, 114
        %v1177 = vpop.permute.xlu0 %1176
        %1178 = vrot.lane.b32.xlu0 %v684, 114
        %v1179 = vpop.permute.xlu0 %1178
        %1180 = vrot.lane.b32.xlu0 %v691, 114
        %v1181 = vpop.permute.xlu0 %1180
        %1182 = vrot.lane.b32.xlu0 %v698, 114
        %v1183 = vpop.permute.xlu0 %1182
        %1184 = vrot.lane.b32.xlu0 %v705, 114
        %v1185 = vpop.permute.xlu0 %1184
        %v1186 = vrot.slane %v495, 7
        %vm1187 = vcmask 1041409
        %v1188 = vsel %vm1187, %v1186, %v488
        %v1189 = vrot.slane %v502, 6
        %vm1190 = vcmask 1042434
        %v1191 = vsel %vm1190, %v1189, %v1188
        %v1192 = vrot.slane %v509, 5
        %vm1193 = vcmask 1043459
        %v1194 = vsel %vm1193, %v1192, %v1191
        %v1195 = vrot.slane %v516, 4
        %vm1196 = vcmask 1044484
        %v1197 = vsel %vm1196, %v1195, %v1194
        %v1198 = vrot.slane %v523, 3
        %vm1199 = vcmask 1045509
        %v1200 = vsel %vm1199, %v1198, %v1197
        %v1201 = vrot.slane %v530, 2
        %vm1202 = vcmask 1046534
        %v1203 = vsel %vm1202, %v1201, %v1200
        %v1204 = vrot.slane %v537, 1
        %vm1205 = vcmask 1047559
        %v1206 = vsel %vm1205, %v1204, %v1203
        %v1207 = vrot.slane %v741, 7
        %v1208 = vsel %vm1187, %v1207, %v739
        %v1209 = vrot.slane %v743, 6
        %v1210 = vsel %vm1190, %v1209, %v1208
        %v1211 = vrot.slane %v745, 5
        %v1212 = vsel %vm1193, %v1211, %v1210
        %v1213 = vrot.slane %v747, 4
        %v1214 = vsel %vm1196, %v1213, %v1212
        %v1215 = vrot.slane %v749, 3
        %v1216 = vsel %vm1199, %v1215, %v1214
        %v1217 = vrot.slane %v751, 2
        %v1218 = vsel %vm1202, %v1217, %v1216
        %v1219 = vrot.slane %v753, 1
        %v1220 = vsel %vm1205, %v1219, %v1218
        %v1221 = vrot.slane %v805, 7
        %v1222 = vsel %vm1187, %v1221, %v803
        %v1223 = vrot.slane %v807, 6
        %v1224 = vsel %vm1190, %v1223, %v1222
        %v1225 = vrot.slane %v809, 5
        %v1226 = vsel %vm1193, %v1225, %v1224
        %v1227 = vrot.slane %v811, 4
        %v1228 = vsel %vm1196, %v1227, %v1226
        %v1229 = vrot.slane %v813, 3
        %v1230 = vsel %vm1199, %v1229, %v1228
        %v1231 = vrot.slane %v815, 2
        %v1232 = vsel %vm1202, %v1231, %v1230
        %v1233 = vrot.slane %v817, 1
        %v1234 = vsel %vm1205, %v1233, %v1232
        %v1235 = vrot.slane %v869, 7
        %v1236 = vsel %vm1187, %v1235, %v867
        %v1237 = vrot.slane %v871, 6
        %v1238 = vsel %vm1190, %v1237, %v1236
        %v1239 = vrot.slane %v873, 5
        %v1240 = vsel %vm1193, %v1239, %v1238
        %v1241 = vrot.slane %v875, 4
        %v1242 = vsel %vm1196, %v1241, %v1240
        %v1243 = vrot.slane %v877, 3
        %v1244 = vsel %vm1199, %v1243, %v1242
        %v1245 = vrot.slane %v879, 2
        %v1246 = vsel %vm1202, %v1245, %v1244
        %v1247 = vrot.slane %v881, 1
        %v1248 = vsel %vm1205, %v1247, %v1246
        %v1249 = vrot.slane %v933, 7
        %v1250 = vsel %vm1187, %v1249, %v931
        %v1251 = vrot.slane %v935, 6
        %v1252 = vsel %vm1190, %v1251, %v1250
        %v1253 = vrot.slane %v937, 5
        %v1254 = vsel %vm1193, %v1253, %v1252
        %v1255 = vrot.slane %v939, 4
        %v1256 = vsel %vm1196, %v1255, %v1254
        %v1257 = vrot.slane %v941, 3
        %v1258 = vsel %vm1199, %v1257, %v1256
        %v1259 = vrot.slane %v943, 2
        %v1260 = vsel %vm1202, %v1259, %v1258
        %v1261 = vrot.slane %v945, 1
        %v1262 = vsel %vm1205, %v1261, %v1260
        %v1263 = vrot.slane %v997, 7
        %v1264 = vsel %vm1187, %v1263, %v995
        %v1265 = vrot.slane %v999, 6
        %v1266 = vsel %vm1190, %v1265, %v1264
        %v1267 = vrot.slane %v1001, 5
        %v1268 = vsel %vm1193, %v1267, %v1266
        %v1269 = vrot.slane %v1003, 4
        %v1270 = vsel %vm1196, %v1269, %v1268
        %v1271 = vrot.slane %v1005, 3
        %v1272 = vsel %vm1199, %v1271, %v1270
        %v1273 = vrot.slane %v1007, 2
        %v1274 = vsel %vm1202, %v1273, %v1272
        %v1275 = vrot.slane %v1009, 1
        %v1276 = vsel %vm1205, %v1275, %v1274
        %v1277 = vrot.slane %v1061, 7
        %v1278 = vsel %vm1187, %v1277, %v1059
        %v1279 = vrot.slane %v1063, 6
        %v1280 = vsel %vm1190, %v1279, %v1278
        %v1281 = vrot.slane %v1065, 5
        %v1282 = vsel %vm1193, %v1281, %v1280
        %v1283 = vrot.slane %v1067, 4
        %v1284 = vsel %vm1196, %v1283, %v1282
        %v1285 = vrot.slane %v1069, 3
        %v1286 = vsel %vm1199, %v1285, %v1284
        %v1287 = vrot.slane %v1071, 2
        %v1288 = vsel %vm1202, %v1287, %v1286
        %v1289 = vrot.slane %v1073, 1
        %v1290 = vsel %vm1205, %v1289, %v1288
        %v1291 = vrot.slane %v1125, 7
        %v1292 = vsel %vm1187, %v1291, %v1123
        %v1293 = vrot.slane %v1127, 6
        %v1294 = vsel %vm1190, %v1293, %v1292
        %v1295 = vrot.slane %v1129, 5
        %v1296 = vsel %vm1193, %v1295, %v1294
        %v1297 = vrot.slane %v1131, 4
        %v1298 = vsel %vm1196, %v1297, %v1296
        %v1299 = vrot.slane %v1133, 3
        %v1300 = vsel %vm1199, %v1299, %v1298
        %v1301 = vrot.slane %v1135, 2
        %v1302 = vsel %vm1202, %v1301, %v1300
        %v1303 = vrot.slane %v1137, 1
        %v1304 = vsel %vm1205, %v1303, %v1302
        %v1305 = vrot.slane %v551, 7
        %v1306 = vsel %vm1187, %v1305, %v544
        %v1307 = vrot.slane %v558, 6
        %v1308 = vsel %vm1190, %v1307, %v1306
        %v1309 = vrot.slane %v565, 5
        %v1310 = vsel %vm1193, %v1309, %v1308
        %v1311 = vrot.slane %v572, 4
        %v1312 = vsel %vm1196, %v1311, %v1310
        %v1313 = vrot.slane %v579, 3
        %v1314 = vsel %vm1199, %v1313, %v1312
        %v1315 = vrot.slane %v586, 2
        %v1316 = vsel %vm1202, %v1315, %v1314
        %v1317 = vrot.slane %v593, 1
        %v1318 = vsel %vm1205, %v1317, %v1316
        %v1319 = vrot.slane %v757, 7
        %v1320 = vsel %vm1187, %v1319, %v755
        %v1321 = vrot.slane %v759, 6
        %v1322 = vsel %vm1190, %v1321, %v1320
        %v1323 = vrot.slane %v761, 5
        %v1324 = vsel %vm1193, %v1323, %v1322
        %v1325 = vrot.slane %v763, 4
        %v1326 = vsel %vm1196, %v1325, %v1324
        %v1327 = vrot.slane %v765, 3
        %v1328 = vsel %vm1199, %v1327, %v1326
        %v1329 = vrot.slane %v767, 2
        %v1330 = vsel %vm1202, %v1329, %v1328
        %v1331 = vrot.slane %v769, 1
        %v1332 = vsel %vm1205, %v1331, %v1330
        %v1333 = vrot.slane %v821, 7
        %v1334 = vsel %vm1187, %v1333, %v819
        %v1335 = vrot.slane %v823, 6
        %v1336 = vsel %vm1190, %v1335, %v1334
        %v1337 = vrot.slane %v825, 5
        %v1338 = vsel %vm1193, %v1337, %v1336
        %v1339 = vrot.slane %v827, 4
        %v1340 = vsel %vm1196, %v1339, %v1338
        %v1341 = vrot.slane %v829, 3
        %v1342 = vsel %vm1199, %v1341, %v1340
        %v1343 = vrot.slane %v831, 2
        %v1344 = vsel %vm1202, %v1343, %v1342
        %v1345 = vrot.slane %v833, 1
        %v1346 = vsel %vm1205, %v1345, %v1344
        %v1347 = vrot.slane %v885, 7
        %v1348 = vsel %vm1187, %v1347, %v883
        %v1349 = vrot.slane %v887, 6
        %v1350 = vsel %vm1190, %v1349, %v1348
        %v1351 = vrot.slane %v889, 5
        %v1352 = vsel %vm1193, %v1351, %v1350
        %v1353 = vrot.slane %v891, 4
        %v1354 = vsel %vm1196, %v1353, %v1352
        %v1355 = vrot.slane %v893, 3
        %v1356 = vsel %vm1199, %v1355, %v1354
        %v1357 = vrot.slane %v895, 2
        %v1358 = vsel %vm1202, %v1357, %v1356
        %v1359 = vrot.slane %v897, 1
        %v1360 = vsel %vm1205, %v1359, %v1358
        %v1361 = vrot.slane %v949, 7
        %v1362 = vsel %vm1187, %v1361, %v947
        %v1363 = vrot.slane %v951, 6
        %v1364 = vsel %vm1190, %v1363, %v1362
        %v1365 = vrot.slane %v953, 5
        %v1366 = vsel %vm1193, %v1365, %v1364
        %v1367 = vrot.slane %v955, 4
        %v1368 = vsel %vm1196, %v1367, %v1366
        %v1369 = vrot.slane %v957, 3
        %v1370 = vsel %vm1199, %v1369, %v1368
        %v1371 = vrot.slane %v959, 2
        %v1372 = vsel %vm1202, %v1371, %v1370
        %v1373 = vrot.slane %v961, 1
        %v1374 = vsel %vm1205, %v1373, %v1372
        %v1375 = vrot.slane %v1013, 7
        %v1376 = vsel %vm1187, %v1375, %v1011
        %v1377 = vrot.slane %v1015, 6
        %v1378 = vsel %vm1190, %v1377, %v1376
        %v1379 = vrot.slane %v1017, 5
        %v1380 = vsel %vm1193, %v1379, %v1378
        %v1381 = vrot.slane %v1019, 4
        %v1382 = vsel %vm1196, %v1381, %v1380
        %v1383 = vrot.slane %v1021, 3
        %v1384 = vsel %vm1199, %v1383, %v1382
        %v1385 = vrot.slane %v1023, 2
        %v1386 = vsel %vm1202, %v1385, %v1384
        %v1387 = vrot.slane %v1025, 1
        %v1388 = vsel %vm1205, %v1387, %v1386
        %v1389 = vrot.slane %v1077, 7
        %v1390 = vsel %vm1187, %v1389, %v1075
        %v1391 = vrot.slane %v1079, 6
        %v1392 = vsel %vm1190, %v1391, %v1390
        %v1393 = vrot.slane %v1081, 5
        %v1394 = vsel %vm1193, %v1393, %v1392
        %v1395 = vrot.slane %v1083, 4
        %v1396 = vsel %vm1196, %v1395, %v1394
        %v1397 = vrot.slane %v1085, 3
        %v1398 = vsel %vm1199, %v1397, %v1396
        %v1399 = vrot.slane %v1087, 2
        %v1400 = vsel %vm1202, %v1399, %v1398
        %v1401 = vrot.slane %v1089, 1
        %v1402 = vsel %vm1205, %v1401, %v1400
        %v1403 = vrot.slane %v1141, 7
        %v1404 = vsel %vm1187, %v1403, %v1139
        %v1405 = vrot.slane %v1143, 6
        %v1406 = vsel %vm1190, %v1405, %v1404
        %v1407 = vrot.slane %v1145, 5
        %v1408 = vsel %vm1193, %v1407, %v1406
        %v1409 = vrot.slane %v1147, 4
        %v1410 = vsel %vm1196, %v1409, %v1408
        %v1411 = vrot.slane %v1149, 3
        %v1412 = vsel %vm1199, %v1411, %v1410
        %v1413 = vrot.slane %v1151, 2
        %v1414 = vsel %vm1202, %v1413, %v1412
        %v1415 = vrot.slane %v1153, 1
        %v1416 = vsel %vm1205, %v1415, %v1414
        %v1417 = vrot.slane %v607, 7
        %v1418 = vsel %vm1187, %v1417, %v600
        %v1419 = vrot.slane %v614, 6
        %v1420 = vsel %vm1190, %v1419, %v1418
        %v1421 = vrot.slane %v621, 5
        %v1422 = vsel %vm1193, %v1421, %v1420
        %v1423 = vrot.slane %v628, 4
        %v1424 = vsel %vm1196, %v1423, %v1422
        %v1425 = vrot.slane %v635, 3
        %v1426 = vsel %vm1199, %v1425, %v1424
        %v1427 = vrot.slane %v642, 2
        %v1428 = vsel %vm1202, %v1427, %v1426
        %v1429 = vrot.slane %v649, 1
        %v1430 = vsel %vm1205, %v1429, %v1428
        %v1431 = vrot.slane %v773, 7
        %v1432 = vsel %vm1187, %v1431, %v771
        %v1433 = vrot.slane %v775, 6
        %v1434 = vsel %vm1190, %v1433, %v1432
        %v1435 = vrot.slane %v777, 5
        %v1436 = vsel %vm1193, %v1435, %v1434
        %v1437 = vrot.slane %v779, 4
        %v1438 = vsel %vm1196, %v1437, %v1436
        %v1439 = vrot.slane %v781, 3
        %v1440 = vsel %vm1199, %v1439, %v1438
        %v1441 = vrot.slane %v783, 2
        %v1442 = vsel %vm1202, %v1441, %v1440
        %v1443 = vrot.slane %v785, 1
        %v1444 = vsel %vm1205, %v1443, %v1442
        %v1445 = vrot.slane %v837, 7
        %v1446 = vsel %vm1187, %v1445, %v835
        %v1447 = vrot.slane %v839, 6
        %v1448 = vsel %vm1190, %v1447, %v1446
        %v1449 = vrot.slane %v841, 5
        %v1450 = vsel %vm1193, %v1449, %v1448
        %v1451 = vrot.slane %v843, 4
        %v1452 = vsel %vm1196, %v1451, %v1450
        %v1453 = vrot.slane %v845, 3
        %v1454 = vsel %vm1199, %v1453, %v1452
        %v1455 = vrot.slane %v847, 2
        %v1456 = vsel %vm1202, %v1455, %v1454
        %v1457 = vrot.slane %v849, 1
        %v1458 = vsel %vm1205, %v1457, %v1456
        %v1459 = vrot.slane %v901, 7
        %v1460 = vsel %vm1187, %v1459, %v899
        %v1461 = vrot.slane %v903, 6
        %v1462 = vsel %vm1190, %v1461, %v1460
        %v1463 = vrot.slane %v905, 5
        %v1464 = vsel %vm1193, %v1463, %v1462
        %v1465 = vrot.slane %v907, 4
        %v1466 = vsel %vm1196, %v1465, %v1464
        %v1467 = vrot.slane %v909, 3
        %v1468 = vsel %vm1199, %v1467, %v1466
        %v1469 = vrot.slane %v911, 2
        %v1470 = vsel %vm1202, %v1469, %v1468
        %v1471 = vrot.slane %v913, 1
        %v1472 = vsel %vm1205, %v1471, %v1470
        %v1473 = vrot.slane %v965, 7
        %v1474 = vsel %vm1187, %v1473, %v963
        %v1475 = vrot.slane %v967, 6
        %v1476 = vsel %vm1190, %v1475, %v1474
        %v1477 = vrot.slane %v969, 5
        %v1478 = vsel %vm1193, %v1477, %v1476
        %v1479 = vrot.slane %v971, 4
        %v1480 = vsel %vm1196, %v1479, %v1478
        %v1481 = vrot.slane %v973, 3
        %v1482 = vsel %vm1199, %v1481, %v1480
        %v1483 = vrot.slane %v975, 2
        %v1484 = vsel %vm1202, %v1483, %v1482
        %v1485 = vrot.slane %v977, 1
        %v1486 = vsel %vm1205, %v1485, %v1484
        %v1487 = vrot.slane %v1029, 7
        %v1488 = vsel %vm1187, %v1487, %v1027
        %v1489 = vrot.slane %v1031, 6
        %v1490 = vsel %vm1190, %v1489, %v1488
        %v1491 = vrot.slane %v1033, 5
        %v1492 = vsel %vm1193, %v1491, %v1490
        %v1493 = vrot.slane %v1035, 4
        %v1494 = vsel %vm1196, %v1493, %v1492
        %v1495 = vrot.slane %v1037, 3
        %v1496 = vsel %vm1199, %v1495, %v1494
        %v1497 = vrot.slane %v1039, 2
        %v1498 = vsel %vm1202, %v1497, %v1496
        %v1499 = vrot.slane %v1041, 1
        %v1500 = vsel %vm1205, %v1499, %v1498
        %v1501 = vrot.slane %v1093, 7
        %v1502 = vsel %vm1187, %v1501, %v1091
        %v1503 = vrot.slane %v1095, 6
        %v1504 = vsel %vm1190, %v1503, %v1502
        %v1505 = vrot.slane %v1097, 5
        %v1506 = vsel %vm1193, %v1505, %v1504
        %v1507 = vrot.slane %v1099, 4
        %v1508 = vsel %vm1196, %v1507, %v1506
        %v1509 = vrot.slane %v1101, 3
        %v1510 = vsel %vm1199, %v1509, %v1508
        %v1511 = vrot.slane %v1103, 2
        %v1512 = vsel %vm1202, %v1511, %v1510
        %v1513 = vrot.slane %v1105, 1
        %v1514 = vsel %vm1205, %v1513, %v1512
        %v1515 = vrot.slane %v1157, 7
        %v1516 = vsel %vm1187, %v1515, %v1155
        %v1517 = vrot.slane %v1159, 6
        %v1518 = vsel %vm1190, %v1517, %v1516
        %v1519 = vrot.slane %v1161, 5
        %v1520 = vsel %vm1193, %v1519, %v1518
        %v1521 = vrot.slane %v1163, 4
        %v1522 = vsel %vm1196, %v1521, %v1520
        %v1523 = vrot.slane %v1165, 3
        %v1524 = vsel %vm1199, %v1523, %v1522
        %v1525 = vrot.slane %v1167, 2
        %v1526 = vsel %vm1202, %v1525, %v1524
        %v1527 = vrot.slane %v1169, 1
        %v1528 = vsel %vm1205, %v1527, %v1526
        %v1529 = vrot.slane %v663, 7
        %v1530 = vsel %vm1187, %v1529, %v656
        %v1531 = vrot.slane %v670, 6
        %v1532 = vsel %vm1190, %v1531, %v1530
        %v1533 = vrot.slane %v677, 5
        %v1534 = vsel %vm1193, %v1533, %v1532
        %v1535 = vrot.slane %v684, 4
        %v1536 = vsel %vm1196, %v1535, %v1534
        %v1537 = vrot.slane %v691, 3
        %v1538 = vsel %vm1199, %v1537, %v1536
        %v1539 = vrot.slane %v698, 2
        %v1540 = vsel %vm1202, %v1539, %v1538
        %v1541 = vrot.slane %v705, 1
        %v1542 = vsel %vm1205, %v1541, %v1540
        %v1543 = vrot.slane %v789, 7
        %v1544 = vsel %vm1187, %v1543, %v787
        %v1545 = vrot.slane %v791, 6
        %v1546 = vsel %vm1190, %v1545, %v1544
        %v1547 = vrot.slane %v793, 5
        %v1548 = vsel %vm1193, %v1547, %v1546
        %v1549 = vrot.slane %v795, 4
        %v1550 = vsel %vm1196, %v1549, %v1548
        %v1551 = vrot.slane %v797, 3
        %v1552 = vsel %vm1199, %v1551, %v1550
        %v1553 = vrot.slane %v799, 2
        %v1554 = vsel %vm1202, %v1553, %v1552
        %v1555 = vrot.slane %v801, 1
        %v1556 = vsel %vm1205, %v1555, %v1554
        %v1557 = vrot.slane %v853, 7
        %v1558 = vsel %vm1187, %v1557, %v851
        %v1559 = vrot.slane %v855, 6
        %v1560 = vsel %vm1190, %v1559, %v1558
        %v1561 = vrot.slane %v857, 5
        %v1562 = vsel %vm1193, %v1561, %v1560
        %v1563 = vrot.slane %v859, 4
        %v1564 = vsel %vm1196, %v1563, %v1562
        %v1565 = vrot.slane %v861, 3
        %v1566 = vsel %vm1199, %v1565, %v1564
        %v1567 = vrot.slane %v863, 2
        %v1568 = vsel %vm1202, %v1567, %v1566
        %v1569 = vrot.slane %v865, 1
        %v1570 = vsel %vm1205, %v1569, %v1568
        %v1571 = vrot.slane %v917, 7
        %v1572 = vsel %vm1187, %v1571, %v915
        %v1573 = vrot.slane %v919, 6
        %v1574 = vsel %vm1190, %v1573, %v1572
        %v1575 = vrot.slane %v921, 5
        %v1576 = vsel %vm1193, %v1575, %v1574
        %v1577 = vrot.slane %v923, 4
        %v1578 = vsel %vm1196, %v1577, %v1576
        %v1579 = vrot.slane %v925, 3
        %v1580 = vsel %vm1199, %v1579, %v1578
        %v1581 = vrot.slane %v927, 2
        %v1582 = vsel %vm1202, %v1581, %v1580
        %v1583 = vrot.slane %v929, 1
        %v1584 = vsel %vm1205, %v1583, %v1582
        %v1585 = vrot.slane %v981, 7
        %v1586 = vsel %vm1187, %v1585, %v979
        %v1587 = vrot.slane %v983, 6
        %v1588 = vsel %vm1190, %v1587, %v1586
        %v1589 = vrot.slane %v985, 5
        %v1590 = vsel %vm1193, %v1589, %v1588
        %v1591 = vrot.slane %v987, 4
        %v1592 = vsel %vm1196, %v1591, %v1590
        %v1593 = vrot.slane %v989, 3
        %v1594 = vsel %vm1199, %v1593, %v1592
        %v1595 = vrot.slane %v991, 2
        %v1596 = vsel %vm1202, %v1595, %v1594
        %v1597 = vrot.slane %v993, 1
        %v1598 = vsel %vm1205, %v1597, %v1596
        %v1599 = vrot.slane %v1045, 7
        %v1600 = vsel %vm1187, %v1599, %v1043
        %v1601 = vrot.slane %v1047, 6
        %v1602 = vsel %vm1190, %v1601, %v1600
        %v1603 = vrot.slane %v1049, 5
        %v1604 = vsel %vm1193, %v1603, %v1602
        %v1605 = vrot.slane %v1051, 4
        %v1606 = vsel %vm1196, %v1605, %v1604
        %v1607 = vrot.slane %v1053, 3
        %v1608 = vsel %vm1199, %v1607, %v1606
        %v1609 = vrot.slane %v1055, 2
        %v1610 = vsel %vm1202, %v1609, %v1608
        %v1611 = vrot.slane %v1057, 1
        %v1612 = vsel %vm1205, %v1611, %v1610
        %v1613 = vrot.slane %v1109, 7
        %v1614 = vsel %vm1187, %v1613, %v1107
        %v1615 = vrot.slane %v1111, 6
        %v1616 = vsel %vm1190, %v1615, %v1614
        %v1617 = vrot.slane %v1113, 5
        %v1618 = vsel %vm1193, %v1617, %v1616
        %v1619 = vrot.slane %v1115, 4
        %v1620 = vsel %vm1196, %v1619, %v1618
        %v1621 = vrot.slane %v1117, 3
        %v1622 = vsel %vm1199, %v1621, %v1620
        %v1623 = vrot.slane %v1119, 2
        %v1624 = vsel %vm1202, %v1623, %v1622
        %v1625 = vrot.slane %v1121, 1
        %v1626 = vsel %vm1205, %v1625, %v1624
        %v1627 = vrot.slane %v1173, 7
        %v1628 = vsel %vm1187, %v1627, %v1171
        %v1629 = vrot.slane %v1175, 6
        %v1630 = vsel %vm1190, %v1629, %v1628
        %v1631 = vrot.slane %v1177, 5
        %v1632 = vsel %vm1193, %v1631, %v1630
        %v1633 = vrot.slane %v1179, 4
        %v1634 = vsel %vm1196, %v1633, %v1632
        %v1635 = vrot.slane %v1181, 3
        %v1636 = vsel %vm1199, %v1635, %v1634
        %v1637 = vrot.slane %v1183, 2
        %v1638 = vsel %vm1202, %v1637, %v1636
        %v1639 = vrot.slane %v1185, 1
        %v1640 = vsel %vm1205, %v1639, %v1638
        %v1673 = vcombine.low %v1206, %v1234
        %v1674 = vcombine.high %v1206, %v1234
        %v1676 = vunpack.c.l.s4 1983009808
        %v1677 = vunpack.c.0.s8 %v1676
        %v1678 = vlaneseq
        %v1679 = vshrl.u32 %v1678, 7
        %v1680 = vsub.s32 %v1677, %v1679
        %v1681 = vrot.slane %v1673, %v1680
        %v1683 = vunpack.c.l.s4 1983009808
        %v1684 = vunpack.c.0.s8 %v1683
        %v1685 = vlaneseq
        %v1686 = vshrl.u32 %v1685, 7
        %v1687 = vsub.s32 %v1684, %v1686
        %v1688 = vrot.slane %v1674, %v1687
        %v1689 = vcombine.low %v1220, %v1248
        %v1690 = vcombine.high %v1220, %v1248
        %v1692 = vunpack.c.l.s4 1983009808
        %v1693 = vunpack.c.0.s8 %v1692
        %v1694 = vlaneseq
        %v1695 = vshrl.u32 %v1694, 7
        %v1696 = vsub.s32 %v1693, %v1695
        %v1697 = vrot.slane %v1689, %v1696
        %v1699 = vunpack.c.l.s4 1983009808
        %v1700 = vunpack.c.0.s8 %v1699
        %v1701 = vlaneseq
        %v1702 = vshrl.u32 %v1701, 7
        %v1703 = vsub.s32 %v1700, %v1702
        %v1704 = vrot.slane %v1690, %v1703
        %v1705 = vcombine.low %v1262, %v1290
        %v1706 = vcombine.high %v1262, %v1290
        %v1708 = vunpack.c.l.s4 1983009808
        %v1709 = vunpack.c.0.s8 %v1708
        %v1710 = vlaneseq
        %v1711 = vshrl.u32 %v1710, 7
        %v1712 = vsub.s32 %v1709, %v1711
        %v1713 = vrot.slane %v1705, %v1712
        %v1715 = vunpack.c.l.s4 1983009808
        %v1716 = vunpack.c.0.s8 %v1715
        %v1717 = vlaneseq
        %v1718 = vshrl.u32 %v1717, 7
        %v1719 = vsub.s32 %v1716, %v1718
        %v1720 = vrot.slane %v1706, %v1719
        %v1721 = vcombine.low %v1276, %v1304
        %v1722 = vcombine.high %v1276, %v1304
        %v1724 = vunpack.c.l.s4 1983009808
        %v1725 = vunpack.c.0.s8 %v1724
        %v1726 = vlaneseq
        %v1727 = vshrl.u32 %v1726, 7
        %v1728 = vsub.s32 %v1725, %v1727
        %v1729 = vrot.slane %v1721, %v1728
        %v1731 = vunpack.c.l.s4 1983009808
        %v1732 = vunpack.c.0.s8 %v1731
        %v1733 = vlaneseq
        %v1734 = vshrl.u32 %v1733, 7
        %v1735 = vsub.s32 %v1732, %v1734
        %v1736 = vrot.slane %v1722, %v1735
        %v1737 = vcombine.low %v1681, %v1697
        %v1738 = vcombine.high %v1681, %v1697
        %v1740 = vunpack.c.l.s4 1934713408
        %v1741 = vunpack.c.0.s8 %v1740
        %v1742 = vlaneseq
        %v1743 = vshrl.u32 %v1742, 7
        %v1744 = vsub.s32 %v1741, %v1743
        %v1745 = vrot.slane %v1737, %v1744
        %v1747 = vunpack.c.l.s4 1934713408
        %v1748 = vunpack.c.0.s8 %v1747
        %v1749 = vlaneseq
        %v1750 = vshrl.u32 %v1749, 7
        %v1751 = vsub.s32 %v1748, %v1750
        %v1752 = vrot.slane %v1738, %v1751
        %v1753 = vcombine.low %v1688, %v1704
        %v1754 = vcombine.high %v1688, %v1704
        %v1756 = vunpack.c.l.s4 1934713408
        %v1757 = vunpack.c.0.s8 %v1756
        %v1758 = vlaneseq
        %v1759 = vshrl.u32 %v1758, 7
        %v1760 = vsub.s32 %v1757, %v1759
        %v1761 = vrot.slane %v1753, %v1760
        %v1763 = vunpack.c.l.s4 1934713408
        %v1764 = vunpack.c.0.s8 %v1763
        %v1765 = vlaneseq
        %v1766 = vshrl.u32 %v1765, 7
        %v1767 = vsub.s32 %v1764, %v1766
        %v1768 = vrot.slane %v1754, %v1767
        %v1769 = vcombine.low %v1713, %v1729
        %v1770 = vcombine.high %v1713, %v1729
        %v1772 = vunpack.c.l.s4 1934713408
        %v1773 = vunpack.c.0.s8 %v1772
        %v1774 = vlaneseq
        %v1775 = vshrl.u32 %v1774, 7
        %v1776 = vsub.s32 %v1773, %v1775
        %v1777 = vrot.slane %v1769, %v1776
        %v1779 = vunpack.c.l.s4 1934713408
        %v1780 = vunpack.c.0.s8 %v1779
        %v1781 = vlaneseq
        %v1782 = vshrl.u32 %v1781, 7
        %v1783 = vsub.s32 %v1780, %v1782
        %v1784 = vrot.slane %v1770, %v1783
        %v1785 = vcombine.low %v1720, %v1736
        %v1786 = vcombine.high %v1720, %v1736
        %v1788 = vunpack.c.l.s4 1934713408
        %v1789 = vunpack.c.0.s8 %v1788
        %v1790 = vlaneseq
        %v1791 = vshrl.u32 %v1790, 7
        %v1792 = vsub.s32 %v1789, %v1791
        %v1793 = vrot.slane %v1785, %v1792
        %v1795 = vunpack.c.l.s4 1934713408
        %v1796 = vunpack.c.0.s8 %v1795
        %v1797 = vlaneseq
        %v1798 = vshrl.u32 %v1797, 7
        %v1799 = vsub.s32 %v1796, %v1798
        %v1800 = vrot.slane %v1786, %v1799
        %v1801 = vcombine.low %v1745, %v1777
        %v1802 = vcombine.high %v1745, %v1777
        %v1803 = vcombine.low %v1752, %v1784
        %v1804 = vcombine.high %v1752, %v1784
        %v1805 = vcombine.low %v1761, %v1793
        %v1806 = vcombine.high %v1761, %v1793
        %v1807 = vcombine.low %v1768, %v1800
        %v1808 = vcombine.high %v1768, %v1800
        %v1809 = vcombine.low %v1318, %v1346
        %v1810 = vcombine.high %v1318, %v1346
        %v1812 = vunpack.c.l.s4 1983009808
        %v1813 = vunpack.c.0.s8 %v1812
        %v1814 = vlaneseq
        %v1815 = vshrl.u32 %v1814, 7
        %v1816 = vsub.s32 %v1813, %v1815
        %v1817 = vrot.slane %v1809, %v1816
        %v1819 = vunpack.c.l.s4 1983009808
        %v1820 = vunpack.c.0.s8 %v1819
        %v1821 = vlaneseq
        %v1822 = vshrl.u32 %v1821, 7
        %v1823 = vsub.s32 %v1820, %v1822
        %v1824 = vrot.slane %v1810, %v1823
        %v1825 = vcombine.low %v1332, %v1360
        %v1826 = vcombine.high %v1332, %v1360
        %v1828 = vunpack.c.l.s4 1983009808
        %v1829 = vunpack.c.0.s8 %v1828
        %v1830 = vlaneseq
        %v1831 = vshrl.u32 %v1830, 7
        %v1832 = vsub.s32 %v1829, %v1831
        %v1833 = vrot.slane %v1825, %v1832
        %v1835 = vunpack.c.l.s4 1983009808
        %v1836 = vunpack.c.0.s8 %v1835
        %v1837 = vlaneseq
        %v1838 = vshrl.u32 %v1837, 7
        %v1839 = vsub.s32 %v1836, %v1838
        %v1840 = vrot.slane %v1826, %v1839
        %v1841 = vcombine.low %v1374, %v1402
        %v1842 = vcombine.high %v1374, %v1402
        %v1844 = vunpack.c.l.s4 1983009808
        %v1845 = vunpack.c.0.s8 %v1844
        %v1846 = vlaneseq
        %v1847 = vshrl.u32 %v1846, 7
        %v1848 = vsub.s32 %v1845, %v1847
        %v1849 = vrot.slane %v1841, %v1848
        %v1851 = vunpack.c.l.s4 1983009808
        %v1852 = vunpack.c.0.s8 %v1851
        %v1853 = vlaneseq
        %v1854 = vshrl.u32 %v1853, 7
        %v1855 = vsub.s32 %v1852, %v1854
        %v1856 = vrot.slane %v1842, %v1855
        %v1857 = vcombine.low %v1388, %v1416
        %v1858 = vcombine.high %v1388, %v1416
        %v1860 = vunpack.c.l.s4 1983009808
        %v1861 = vunpack.c.0.s8 %v1860
        %v1862 = vlaneseq
        %v1863 = vshrl.u32 %v1862, 7
        %v1864 = vsub.s32 %v1861, %v1863
        %v1865 = vrot.slane %v1857, %v1864
        %v1867 = vunpack.c.l.s4 1983009808
        %v1868 = vunpack.c.0.s8 %v1867
        %v1869 = vlaneseq
        %v1870 = vshrl.u32 %v1869, 7
        %v1871 = vsub.s32 %v1868, %v1870
        %v1872 = vrot.slane %v1858, %v1871
        %v1873 = vcombine.low %v1817, %v1833
        %v1874 = vcombine.high %v1817, %v1833
        %v1876 = vunpack.c.l.s4 1934713408
        %v1877 = vunpack.c.0.s8 %v1876
        %v1878 = vlaneseq
        %v1879 = vshrl.u32 %v1878, 7
        %v1880 = vsub.s32 %v1877, %v1879
        %v1881 = vrot.slane %v1873, %v1880
        %v1883 = vunpack.c.l.s4 1934713408
        %v1884 = vunpack.c.0.s8 %v1883
        %v1885 = vlaneseq
        %v1886 = vshrl.u32 %v1885, 7
        %v1887 = vsub.s32 %v1884, %v1886
        %v1888 = vrot.slane %v1874, %v1887
        %v1889 = vcombine.low %v1824, %v1840
        %v1890 = vcombine.high %v1824, %v1840
        %v1892 = vunpack.c.l.s4 1934713408
        %v1893 = vunpack.c.0.s8 %v1892
        %v1894 = vlaneseq
        %v1895 = vshrl.u32 %v1894, 7
        %v1896 = vsub.s32 %v1893, %v1895
        %v1897 = vrot.slane %v1889, %v1896
        %v1899 = vunpack.c.l.s4 1934713408
        %v1900 = vunpack.c.0.s8 %v1899
        %v1901 = vlaneseq
        %v1902 = vshrl.u32 %v1901, 7
        %v1903 = vsub.s32 %v1900, %v1902
        %v1904 = vrot.slane %v1890, %v1903
        %v1905 = vcombine.low %v1849, %v1865
        %v1906 = vcombine.high %v1849, %v1865
        %v1908 = vunpack.c.l.s4 1934713408
        %v1909 = vunpack.c.0.s8 %v1908
        %v1910 = vlaneseq
        %v1911 = vshrl.u32 %v1910, 7
        %v1912 = vsub.s32 %v1909, %v1911
        %v1913 = vrot.slane %v1905, %v1912
        %v1915 = vunpack.c.l.s4 1934713408
        %v1916 = vunpack.c.0.s8 %v1915
        %v1917 = vlaneseq
        %v1918 = vshrl.u32 %v1917, 7
        %v1919 = vsub.s32 %v1916, %v1918
        %v1920 = vrot.slane %v1906, %v1919
        %v1921 = vcombine.low %v1856, %v1872
        %v1922 = vcombine.high %v1856, %v1872
        %v1924 = vunpack.c.l.s4 1934713408
        %v1925 = vunpack.c.0.s8 %v1924
        %v1926 = vlaneseq
        %v1927 = vshrl.u32 %v1926, 7
        %v1928 = vsub.s32 %v1925, %v1927
        %v1929 = vrot.slane %v1921, %v1928
        %v1931 = vunpack.c.l.s4 1934713408
        %v1932 = vunpack.c.0.s8 %v1931
        %v1933 = vlaneseq
        %v1934 = vshrl.u32 %v1933, 7
        %v1935 = vsub.s32 %v1932, %v1934
        %v1936 = vrot.slane %v1922, %v1935
        %v1937 = vcombine.low %v1881, %v1913
        %v1938 = vcombine.high %v1881, %v1913
        %v1939 = vcombine.low %v1888, %v1920
        %v1940 = vcombine.high %v1888, %v1920
        %v1941 = vcombine.low %v1897, %v1929
        %v1942 = vcombine.high %v1897, %v1929
        %v1943 = vcombine.low %v1904, %v1936
        %v1944 = vcombine.high %v1904, %v1936
        %v1945 = vcombine.low %v1430, %v1458
        %v1946 = vcombine.high %v1430, %v1458
        %v1948 = vunpack.c.l.s4 1983009808
        %v1949 = vunpack.c.0.s8 %v1948
        %v1950 = vlaneseq
        %v1951 = vshrl.u32 %v1950, 7
        %v1952 = vsub.s32 %v1949, %v1951
        %v1953 = vrot.slane %v1945, %v1952
        %v1955 = vunpack.c.l.s4 1983009808
        %v1956 = vunpack.c.0.s8 %v1955
        %v1957 = vlaneseq
        %v1958 = vshrl.u32 %v1957, 7
        %v1959 = vsub.s32 %v1956, %v1958
        %v1960 = vrot.slane %v1946, %v1959
        %v1961 = vcombine.low %v1444, %v1472
        %v1962 = vcombine.high %v1444, %v1472
        %v1964 = vunpack.c.l.s4 1983009808
        %v1965 = vunpack.c.0.s8 %v1964
        %v1966 = vlaneseq
        %v1967 = vshrl.u32 %v1966, 7
        %v1968 = vsub.s32 %v1965, %v1967
        %v1969 = vrot.slane %v1961, %v1968
        %v1971 = vunpack.c.l.s4 1983009808
        %v1972 = vunpack.c.0.s8 %v1971
        %v1973 = vlaneseq
        %v1974 = vshrl.u32 %v1973, 7
        %v1975 = vsub.s32 %v1972, %v1974
        %v1976 = vrot.slane %v1962, %v1975
        %v1977 = vcombine.low %v1486, %v1514
        %v1978 = vcombine.high %v1486, %v1514
        %v1980 = vunpack.c.l.s4 1983009808
        %v1981 = vunpack.c.0.s8 %v1980
        %v1982 = vlaneseq
        %v1983 = vshrl.u32 %v1982, 7
        %v1984 = vsub.s32 %v1981, %v1983
        %v1985 = vrot.slane %v1977, %v1984
        %v1987 = vunpack.c.l.s4 1983009808
        %v1988 = vunpack.c.0.s8 %v1987
        %v1989 = vlaneseq
        %v1990 = vshrl.u32 %v1989, 7
        %v1991 = vsub.s32 %v1988, %v1990
        %v1992 = vrot.slane %v1978, %v1991
        %v1993 = vcombine.low %v1500, %v1528
        %v1994 = vcombine.high %v1500, %v1528
        %v1996 = vunpack.c.l.s4 1983009808
        %v1997 = vunpack.c.0.s8 %v1996
        %v1998 = vlaneseq
        %v1999 = vshrl.u32 %v1998, 7
        %v2000 = vsub.s32 %v1997, %v1999
        %v2001 = vrot.slane %v1993, %v2000
        %v2003 = vunpack.c.l.s4 1983009808
        %v2004 = vunpack.c.0.s8 %v2003
        %v2005 = vlaneseq
        %v2006 = vshrl.u32 %v2005, 7
        %v2007 = vsub.s32 %v2004, %v2006
        %v2008 = vrot.slane %v1994, %v2007
        %v2009 = vcombine.low %v1953, %v1969
        %v2010 = vcombine.high %v1953, %v1969
        %v2012 = vunpack.c.l.s4 1934713408
        %v2013 = vunpack.c.0.s8 %v2012
        %v2014 = vlaneseq
        %v2015 = vshrl.u32 %v2014, 7
        %v2016 = vsub.s32 %v2013, %v2015
        %v2017 = vrot.slane %v2009, %v2016
        %v2019 = vunpack.c.l.s4 1934713408
        %v2020 = vunpack.c.0.s8 %v2019
        %v2021 = vlaneseq
        %v2022 = vshrl.u32 %v2021, 7
        %v2023 = vsub.s32 %v2020, %v2022
        %v2024 = vrot.slane %v2010, %v2023
        %v2025 = vcombine.low %v1960, %v1976
        %v2026 = vcombine.high %v1960, %v1976
        %v2028 = vunpack.c.l.s4 1934713408
        %v2029 = vunpack.c.0.s8 %v2028
        %v2030 = vlaneseq
        %v2031 = vshrl.u32 %v2030, 7
        %v2032 = vsub.s32 %v2029, %v2031
        %v2033 = vrot.slane %v2025, %v2032
        %v2035 = vunpack.c.l.s4 1934713408
        %v2036 = vunpack.c.0.s8 %v2035
        %v2037 = vlaneseq
        %v2038 = vshrl.u32 %v2037, 7
        %v2039 = vsub.s32 %v2036, %v2038
        %v2040 = vrot.slane %v2026, %v2039
        %v2041 = vcombine.low %v1985, %v2001
        %v2042 = vcombine.high %v1985, %v2001
        %v2044 = vunpack.c.l.s4 1934713408
        %v2045 = vunpack.c.0.s8 %v2044
        %v2046 = vlaneseq
        %v2047 = vshrl.u32 %v2046, 7
        %v2048 = vsub.s32 %v2045, %v2047
        %v2049 = vrot.slane %v2041, %v2048
        %v2051 = vunpack.c.l.s4 1934713408
        %v2052 = vunpack.c.0.s8 %v2051
        %v2053 = vlaneseq
        %v2054 = vshrl.u32 %v2053, 7
        %v2055 = vsub.s32 %v2052, %v2054
        %v2056 = vrot.slane %v2042, %v2055
        %v2057 = vcombine.low %v1992, %v2008
        %v2058 = vcombine.high %v1992, %v2008
        %v2060 = vunpack.c.l.s4 1934713408
        %v2061 = vunpack.c.0.s8 %v2060
        %v2062 = vlaneseq
        %v2063 = vshrl.u32 %v2062, 7
        %v2064 = vsub.s32 %v2061, %v2063
        %v2065 = vrot.slane %v2057, %v2064
        %v2067 = vunpack.c.l.s4 1934713408
        %v2068 = vunpack.c.0.s8 %v2067
        %v2069 = vlaneseq
        %v2070 = vshrl.u32 %v2069, 7
        %v2071 = vsub.s32 %v2068, %v2070
        %v2072 = vrot.slane %v2058, %v2071
        %v2073 = vcombine.low %v2017, %v2049
        %v2074 = vcombine.high %v2017, %v2049
        %v2075 = vcombine.low %v2024, %v2056
        %v2076 = vcombine.high %v2024, %v2056
        %v2077 = vcombine.low %v2033, %v2065
        %v2078 = vcombine.high %v2033, %v2065
        %v2079 = vcombine.low %v2040, %v2072
        %v2080 = vcombine.high %v2040, %v2072
        %v2081 = vcombine.low %v1542, %v1570
        %v2082 = vcombine.high %v1542, %v1570
        %v2084 = vunpack.c.l.s4 1983009808
        %v2085 = vunpack.c.0.s8 %v2084
        %v2086 = vlaneseq
        %v2087 = vshrl.u32 %v2086, 7
        %v2088 = vsub.s32 %v2085, %v2087
        %v2089 = vrot.slane %v2081, %v2088
        %v2091 = vunpack.c.l.s4 1983009808
        %v2092 = vunpack.c.0.s8 %v2091
        %v2093 = vlaneseq
        %v2094 = vshrl.u32 %v2093, 7
        %v2095 = vsub.s32 %v2092, %v2094
        %v2096 = vrot.slane %v2082, %v2095
        %v2097 = vcombine.low %v1556, %v1584
        %v2098 = vcombine.high %v1556, %v1584
        %v2100 = vunpack.c.l.s4 1983009808
        %v2101 = vunpack.c.0.s8 %v2100
        %v2102 = vlaneseq
        %v2103 = vshrl.u32 %v2102, 7
        %v2104 = vsub.s32 %v2101, %v2103
        %v2105 = vrot.slane %v2097, %v2104
        %v2107 = vunpack.c.l.s4 1983009808
        %v2108 = vunpack.c.0.s8 %v2107
        %v2109 = vlaneseq
        %v2110 = vshrl.u32 %v2109, 7
        %v2111 = vsub.s32 %v2108, %v2110
        %v2112 = vrot.slane %v2098, %v2111
        %v2113 = vcombine.low %v1598, %v1626
        %v2114 = vcombine.high %v1598, %v1626
        %v2116 = vunpack.c.l.s4 1983009808
        %v2117 = vunpack.c.0.s8 %v2116
        %v2118 = vlaneseq
        %v2119 = vshrl.u32 %v2118, 7
        %v2120 = vsub.s32 %v2117, %v2119
        %v2121 = vrot.slane %v2113, %v2120
        %v2123 = vunpack.c.l.s4 1983009808
        %v2124 = vunpack.c.0.s8 %v2123
        %v2125 = vlaneseq
        %v2126 = vshrl.u32 %v2125, 7
        %v2127 = vsub.s32 %v2124, %v2126
        %v2128 = vrot.slane %v2114, %v2127
        %v2129 = vcombine.low %v1612, %v1640
        %v2130 = vcombine.high %v1612, %v1640
        %v2132 = vunpack.c.l.s4 1983009808
        %v2133 = vunpack.c.0.s8 %v2132
        %v2134 = vlaneseq
        %v2135 = vshrl.u32 %v2134, 7
        %v2136 = vsub.s32 %v2133, %v2135
        %v2137 = vrot.slane %v2129, %v2136
        %v2139 = vunpack.c.l.s4 1983009808
        %v2140 = vunpack.c.0.s8 %v2139
        %v2141 = vlaneseq
        %v2142 = vshrl.u32 %v2141, 7
        %v2143 = vsub.s32 %v2140, %v2142
        %v2144 = vrot.slane %v2130, %v2143
        %v2145 = vcombine.low %v2089, %v2105
        %v2146 = vcombine.high %v2089, %v2105
        %v2148 = vunpack.c.l.s4 1934713408
        %v2149 = vunpack.c.0.s8 %v2148
        %v2150 = vlaneseq
        %v2151 = vshrl.u32 %v2150, 7
        %v2152 = vsub.s32 %v2149, %v2151
        %v2153 = vrot.slane %v2145, %v2152
        %v2155 = vunpack.c.l.s4 1934713408
        %v2156 = vunpack.c.0.s8 %v2155
        %v2157 = vlaneseq
        %v2158 = vshrl.u32 %v2157, 7
        %v2159 = vsub.s32 %v2156, %v2158
        %v2160 = vrot.slane %v2146, %v2159
        %v2161 = vcombine.low %v2096, %v2112
        %v2162 = vcombine.high %v2096, %v2112
        %v2164 = vunpack.c.l.s4 1934713408
        %v2165 = vunpack.c.0.s8 %v2164
        %v2166 = vlaneseq
        %v2167 = vshrl.u32 %v2166, 7
        %v2168 = vsub.s32 %v2165, %v2167
        %v2169 = vrot.slane %v2161, %v2168
        %v2171 = vunpack.c.l.s4 1934713408
        %v2172 = vunpack.c.0.s8 %v2171
        %v2173 = vlaneseq
        %v2174 = vshrl.u32 %v2173, 7
        %v2175 = vsub.s32 %v2172, %v2174
        %v2176 = vrot.slane %v2162, %v2175
        %v2177 = vcombine.low %v2121, %v2137
        %v2178 = vcombine.high %v2121, %v2137
        %v2180 = vunpack.c.l.s4 1934713408
        %v2181 = vunpack.c.0.s8 %v2180
        %v2182 = vlaneseq
        %v2183 = vshrl.u32 %v2182, 7
        %v2184 = vsub.s32 %v2181, %v2183
        %v2185 = vrot.slane %v2177, %v2184
        %v2187 = vunpack.c.l.s4 1934713408
        %v2188 = vunpack.c.0.s8 %v2187
        %v2189 = vlaneseq
        %v2190 = vshrl.u32 %v2189, 7
        %v2191 = vsub.s32 %v2188, %v2190
        %v2192 = vrot.slane %v2178, %v2191
        %v2193 = vcombine.low %v2128, %v2144
        %v2194 = vcombine.high %v2128, %v2144
        %v2196 = vunpack.c.l.s4 1934713408
        %v2197 = vunpack.c.0.s8 %v2196
        %v2198 = vlaneseq
        %v2199 = vshrl.u32 %v2198, 7
        %v2200 = vsub.s32 %v2197, %v2199
        %v2201 = vrot.slane %v2193, %v2200
        %v2203 = vunpack.c.l.s4 1934713408
        %v2204 = vunpack.c.0.s8 %v2203
        %v2205 = vlaneseq
        %v2206 = vshrl.u32 %v2205, 7
        %v2207 = vsub.s32 %v2204, %v2206
        %v2208 = vrot.slane %v2194, %v2207
        %v2209 = vcombine.low %v2153, %v2185
        %v2210 = vcombine.high %v2153, %v2185
        %v2211 = vcombine.low %v2160, %v2192
        %v2212 = vcombine.high %v2160, %v2192
        %v2213 = vcombine.low %v2169, %v2201
        %v2214 = vcombine.high %v2169, %v2201
        %v2215 = vcombine.low %v2176, %v2208
        %v2216 = vcombine.high %v2176, %v2208
        %vm2217 = vcmask 15360
        %v2218 = vsel %vm2217, %v1801, -inf
        %2219 = vmax.xlane.f32.xlu0 %v2218
        %v2220 = vpop.xlane.xlu0 %2219
        %v2221 = vsel %vm2217, %v1802, -inf
        %2222 = vmax.xlane.f32.xlu0 %v2221
        %v2223 = vpop.xlane.xlu0 %2222
        %v2224 = vsel %vm2217, %v1803, -inf
        %2225 = vmax.xlane.f32.xlu0 %v2224
        %v2226 = vpop.xlane.xlu0 %2225
        %v2227 = vsel %vm2217, %v1804, -inf
        %2228 = vmax.xlane.f32.xlu0 %v2227
        %v2229 = vpop.xlane.xlu0 %2228
        %v2230 = vsel %vm2217, %v1805, -inf
        %2231 = vmax.xlane.f32.xlu0 %v2230
        %v2232 = vpop.xlane.xlu0 %2231
        %v2233 = vsel %vm2217, %v1806, -inf
        %2234 = vmax.xlane.f32.xlu0 %v2233
        %v2235 = vpop.xlane.xlu0 %2234
        %v2236 = vsel %vm2217, %v1807, -inf
        %2237 = vmax.xlane.f32.xlu0 %v2236
        %v2238 = vpop.xlane.xlu0 %2237
        %v2239 = vsel %vm2217, %v1808, -inf
        %2240 = vmax.xlane.f32.xlu0 %v2239
        %v2241 = vpop.xlane.xlu0 %2240
        %v2242 = vsel %vm2217, %v1937, -inf
        %2243 = vmax.xlane.f32.xlu0 %v2242
        %v2244 = vpop.xlane.xlu0 %2243
        %v2245 = vsel %vm2217, %v1938, -inf
        %2246 = vmax.xlane.f32.xlu0 %v2245
        %v2247 = vpop.xlane.xlu0 %2246
        %v2248 = vsel %vm2217, %v1939, -inf
        %2249 = vmax.xlane.f32.xlu0 %v2248
        %v2250 = vpop.xlane.xlu0 %2249
        %v2251 = vsel %vm2217, %v1940, -inf
        %2252 = vmax.xlane.f32.xlu0 %v2251
        %v2253 = vpop.xlane.xlu0 %2252
        %v2254 = vsel %vm2217, %v1941, -inf
        %2255 = vmax.xlane.f32.xlu0 %v2254
        %v2256 = vpop.xlane.xlu0 %2255
        %v2257 = vsel %vm2217, %v1942, -inf
        %2258 = vmax.xlane.f32.xlu0 %v2257
        %v2259 = vpop.xlane.xlu0 %2258
        %v2260 = vsel %vm2217, %v1943, -inf
        %2261 = vmax.xlane.f32.xlu0 %v2260
        %v2262 = vpop.xlane.xlu0 %2261
        %v2263 = vsel %vm2217, %v1944, -inf
        %2264 = vmax.xlane.f32.xlu0 %v2263
        %v2265 = vpop.xlane.xlu0 %2264
        %v2266 = vsel %vm2217, %v2073, -inf
        %2267 = vmax.xlane.f32.xlu0 %v2266
        %v2268 = vpop.xlane.xlu0 %2267
        %v2269 = vsel %vm2217, %v2074, -inf
        %2270 = vmax.xlane.f32.xlu0 %v2269
        %v2271 = vpop.xlane.xlu0 %2270
        %v2272 = vsel %vm2217, %v2075, -inf
        %2273 = vmax.xlane.f32.xlu0 %v2272
        %v2274 = vpop.xlane.xlu0 %2273
        %v2275 = vsel %vm2217, %v2076, -inf
        %2276 = vmax.xlane.f32.xlu0 %v2275
        %v2277 = vpop.xlane.xlu0 %2276
        %v2278 = vsel %vm2217, %v2077, -inf
        %2279 = vmax.xlane.f32.xlu0 %v2278
        %v2280 = vpop.xlane.xlu0 %2279
        %v2281 = vsel %vm2217, %v2078, -inf
        %2282 = vmax.xlane.f32.xlu0 %v2281
        %v2283 = vpop.xlane.xlu0 %2282
        %v2284 = vsel %vm2217, %v2079, -inf
        %2285 = vmax.xlane.f32.xlu0 %v2284
        %v2286 = vpop.xlane.xlu0 %2285
        %v2287 = vsel %vm2217, %v2080, -inf
        %2288 = vmax.xlane.f32.xlu0 %v2287
        %v2289 = vpop.xlane.xlu0 %2288
        %v2290 = vsel %vm2217, %v2209, -inf
        %2291 = vmax.xlane.f32.xlu0 %v2290
        %v2292 = vpop.xlane.xlu0 %2291
        %v2293 = vsel %vm2217, %v2210, -inf
        %2294 = vmax.xlane.f32.xlu0 %v2293
        %v2295 = vpop.xlane.xlu0 %2294
        %v2296 = vsel %vm2217, %v2211, -inf
        %2297 = vmax.xlane.f32.xlu0 %v2296
        %v2298 = vpop.xlane.xlu0 %2297
        %v2299 = vsel %vm2217, %v2212, -inf
        %2300 = vmax.xlane.f32.xlu0 %v2299
        %v2301 = vpop.xlane.xlu0 %2300
        %v2302 = vsel %vm2217, %v2213, -inf
        %2303 = vmax.xlane.f32.xlu0 %v2302
        %v2304 = vpop.xlane.xlu0 %2303
        %v2305 = vsel %vm2217, %v2214, -inf
        %2306 = vmax.xlane.f32.xlu0 %v2305
        %v2307 = vpop.xlane.xlu0 %2306
        %v2308 = vsel %vm2217, %v2215, -inf
        %2309 = vmax.xlane.f32.xlu0 %v2308
        %v2310 = vpop.xlane.xlu0 %2309
        %v2311 = vsel %vm2217, %v2216, -inf
        %2312 = vmax.xlane.f32.xlu0 %v2311
        %v2313 = vpop.xlane.xlu0 %2312
        %v2346 = vlaneseq
        %v2347 = vand.u32 %v2346, 127
        %v2348 = vlaneseq
        %v2349 = vshrl.u32 %v2348, 7
        %v2350 = vsub.s32 %v2347, %v2349
        %v2351 = vrot.slane %v2220, %v2350
        %v2352 = vlaneseq
        %v2353 = vshrl.u32 %v2352, 7
        %v2354 = vsub.s32 %v2347, %v2353
        %v2355 = vrot.slane %v2223, %v2354
        %v2356 = vlaneseq
        %v2357 = vshrl.u32 %v2356, 7
        %v2358 = vsub.s32 %v2347, %v2357
        %v2359 = vrot.slane %v2226, %v2358
        %v2360 = vlaneseq
        %v2361 = vshrl.u32 %v2360, 7
        %v2362 = vsub.s32 %v2347, %v2361
        %v2363 = vrot.slane %v2229, %v2362
        %v2364 = vlaneseq
        %v2365 = vshrl.u32 %v2364, 7
        %v2366 = vsub.s32 %v2347, %v2365
        %v2367 = vrot.slane %v2232, %v2366
        %v2368 = vlaneseq
        %v2369 = vshrl.u32 %v2368, 7
        %v2370 = vsub.s32 %v2347, %v2369
        %v2371 = vrot.slane %v2235, %v2370
        %v2372 = vlaneseq
        %v2373 = vshrl.u32 %v2372, 7
        %v2374 = vsub.s32 %v2347, %v2373
        %v2375 = vrot.slane %v2238, %v2374
        %v2376 = vlaneseq
        %v2377 = vshrl.u32 %v2376, 7
        %v2378 = vsub.s32 %v2347, %v2377
        %v2379 = vrot.slane %v2241, %v2378
        %v2380 = vlaneseq
        %v2381 = vshrl.u32 %v2380, 7
        %v2382 = vsub.s32 %v2347, %v2381
        %v2383 = vrot.slane %v2244, %v2382
        %v2384 = vlaneseq
        %v2385 = vshrl.u32 %v2384, 7
        %v2386 = vsub.s32 %v2347, %v2385
        %v2387 = vrot.slane %v2247, %v2386
        %v2388 = vlaneseq
        %v2389 = vshrl.u32 %v2388, 7
        %v2390 = vsub.s32 %v2347, %v2389
        %v2391 = vrot.slane %v2250, %v2390
        %v2392 = vlaneseq
        %v2393 = vshrl.u32 %v2392, 7
        %v2394 = vsub.s32 %v2347, %v2393
        %v2395 = vrot.slane %v2253, %v2394
        %v2396 = vlaneseq
        %v2397 = vshrl.u32 %v2396, 7
        %v2398 = vsub.s32 %v2347, %v2397
        %v2399 = vrot.slane %v2256, %v2398
        %v2400 = vlaneseq
        %v2401 = vshrl.u32 %v2400, 7
        %v2402 = vsub.s32 %v2347, %v2401
        %v2403 = vrot.slane %v2259, %v2402
        %v2404 = vlaneseq
        %v2405 = vshrl.u32 %v2404, 7
        %v2406 = vsub.s32 %v2347, %v2405
        %v2407 = vrot.slane %v2262, %v2406
        %v2408 = vlaneseq
        %v2409 = vshrl.u32 %v2408, 7
        %v2410 = vsub.s32 %v2347, %v2409
        %v2411 = vrot.slane %v2265, %v2410
        %v2412 = vlaneseq
        %v2413 = vshrl.u32 %v2412, 7
        %v2414 = vsub.s32 %v2347, %v2413
        %v2415 = vrot.slane %v2268, %v2414
        %v2416 = vlaneseq
        %v2417 = vshrl.u32 %v2416, 7
        %v2418 = vsub.s32 %v2347, %v2417
        %v2419 = vrot.slane %v2271, %v2418
        %v2420 = vlaneseq
        %v2421 = vshrl.u32 %v2420, 7
        %v2422 = vsub.s32 %v2347, %v2421
        %v2423 = vrot.slane %v2274, %v2422
        %v2424 = vlaneseq
        %v2425 = vshrl.u32 %v2424, 7
        %v2426 = vsub.s32 %v2347, %v2425
        %v2427 = vrot.slane %v2277, %v2426
        %v2428 = vlaneseq
        %v2429 = vshrl.u32 %v2428, 7
        %v2430 = vsub.s32 %v2347, %v2429
        %v2431 = vrot.slane %v2280, %v2430
        %v2432 = vlaneseq
        %v2433 = vshrl.u32 %v2432, 7
        %v2434 = vsub.s32 %v2347, %v2433
        %v2435 = vrot.slane %v2283, %v2434
        %v2436 = vlaneseq
        %v2437 = vshrl.u32 %v2436, 7
        %v2438 = vsub.s32 %v2347, %v2437
        %v2439 = vrot.slane %v2286, %v2438
        %v2440 = vlaneseq
        %v2441 = vshrl.u32 %v2440, 7
        %v2442 = vsub.s32 %v2347, %v2441
        %v2443 = vrot.slane %v2289, %v2442
        %v2444 = vlaneseq
        %v2445 = vshrl.u32 %v2444, 7
        %v2446 = vsub.s32 %v2347, %v2445
        %v2447 = vrot.slane %v2292, %v2446
        %v2448 = vlaneseq
        %v2449 = vshrl.u32 %v2448, 7
        %v2450 = vsub.s32 %v2347, %v2449
        %v2451 = vrot.slane %v2295, %v2450
        %v2452 = vlaneseq
        %v2453 = vshrl.u32 %v2452, 7
        %v2454 = vsub.s32 %v2347, %v2453
        %v2455 = vrot.slane %v2298, %v2454
        %v2456 = vlaneseq
        %v2457 = vshrl.u32 %v2456, 7
        %v2458 = vsub.s32 %v2347, %v2457
        %v2459 = vrot.slane %v2301, %v2458
        %v2460 = vlaneseq
        %v2461 = vshrl.u32 %v2460, 7
        %v2462 = vsub.s32 %v2347, %v2461
        %v2463 = vrot.slane %v2304, %v2462
        %v2464 = vlaneseq
        %v2465 = vshrl.u32 %v2464, 7
        %v2466 = vsub.s32 %v2347, %v2465
        %v2467 = vrot.slane %v2307, %v2466
        %v2468 = vlaneseq
        %v2469 = vshrl.u32 %v2468, 7
        %v2470 = vsub.s32 %v2347, %v2469
        %v2471 = vrot.slane %v2310, %v2470
        %v2472 = vlaneseq
        %v2473 = vshrl.u32 %v2472, 7
        %v2474 = vsub.s32 %v2347, %v2473
        %v2475 = vrot.slane %v2313, %v2474
        %v2476 = vsel %vm1190, %v2355, %v2351
        %v2477 = vsel %vm1193, %v2359, %v2476
        %v2478 = vsel %vm1196, %v2363, %v2477
        %v2479 = vsel %vm1199, %v2367, %v2478
        %v2480 = vsel %vm1202, %v2371, %v2479
        %v2481 = vsel %vm1205, %v2375, %v2480
        %v2482 = vsel %vm1190, %v2387, %v2383
        %v2483 = vsel %vm1193, %v2391, %v2482
        %v2484 = vsel %vm1196, %v2395, %v2483
        %v2485 = vsel %vm1199, %v2399, %v2484
        %v2486 = vsel %vm1202, %v2403, %v2485
        %v2487 = vsel %vm1205, %v2407, %v2486
        %v2488 = vsel %vm1190, %v2419, %v2415
        %v2489 = vsel %vm1193, %v2423, %v2488
        %v2490 = vsel %vm1196, %v2427, %v2489
        %v2491 = vsel %vm1199, %v2431, %v2490
        %v2492 = vsel %vm1202, %v2435, %v2491
        %v2493 = vsel %vm1205, %v2439, %v2492
        %v2494 = vsel %vm1190, %v2451, %v2447
        %v2495 = vsel %vm1193, %v2455, %v2494
        %v2496 = vsel %vm1196, %v2459, %v2495
        %v2497 = vsel %vm1199, %v2463, %v2496
        %v2498 = vsel %vm1202, %v2467, %v2497
        %v2499 = vsel %vm1205, %v2471, %v2498
        %vm2508 = vcmask 1040384
        %v2509 = vsel %vm2508, 0.0, %v2481
        %v2510 = vsel %vm2508, 0.0, %v2487
        %v2511 = vsel %vm2508, 0.0, %v2493
        %v2512 = vsel %vm2508, 0.0, %v2499
        %v2513 = vsel %vm2508, %v2379, 0.0
        %v2514 = vsel %vm2508, %v2411, 0.0
        %v2515 = vsel %vm2508, %v2443, 0.0
        %v2516 = vsel %vm2508, %v2475, 0.0
        %2525 = vrot.lane.b32.xlu0 %v2509, 1
        %v2526 = vpop.permute.xlu0 %2525
        %2527 = vrot.lane.b32.xlu0 %v2513, 1
        %v2528 = vpop.permute.xlu0 %2527
        %2529 = vrot.lane.b32.xlu0 %v2510, 1
        %v2530 = vpop.permute.xlu0 %2529
        %2531 = vrot.lane.b32.xlu0 %v2514, 1
        %v2532 = vpop.permute.xlu0 %2531
        %2533 = vrot.lane.b32.xlu0 %v2511, 1
        %v2534 = vpop.permute.xlu0 %2533
        %2535 = vrot.lane.b32.xlu0 %v2515, 1
        %v2536 = vpop.permute.xlu0 %2535
        %2537 = vrot.lane.b32.xlu0 %v2512, 1
        %v2538 = vpop.permute.xlu0 %2537
        %2539 = vrot.lane.b32.xlu0 %v2516, 1
        %v2540 = vpop.permute.xlu0 %2539
        %vm2549 = vcmask 7168
        %v2550 = vsel %vm2549, 0.0, %v2526
        %v2551 = vsel %vm2549, 0.0, %v2528
        %v2552 = vsel %vm2549, 0.0, %v2530
        %v2553 = vsel %vm2549, 0.0, %v2532
        %v2554 = vsel %vm2549, 0.0, %v2534
        %v2555 = vsel %vm2549, 0.0, %v2536
        %v2556 = vsel %vm2549, 0.0, %v2538
        %v2557 = vsel %vm2549, 0.0, %v2540
        %vm2558 = vcmask 72704
        %v2559 = vsel %vm2558, %v2550, 0.0
        %v2560 = vsel %vm2558, %v2551, 0.0
        %v2561 = vsel %vm2558, %v2552, 0.0
        %v2562 = vsel %vm2558, %v2553, 0.0
        %v2563 = vsel %vm2558, %v2554, 0.0
        %v2564 = vsel %vm2558, %v2555, 0.0
        %v2565 = vsel %vm2558, %v2556, 0.0
        %v2566 = vsel %vm2558, %v2557, 0.0
        %2571 = vrot.lane.b32.xlu0 %v2559, 127
        %v2572 = vpop.permute.xlu0 %2571
        %2573 = vrot.lane.b32.xlu0 %v2561, 127
        %v2574 = vpop.permute.xlu0 %2573
        %2575 = vrot.lane.b32.xlu0 %v2563, 127
        %v2576 = vpop.permute.xlu0 %2575
        %2577 = vrot.lane.b32.xlu0 %v2565, 127
        %v2578 = vpop.permute.xlu0 %2577
        %2583 = vrot.lane.b32.xlu0 %v2559, 126
        %v2584 = vpop.permute.xlu0 %2583
        %2585 = vrot.lane.b32.xlu0 %v2561, 126
        %v2586 = vpop.permute.xlu0 %2585
        %2587 = vrot.lane.b32.xlu0 %v2563, 126
        %v2588 = vpop.permute.xlu0 %2587
        %2589 = vrot.lane.b32.xlu0 %v2565, 126
        %v2590 = vpop.permute.xlu0 %2589
        %vm2599 = vcmask 1046528
        %v2600 = vrot.slane %v2559, 1
        %v2601 = vrot.slane %v2560, 1
        %v2602 = vsel %vm2599, %v2600, %v2601
        %v2603 = vrot.slane %v2561, 1
        %v2604 = vrot.slane %v2562, 1
        %v2605 = vsel %vm2599, %v2603, %v2604
        %v2606 = vrot.slane %v2563, 1
        %v2607 = vrot.slane %v2564, 1
        %v2608 = vsel %vm2599, %v2606, %v2607
        %v2609 = vrot.slane %v2565, 1
        %v2610 = vrot.slane %v2566, 1
        %v2611 = vsel %vm2599, %v2609, %v2610
        %2616 = vrot.lane.b32.xlu0 %v2602, 127
        %v2617 = vpop.permute.xlu0 %2616
        %2618 = vrot.lane.b32.xlu0 %v2605, 127
        %v2619 = vpop.permute.xlu0 %2618
        %2620 = vrot.lane.b32.xlu0 %v2608, 127
        %v2621 = vpop.permute.xlu0 %2620
        %2622 = vrot.lane.b32.xlu0 %v2611, 127
        %v2623 = vpop.permute.xlu0 %2622
        %2628 = vrot.lane.b32.xlu0 %v2602, 126
        %v2629 = vpop.permute.xlu0 %2628
        %2630 = vrot.lane.b32.xlu0 %v2605, 126
        %v2631 = vpop.permute.xlu0 %2630
        %2632 = vrot.lane.b32.xlu0 %v2608, 126
        %v2633 = vpop.permute.xlu0 %2632
        %2634 = vrot.lane.b32.xlu0 %v2611, 126
        %v2635 = vpop.permute.xlu0 %2634
        %vm2640 = vcmask 1045504
        %v2641 = vrot.slane %v2559, 2
        %v2642 = vrot.slane %v2560, 2
        %v2643 = vsel %vm2640, %v2641, %v2642
        %v2644 = vrot.slane %v2561, 2
        %v2645 = vrot.slane %v2562, 2
        %v2646 = vsel %vm2640, %v2644, %v2645
        %v2647 = vrot.slane %v2563, 2
        %v2648 = vrot.slane %v2564, 2
        %v2649 = vsel %vm2640, %v2647, %v2648
        %v2650 = vrot.slane %v2565, 2
        %v2651 = vrot.slane %v2566, 2
        %v2652 = vsel %vm2640, %v2650, %v2651
        %2657 = vrot.lane.b32.xlu0 %v2643, 127
        %v2658 = vpop.permute.xlu0 %2657
        %2659 = vrot.lane.b32.xlu0 %v2646, 127
        %v2660 = vpop.permute.xlu0 %2659
        %2661 = vrot.lane.b32.xlu0 %v2649, 127
        %v2662 = vpop.permute.xlu0 %2661
        %2663 = vrot.lane.b32.xlu0 %v2652, 127
        %v2664 = vpop.permute.xlu0 %2663
        %2669 = vrot.lane.b32.xlu0 %v2643, 126
        %v2670 = vpop.permute.xlu0 %2669
        %2671 = vrot.lane.b32.xlu0 %v2646, 126
        %v2672 = vpop.permute.xlu0 %2671
        %2673 = vrot.lane.b32.xlu0 %v2649, 126
        %v2674 = vpop.permute.xlu0 %2673
        %2675 = vrot.lane.b32.xlu0 %v2652, 126
        %v2676 = vpop.permute.xlu0 %2675
        %v2681 = vcombine.low %v2559, %v2563
        %v2682 = vcombine.high %v2559, %v2563
        %v2684 = vunpack.c.l.s4 1983009808
        %v2685 = vunpack.c.0.s8 %v2684
        %v2686 = vlaneseq
        %v2687 = vshrl.u32 %v2686, 7
        %v2688 = vsub.s32 %v2685, %v2687
        %v2689 = vrot.slane %v2681, %v2688
        %v2691 = vunpack.c.l.s4 1983009808
        %v2692 = vunpack.c.0.s8 %v2691
        %v2693 = vlaneseq
        %v2694 = vshrl.u32 %v2693, 7
        %v2695 = vsub.s32 %v2692, %v2694
        %v2696 = vrot.slane %v2682, %v2695
        %v2697 = vcombine.low %v2561, %v2565
        %v2698 = vcombine.high %v2561, %v2565
        %v2700 = vunpack.c.l.s4 1983009808
        %v2701 = vunpack.c.0.s8 %v2700
        %v2702 = vlaneseq
        %v2703 = vshrl.u32 %v2702, 7
        %v2704 = vsub.s32 %v2701, %v2703
        %v2705 = vrot.slane %v2697, %v2704
        %v2707 = vunpack.c.l.s4 1983009808
        %v2708 = vunpack.c.0.s8 %v2707
        %v2709 = vlaneseq
        %v2710 = vshrl.u32 %v2709, 7
        %v2711 = vsub.s32 %v2708, %v2710
        %v2712 = vrot.slane %v2698, %v2711
        %v2713 = vcombine.low %v2572, %v2576
        %v2714 = vcombine.high %v2572, %v2576
        %v2716 = vunpack.c.l.s4 1983009808
        %v2717 = vunpack.c.0.s8 %v2716
        %v2718 = vlaneseq
        %v2719 = vshrl.u32 %v2718, 7
        %v2720 = vsub.s32 %v2717, %v2719
        %v2721 = vrot.slane %v2713, %v2720
        %v2723 = vunpack.c.l.s4 1983009808
        %v2724 = vunpack.c.0.s8 %v2723
        %v2725 = vlaneseq
        %v2726 = vshrl.u32 %v2725, 7
        %v2727 = vsub.s32 %v2724, %v2726
        %v2728 = vrot.slane %v2714, %v2727
        %v2729 = vcombine.low %v2574, %v2578
        %v2730 = vcombine.high %v2574, %v2578
        %v2732 = vunpack.c.l.s4 1983009808
        %v2733 = vunpack.c.0.s8 %v2732
        %v2734 = vlaneseq
        %v2735 = vshrl.u32 %v2734, 7
        %v2736 = vsub.s32 %v2733, %v2735
        %v2737 = vrot.slane %v2729, %v2736
        %v2739 = vunpack.c.l.s4 1983009808
        %v2740 = vunpack.c.0.s8 %v2739
        %v2741 = vlaneseq
        %v2742 = vshrl.u32 %v2741, 7
        %v2743 = vsub.s32 %v2740, %v2742
        %v2744 = vrot.slane %v2730, %v2743
        %v2745 = vcombine.low %v2689, %v2705
        %v2746 = vcombine.high %v2689, %v2705
        %v2748 = vunpack.c.l.s4 1934713408
        %v2749 = vunpack.c.0.s8 %v2748
        %v2750 = vlaneseq
        %v2751 = vshrl.u32 %v2750, 7
        %v2752 = vsub.s32 %v2749, %v2751
        %v2753 = vrot.slane %v2745, %v2752
        %v2755 = vunpack.c.l.s4 1934713408
        %v2756 = vunpack.c.0.s8 %v2755
        %v2757 = vlaneseq
        %v2758 = vshrl.u32 %v2757, 7
        %v2759 = vsub.s32 %v2756, %v2758
        %v2760 = vrot.slane %v2746, %v2759
        %v2761 = vcombine.low %v2696, %v2712
        %v2762 = vcombine.high %v2696, %v2712
        %v2764 = vunpack.c.l.s4 1934713408
        %v2765 = vunpack.c.0.s8 %v2764
        %v2766 = vlaneseq
        %v2767 = vshrl.u32 %v2766, 7
        %v2768 = vsub.s32 %v2765, %v2767
        %v2769 = vrot.slane %v2761, %v2768
        %v2771 = vunpack.c.l.s4 1934713408
        %v2772 = vunpack.c.0.s8 %v2771
        %v2773 = vlaneseq
        %v2774 = vshrl.u32 %v2773, 7
        %v2775 = vsub.s32 %v2772, %v2774
        %v2776 = vrot.slane %v2762, %v2775
        %v2777 = vcombine.low %v2721, %v2737
        %v2778 = vcombine.high %v2721, %v2737
        %v2780 = vunpack.c.l.s4 1934713408
        %v2781 = vunpack.c.0.s8 %v2780
        %v2782 = vlaneseq
        %v2783 = vshrl.u32 %v2782, 7
        %v2784 = vsub.s32 %v2781, %v2783
        %v2785 = vrot.slane %v2777, %v2784
        %v2787 = vunpack.c.l.s4 1934713408
        %v2788 = vunpack.c.0.s8 %v2787
        %v2789 = vlaneseq
        %v2790 = vshrl.u32 %v2789, 7
        %v2791 = vsub.s32 %v2788, %v2790
        %v2792 = vrot.slane %v2778, %v2791
        %v2793 = vcombine.low %v2728, %v2744
        %v2794 = vcombine.high %v2728, %v2744
        %v2796 = vunpack.c.l.s4 1934713408
        %v2797 = vunpack.c.0.s8 %v2796
        %v2798 = vlaneseq
        %v2799 = vshrl.u32 %v2798, 7
        %v2800 = vsub.s32 %v2797, %v2799
        %v2801 = vrot.slane %v2793, %v2800
        %v2803 = vunpack.c.l.s4 1934713408
        %v2804 = vunpack.c.0.s8 %v2803
        %v2805 = vlaneseq
        %v2806 = vshrl.u32 %v2805, 7
        %v2807 = vsub.s32 %v2804, %v2806
        %v2808 = vrot.slane %v2794, %v2807
        %v2809 = vcombine.low %v2753, %v2785
        %v2810 = vcombine.high %v2753, %v2785
        %v2811 = vcombine.low %v2760, %v2792
        %v2812 = vcombine.high %v2760, %v2792
        %v2813 = vcombine.low %v2769, %v2801
        %v2814 = vcombine.high %v2769, %v2801
        %v2815 = vcombine.low %v2776, %v2808
        %v2816 = vcombine.high %v2776, %v2808
        %v2817 = vcombine.low %v2584, %v2588
        %v2818 = vcombine.high %v2584, %v2588
        %v2820 = vunpack.c.l.s4 1983009808
        %v2821 = vunpack.c.0.s8 %v2820
        %v2822 = vlaneseq
        %v2823 = vshrl.u32 %v2822, 7
        %v2824 = vsub.s32 %v2821, %v2823
        %v2825 = vrot.slane %v2817, %v2824
        %v2827 = vunpack.c.l.s4 1983009808
        %v2828 = vunpack.c.0.s8 %v2827
        %v2829 = vlaneseq
        %v2830 = vshrl.u32 %v2829, 7
        %v2831 = vsub.s32 %v2828, %v2830
        %v2832 = vrot.slane %v2818, %v2831
        %v2833 = vcombine.low %v2586, %v2590
        %v2834 = vcombine.high %v2586, %v2590
        %v2836 = vunpack.c.l.s4 1983009808
        %v2837 = vunpack.c.0.s8 %v2836
        %v2838 = vlaneseq
        %v2839 = vshrl.u32 %v2838, 7
        %v2840 = vsub.s32 %v2837, %v2839
        %v2841 = vrot.slane %v2833, %v2840
        %v2843 = vunpack.c.l.s4 1983009808
        %v2844 = vunpack.c.0.s8 %v2843
        %v2845 = vlaneseq
        %v2846 = vshrl.u32 %v2845, 7
        %v2847 = vsub.s32 %v2844, %v2846
        %v2848 = vrot.slane %v2834, %v2847
        %v2849 = vcombine.low %v2602, %v2608
        %v2850 = vcombine.high %v2602, %v2608
        %v2852 = vunpack.c.l.s4 1983009808
        %v2853 = vunpack.c.0.s8 %v2852
        %v2854 = vlaneseq
        %v2855 = vshrl.u32 %v2854, 7
        %v2856 = vsub.s32 %v2853, %v2855
        %v2857 = vrot.slane %v2849, %v2856
        %v2859 = vunpack.c.l.s4 1983009808
        %v2860 = vunpack.c.0.s8 %v2859
        %v2861 = vlaneseq
        %v2862 = vshrl.u32 %v2861, 7
        %v2863 = vsub.s32 %v2860, %v2862
        %v2864 = vrot.slane %v2850, %v2863
        %v2865 = vcombine.low %v2605, %v2611
        %v2866 = vcombine.high %v2605, %v2611
        %v2868 = vunpack.c.l.s4 1983009808
        %v2869 = vunpack.c.0.s8 %v2868
        %v2870 = vlaneseq
        %v2871 = vshrl.u32 %v2870, 7
        %v2872 = vsub.s32 %v2869, %v2871
        %v2873 = vrot.slane %v2865, %v2872
        %v2875 = vunpack.c.l.s4 1983009808
        %v2876 = vunpack.c.0.s8 %v2875
        %v2877 = vlaneseq
        %v2878 = vshrl.u32 %v2877, 7
        %v2879 = vsub.s32 %v2876, %v2878
        %v2880 = vrot.slane %v2866, %v2879
        %v2881 = vcombine.low %v2825, %v2841
        %v2882 = vcombine.high %v2825, %v2841
        %v2884 = vunpack.c.l.s4 1934713408
        %v2885 = vunpack.c.0.s8 %v2884
        %v2886 = vlaneseq
        %v2887 = vshrl.u32 %v2886, 7
        %v2888 = vsub.s32 %v2885, %v2887
        %v2889 = vrot.slane %v2881, %v2888
        %v2891 = vunpack.c.l.s4 1934713408
        %v2892 = vunpack.c.0.s8 %v2891
        %v2893 = vlaneseq
        %v2894 = vshrl.u32 %v2893, 7
        %v2895 = vsub.s32 %v2892, %v2894
        %v2896 = vrot.slane %v2882, %v2895
        %v2897 = vcombine.low %v2832, %v2848
        %v2898 = vcombine.high %v2832, %v2848
        %v2900 = vunpack.c.l.s4 1934713408
        %v2901 = vunpack.c.0.s8 %v2900
        %v2902 = vlaneseq
        %v2903 = vshrl.u32 %v2902, 7
        %v2904 = vsub.s32 %v2901, %v2903
        %v2905 = vrot.slane %v2897, %v2904
        %v2907 = vunpack.c.l.s4 1934713408
        %v2908 = vunpack.c.0.s8 %v2907
        %v2909 = vlaneseq
        %v2910 = vshrl.u32 %v2909, 7
        %v2911 = vsub.s32 %v2908, %v2910
        %v2912 = vrot.slane %v2898, %v2911
        %v2913 = vcombine.low %v2857, %v2873
        %v2914 = vcombine.high %v2857, %v2873
        %v2916 = vunpack.c.l.s4 1934713408
        %v2917 = vunpack.c.0.s8 %v2916
        %v2918 = vlaneseq
        %v2919 = vshrl.u32 %v2918, 7
        %v2920 = vsub.s32 %v2917, %v2919
        %v2921 = vrot.slane %v2913, %v2920
        %v2923 = vunpack.c.l.s4 1934713408
        %v2924 = vunpack.c.0.s8 %v2923
        %v2925 = vlaneseq
        %v2926 = vshrl.u32 %v2925, 7
        %v2927 = vsub.s32 %v2924, %v2926
        %v2928 = vrot.slane %v2914, %v2927
        %v2929 = vcombine.low %v2864, %v2880
        %v2930 = vcombine.high %v2864, %v2880
        %v2932 = vunpack.c.l.s4 1934713408
        %v2933 = vunpack.c.0.s8 %v2932
        %v2934 = vlaneseq
        %v2935 = vshrl.u32 %v2934, 7
        %v2936 = vsub.s32 %v2933, %v2935
        %v2937 = vrot.slane %v2929, %v2936
        %v2939 = vunpack.c.l.s4 1934713408
        %v2940 = vunpack.c.0.s8 %v2939
        %v2941 = vlaneseq
        %v2942 = vshrl.u32 %v2941, 7
        %v2943 = vsub.s32 %v2940, %v2942
        %v2944 = vrot.slane %v2930, %v2943
        %v2945 = vcombine.low %v2889, %v2921
        %v2946 = vcombine.high %v2889, %v2921
        %v2947 = vcombine.low %v2896, %v2928
        %v2948 = vcombine.high %v2896, %v2928
        %v2949 = vcombine.low %v2905, %v2937
        %v2950 = vcombine.high %v2905, %v2937
        %v2951 = vcombine.low %v2912, %v2944
        %v2952 = vcombine.high %v2912, %v2944
        %v2953 = vcombine.low %v2617, %v2621
        %v2954 = vcombine.high %v2617, %v2621
        %v2956 = vunpack.c.l.s4 1983009808
        %v2957 = vunpack.c.0.s8 %v2956
        %v2958 = vlaneseq
        %v2959 = vshrl.u32 %v2958, 7
        %v2960 = vsub.s32 %v2957, %v2959
        %v2961 = vrot.slane %v2953, %v2960
        %v2963 = vunpack.c.l.s4 1983009808
        %v2964 = vunpack.c.0.s8 %v2963
        %v2965 = vlaneseq
        %v2966 = vshrl.u32 %v2965, 7
        %v2967 = vsub.s32 %v2964, %v2966
        %v2968 = vrot.slane %v2954, %v2967
        %v2969 = vcombine.low %v2619, %v2623
        %v2970 = vcombine.high %v2619, %v2623
        %v2972 = vunpack.c.l.s4 1983009808
        %v2973 = vunpack.c.0.s8 %v2972
        %v2974 = vlaneseq
        %v2975 = vshrl.u32 %v2974, 7
        %v2976 = vsub.s32 %v2973, %v2975
        %v2977 = vrot.slane %v2969, %v2976
        %v2979 = vunpack.c.l.s4 1983009808
        %v2980 = vunpack.c.0.s8 %v2979
        %v2981 = vlaneseq
        %v2982 = vshrl.u32 %v2981, 7
        %v2983 = vsub.s32 %v2980, %v2982
        %v2984 = vrot.slane %v2970, %v2983
        %v2985 = vcombine.low %v2629, %v2633
        %v2986 = vcombine.high %v2629, %v2633
        %v2988 = vunpack.c.l.s4 1983009808
        %v2989 = vunpack.c.0.s8 %v2988
        %v2990 = vlaneseq
        %v2991 = vshrl.u32 %v2990, 7
        %v2992 = vsub.s32 %v2989, %v2991
        %v2993 = vrot.slane %v2985, %v2992
        %v2995 = vunpack.c.l.s4 1983009808
        %v2996 = vunpack.c.0.s8 %v2995
        %v2997 = vlaneseq
        %v2998 = vshrl.u32 %v2997, 7
        %v2999 = vsub.s32 %v2996, %v2998
        %v3000 = vrot.slane %v2986, %v2999
        %v3001 = vcombine.low %v2631, %v2635
        %v3002 = vcombine.high %v2631, %v2635
        %v3004 = vunpack.c.l.s4 1983009808
        %v3005 = vunpack.c.0.s8 %v3004
        %v3006 = vlaneseq
        %v3007 = vshrl.u32 %v3006, 7
        %v3008 = vsub.s32 %v3005, %v3007
        %v3009 = vrot.slane %v3001, %v3008
        %v3011 = vunpack.c.l.s4 1983009808
        %v3012 = vunpack.c.0.s8 %v3011
        %v3013 = vlaneseq
        %v3014 = vshrl.u32 %v3013, 7
        %v3015 = vsub.s32 %v3012, %v3014
        %v3016 = vrot.slane %v3002, %v3015
        %v3017 = vcombine.low %v2961, %v2977
        %v3018 = vcombine.high %v2961, %v2977
        %v3020 = vunpack.c.l.s4 1934713408
        %v3021 = vunpack.c.0.s8 %v3020
        %v3022 = vlaneseq
        %v3023 = vshrl.u32 %v3022, 7
        %v3024 = vsub.s32 %v3021, %v3023
        %v3025 = vrot.slane %v3017, %v3024
        %v3027 = vunpack.c.l.s4 1934713408
        %v3028 = vunpack.c.0.s8 %v3027
        %v3029 = vlaneseq
        %v3030 = vshrl.u32 %v3029, 7
        %v3031 = vsub.s32 %v3028, %v3030
        %v3032 = vrot.slane %v3018, %v3031
        %v3033 = vcombine.low %v2968, %v2984
        %v3034 = vcombine.high %v2968, %v2984
        %v3036 = vunpack.c.l.s4 1934713408
        %v3037 = vunpack.c.0.s8 %v3036
        %v3038 = vlaneseq
        %v3039 = vshrl.u32 %v3038, 7
        %v3040 = vsub.s32 %v3037, %v3039
        %v3041 = vrot.slane %v3033, %v3040
        %v3043 = vunpack.c.l.s4 1934713408
        %v3044 = vunpack.c.0.s8 %v3043
        %v3045 = vlaneseq
        %v3046 = vshrl.u32 %v3045, 7
        %v3047 = vsub.s32 %v3044, %v3046
        %v3048 = vrot.slane %v3034, %v3047
        %v3049 = vcombine.low %v2993, %v3009
        %v3050 = vcombine.high %v2993, %v3009
        %v3052 = vunpack.c.l.s4 1934713408
        %v3053 = vunpack.c.0.s8 %v3052
        %v3054 = vlaneseq
        %v3055 = vshrl.u32 %v3054, 7
        %v3056 = vsub.s32 %v3053, %v3055
        %v3057 = vrot.slane %v3049, %v3056
        %v3059 = vunpack.c.l.s4 1934713408
        %v3060 = vunpack.c.0.s8 %v3059
        %v3061 = vlaneseq
        %v3062 = vshrl.u32 %v3061, 7
        %v3063 = vsub.s32 %v3060, %v3062
        %v3064 = vrot.slane %v3050, %v3063
        %v3065 = vcombine.low %v3000, %v3016
        %v3066 = vcombine.high %v3000, %v3016
        %v3068 = vunpack.c.l.s4 1934713408
        %v3069 = vunpack.c.0.s8 %v3068
        %v3070 = vlaneseq
        %v3071 = vshrl.u32 %v3070, 7
        %v3072 = vsub.s32 %v3069, %v3071
        %v3073 = vrot.slane %v3065, %v3072
        %v3075 = vunpack.c.l.s4 1934713408
        %v3076 = vunpack.c.0.s8 %v3075
        %v3077 = vlaneseq
        %v3078 = vshrl.u32 %v3077, 7
        %v3079 = vsub.s32 %v3076, %v3078
        %v3080 = vrot.slane %v3066, %v3079
        %v3081 = vcombine.low %v3025, %v3057
        %v3082 = vcombine.high %v3025, %v3057
        %v3083 = vcombine.low %v3032, %v3064
        %v3084 = vcombine.high %v3032, %v3064
        %v3085 = vcombine.low %v3041, %v3073
        %v3086 = vcombine.high %v3041, %v3073
        %v3087 = vcombine.low %v3048, %v3080
        %v3088 = vcombine.high %v3048, %v3080
        %v3089 = vcombine.low %v2643, %v2649
        %v3090 = vcombine.high %v2643, %v2649
        %v3092 = vunpack.c.l.s4 1983009808
        %v3093 = vunpack.c.0.s8 %v3092
        %v3094 = vlaneseq
        %v3095 = vshrl.u32 %v3094, 7
        %v3096 = vsub.s32 %v3093, %v3095
        %v3097 = vrot.slane %v3089, %v3096
        %v3099 = vunpack.c.l.s4 1983009808
        %v3100 = vunpack.c.0.s8 %v3099
        %v3101 = vlaneseq
        %v3102 = vshrl.u32 %v3101, 7
        %v3103 = vsub.s32 %v3100, %v3102
        %v3104 = vrot.slane %v3090, %v3103
        %v3105 = vcombine.low %v2646, %v2652
        %v3106 = vcombine.high %v2646, %v2652
        %v3108 = vunpack.c.l.s4 1983009808
        %v3109 = vunpack.c.0.s8 %v3108
        %v3110 = vlaneseq
        %v3111 = vshrl.u32 %v3110, 7
        %v3112 = vsub.s32 %v3109, %v3111
        %v3113 = vrot.slane %v3105, %v3112
        %v3115 = vunpack.c.l.s4 1983009808
        %v3116 = vunpack.c.0.s8 %v3115
        %v3117 = vlaneseq
        %v3118 = vshrl.u32 %v3117, 7
        %v3119 = vsub.s32 %v3116, %v3118
        %v3120 = vrot.slane %v3106, %v3119
        %v3121 = vcombine.low %v2658, %v2662
        %v3122 = vcombine.high %v2658, %v2662
        %v3124 = vunpack.c.l.s4 1983009808
        %v3125 = vunpack.c.0.s8 %v3124
        %v3126 = vlaneseq
        %v3127 = vshrl.u32 %v3126, 7
        %v3128 = vsub.s32 %v3125, %v3127
        %v3129 = vrot.slane %v3121, %v3128
        %v3131 = vunpack.c.l.s4 1983009808
        %v3132 = vunpack.c.0.s8 %v3131
        %v3133 = vlaneseq
        %v3134 = vshrl.u32 %v3133, 7
        %v3135 = vsub.s32 %v3132, %v3134
        %v3136 = vrot.slane %v3122, %v3135
        %v3137 = vcombine.low %v2660, %v2664
        %v3138 = vcombine.high %v2660, %v2664
        %v3140 = vunpack.c.l.s4 1983009808
        %v3141 = vunpack.c.0.s8 %v3140
        %v3142 = vlaneseq
        %v3143 = vshrl.u32 %v3142, 7
        %v3144 = vsub.s32 %v3141, %v3143
        %v3145 = vrot.slane %v3137, %v3144
        %v3147 = vunpack.c.l.s4 1983009808
        %v3148 = vunpack.c.0.s8 %v3147
        %v3149 = vlaneseq
        %v3150 = vshrl.u32 %v3149, 7
        %v3151 = vsub.s32 %v3148, %v3150
        %v3152 = vrot.slane %v3138, %v3151
        %v3153 = vcombine.low %v3097, %v3113
        %v3154 = vcombine.high %v3097, %v3113
        %v3156 = vunpack.c.l.s4 1934713408
        %v3157 = vunpack.c.0.s8 %v3156
        %v3158 = vlaneseq
        %v3159 = vshrl.u32 %v3158, 7
        %v3160 = vsub.s32 %v3157, %v3159
        %v3161 = vrot.slane %v3153, %v3160
        %v3163 = vunpack.c.l.s4 1934713408
        %v3164 = vunpack.c.0.s8 %v3163
        %v3165 = vlaneseq
        %v3166 = vshrl.u32 %v3165, 7
        %v3167 = vsub.s32 %v3164, %v3166
        %v3168 = vrot.slane %v3154, %v3167
        %v3169 = vcombine.low %v3104, %v3120
        %v3170 = vcombine.high %v3104, %v3120
        %v3172 = vunpack.c.l.s4 1934713408
        %v3173 = vunpack.c.0.s8 %v3172
        %v3174 = vlaneseq
        %v3175 = vshrl.u32 %v3174, 7
        %v3176 = vsub.s32 %v3173, %v3175
        %v3177 = vrot.slane %v3169, %v3176
        %v3179 = vunpack.c.l.s4 1934713408
        %v3180 = vunpack.c.0.s8 %v3179
        %v3181 = vlaneseq
        %v3182 = vshrl.u32 %v3181, 7
        %v3183 = vsub.s32 %v3180, %v3182
        %v3184 = vrot.slane %v3170, %v3183
        %v3185 = vcombine.low %v3129, %v3145
        %v3186 = vcombine.high %v3129, %v3145
        %v3188 = vunpack.c.l.s4 1934713408
        %v3189 = vunpack.c.0.s8 %v3188
        %v3190 = vlaneseq
        %v3191 = vshrl.u32 %v3190, 7
        %v3192 = vsub.s32 %v3189, %v3191
        %v3193 = vrot.slane %v3185, %v3192
        %v3195 = vunpack.c.l.s4 1934713408
        %v3196 = vunpack.c.0.s8 %v3195
        %v3197 = vlaneseq
        %v3198 = vshrl.u32 %v3197, 7
        %v3199 = vsub.s32 %v3196, %v3198
        %v3200 = vrot.slane %v3186, %v3199
        %v3201 = vcombine.low %v3136, %v3152
        %v3202 = vcombine.high %v3136, %v3152
        %v3204 = vunpack.c.l.s4 1934713408
        %v3205 = vunpack.c.0.s8 %v3204
        %v3206 = vlaneseq
        %v3207 = vshrl.u32 %v3206, 7
        %v3208 = vsub.s32 %v3205, %v3207
        %v3209 = vrot.slane %v3201, %v3208
        %v3211 = vunpack.c.l.s4 1934713408
        %v3212 = vunpack.c.0.s8 %v3211
        %v3213 = vlaneseq
        %v3214 = vshrl.u32 %v3213, 7
        %v3215 = vsub.s32 %v3212, %v3214
        %v3216 = vrot.slane %v3202, %v3215
        %v3217 = vcombine.low %v3161, %v3193
        %v3218 = vcombine.high %v3161, %v3193
        %v3219 = vcombine.low %v3168, %v3200
        %v3220 = vcombine.high %v3168, %v3200
        %v3221 = vcombine.low %v3177, %v3209
        %v3222 = vcombine.high %v3177, %v3209
        %v3223 = vcombine.low %v3184, %v3216
        %v3224 = vcombine.high %v3184, %v3216
        %v3225 = vcombine.low %v2670, %v2674
        %v3226 = vcombine.high %v2670, %v2674
        %v3228 = vunpack.c.l.s4 1983009808
        %v3229 = vunpack.c.0.s8 %v3228
        %v3230 = vlaneseq
        %v3231 = vshrl.u32 %v3230, 7
        %v3232 = vsub.s32 %v3229, %v3231
        %v3233 = vrot.slane %v3225, %v3232
        %v3235 = vunpack.c.l.s4 1983009808
        %v3236 = vunpack.c.0.s8 %v3235
        %v3237 = vlaneseq
        %v3238 = vshrl.u32 %v3237, 7
        %v3239 = vsub.s32 %v3236, %v3238
        %v3240 = vrot.slane %v3226, %v3239
        %v3241 = vcombine.low %v2672, %v2676
        %v3242 = vcombine.high %v2672, %v2676
        %v3244 = vunpack.c.l.s4 1983009808
        %v3245 = vunpack.c.0.s8 %v3244
        %v3246 = vlaneseq
        %v3247 = vshrl.u32 %v3246, 7
        %v3248 = vsub.s32 %v3245, %v3247
        %v3249 = vrot.slane %v3241, %v3248
        %v3251 = vunpack.c.l.s4 1983009808
        %v3252 = vunpack.c.0.s8 %v3251
        %v3253 = vlaneseq
        %v3254 = vshrl.u32 %v3253, 7
        %v3255 = vsub.s32 %v3252, %v3254
        %v3256 = vrot.slane %v3242, %v3255
        %v3257 = vcombine.low %v3233, %v3249
        %v3258 = vcombine.high %v3233, %v3249
        %v3260 = vunpack.c.l.s4 1934713408
        %v3261 = vunpack.c.0.s8 %v3260
        %v3262 = vlaneseq
        %v3263 = vshrl.u32 %v3262, 7
        %v3264 = vsub.s32 %v3261, %v3263
        %v3265 = vrot.slane %v3257, %v3264
        %v3267 = vunpack.c.l.s4 1934713408
        %v3268 = vunpack.c.0.s8 %v3267
        %v3269 = vlaneseq
        %v3270 = vshrl.u32 %v3269, 7
        %v3271 = vsub.s32 %v3268, %v3270
        %v3272 = vrot.slane %v3258, %v3271
        %v3273 = vcombine.low %v3240, %v3256
        %v3274 = vcombine.high %v3240, %v3256
        %v3276 = vunpack.c.l.s4 1934713408
        %v3277 = vunpack.c.0.s8 %v3276
        %v3278 = vlaneseq
        %v3279 = vshrl.u32 %v3278, 7
        %v3280 = vsub.s32 %v3277, %v3279
        %v3281 = vrot.slane %v3273, %v3280
        %v3283 = vunpack.c.l.s4 1934713408
        %v3284 = vunpack.c.0.s8 %v3283
        %v3285 = vlaneseq
        %v3286 = vshrl.u32 %v3285, 7
        %v3287 = vsub.s32 %v3284, %v3286
        %v3288 = vrot.slane %v3274, %v3287
        %v3289 = vcombine.high %v3265, 0.0
        %v3290 = vcombine.high %v3272, 0.0
        %v3291 = vcombine.high %v3281, 0.0
        %v3292 = vcombine.high %v3288, 0.0
        %3298 = vrot.lane.b32.xlu0 %v2810, 8
        %v3299 = vpop.permute.xlu0 %3298
        %3300 = vrot.lane.b32.xlu0 %v2946, 8
        %v3301 = vpop.permute.xlu0 %3300
        %3302 = vrot.lane.b32.xlu0 %v3082, 8
        %v3303 = vpop.permute.xlu0 %3302
        %3304 = vrot.lane.b32.xlu0 %v3218, 8
        %v3305 = vpop.permute.xlu0 %3304
        %3306 = vrot.lane.b32.xlu0 %v3289, 8
        %v3307 = vpop.permute.xlu0 %3306
        %3318 = vrot.lane.b32.xlu0 %v2811, 16
        %v3319 = vpop.permute.xlu0 %3318
        %3320 = vrot.lane.b32.xlu0 %v2947, 16
        %v3321 = vpop.permute.xlu0 %3320
        %3322 = vrot.lane.b32.xlu0 %v3083, 16
        %v3323 = vpop.permute.xlu0 %3322
        %3324 = vrot.lane.b32.xlu0 %v3219, 16
        %v3325 = vpop.permute.xlu0 %3324
        %3326 = vrot.lane.b32.xlu0 %v3272, 16
        %v3327 = vpop.permute.xlu0 %3326
        %3338 = vrot.lane.b32.xlu0 %v2812, 24
        %v3339 = vpop.permute.xlu0 %3338
        %3340 = vrot.lane.b32.xlu0 %v2948, 24
        %v3341 = vpop.permute.xlu0 %3340
        %3342 = vrot.lane.b32.xlu0 %v3084, 24
        %v3343 = vpop.permute.xlu0 %3342
        %3344 = vrot.lane.b32.xlu0 %v3220, 24
        %v3345 = vpop.permute.xlu0 %3344
        %3346 = vrot.lane.b32.xlu0 %v3290, 24
        %v3347 = vpop.permute.xlu0 %3346
        %3358 = vrot.lane.b32.xlu0 %v2813, 32
        %v3359 = vpop.permute.xlu0 %3358
        %3360 = vrot.lane.b32.xlu0 %v2949, 32
        %v3361 = vpop.permute.xlu0 %3360
        %3362 = vrot.lane.b32.xlu0 %v3085, 32
        %v3363 = vpop.permute.xlu0 %3362
        %3364 = vrot.lane.b32.xlu0 %v3221, 32
        %v3365 = vpop.permute.xlu0 %3364
        %3366 = vrot.lane.b32.xlu0 %v3281, 32
        %v3367 = vpop.permute.xlu0 %3366
        %3378 = vrot.lane.b32.xlu0 %v2814, 40
        %v3379 = vpop.permute.xlu0 %3378
        %3380 = vrot.lane.b32.xlu0 %v2950, 40
        %v3381 = vpop.permute.xlu0 %3380
        %3382 = vrot.lane.b32.xlu0 %v3086, 40
        %v3383 = vpop.permute.xlu0 %3382
        %3384 = vrot.lane.b32.xlu0 %v3222, 40
        %v3385 = vpop.permute.xlu0 %3384
        %3386 = vrot.lane.b32.xlu0 %v3291, 40
        %v3387 = vpop.permute.xlu0 %3386
        %3398 = vrot.lane.b32.xlu0 %v2815, 48
        %v3399 = vpop.permute.xlu0 %3398
        %3400 = vrot.lane.b32.xlu0 %v2951, 48
        %v3401 = vpop.permute.xlu0 %3400
        %3402 = vrot.lane.b32.xlu0 %v3087, 48
        %v3403 = vpop.permute.xlu0 %3402
        %3404 = vrot.lane.b32.xlu0 %v3223, 48
        %v3405 = vpop.permute.xlu0 %3404
        %3406 = vrot.lane.b32.xlu0 %v3288, 48
        %v3407 = vpop.permute.xlu0 %3406
        %3418 = vrot.lane.b32.xlu0 %v2816, 56
        %v3419 = vpop.permute.xlu0 %3418
        %3420 = vrot.lane.b32.xlu0 %v2952, 56
        %v3421 = vpop.permute.xlu0 %3420
        %3422 = vrot.lane.b32.xlu0 %v3088, 56
        %v3423 = vpop.permute.xlu0 %3422
        %3424 = vrot.lane.b32.xlu0 %v3224, 56
        %v3425 = vpop.permute.xlu0 %3424
        %3426 = vrot.lane.b32.xlu0 %v3292, 56
        %v3427 = vpop.permute.xlu0 %3426
        %vm3433 = vcmask 64512
        %v3434 = vsel %vm3433, %v2809, %v3299
        %v3435 = vsel %vm3433, %v2945, %v3301
        %v3436 = vsel %vm3433, %v3081, %v3303
        %v3437 = vsel %vm3433, %v3217, %v3305
        %v3438 = vsel %vm3433, %v3265, %v3307
        %vm3439 = vcmask 130048
        %v3440 = vsel %vm3439, %v3434, %v3319
        %v3441 = vsel %vm3439, %v3435, %v3321
        %v3442 = vsel %vm3439, %v3436, %v3323
        %v3443 = vsel %vm3439, %v3437, %v3325
        %v3444 = vsel %vm3439, %v3438, %v3327
        %vm3445 = vcmask 195584
        %v3446 = vsel %vm3445, %v3440, %v3339
        %v3447 = vsel %vm3445, %v3441, %v3341
        %v3448 = vsel %vm3445, %v3442, %v3343
        %v3449 = vsel %vm3445, %v3443, %v3345
        %v3450 = vsel %vm3445, %v3444, %v3347
        %vm3451 = vcmask 261120
        %v3452 = vsel %vm3451, %v3446, %v3359
        %v3453 = vsel %vm3451, %v3447, %v3361
        %v3454 = vsel %vm3451, %v3448, %v3363
        %v3455 = vsel %vm3451, %v3449, %v3365
        %v3456 = vsel %vm3451, %v3450, %v3367
        %vm3457 = vcmask 326656
        %v3458 = vsel %vm3457, %v3452, %v3379
        %v3459 = vsel %vm3457, %v3453, %v3381
        %v3460 = vsel %vm3457, %v3454, %v3383
        %v3461 = vsel %vm3457, %v3455, %v3385
        %v3462 = vsel %vm3457, %v3456, %v3387
        %vm3463 = vcmask 392192
        %v3464 = vsel %vm3463, %v3458, %v3399
        %v3465 = vsel %vm3463, %v3459, %v3401
        %v3466 = vsel %vm3463, %v3460, %v3403
        %v3467 = vsel %vm3463, %v3461, %v3405
        %v3468 = vsel %vm3463, %v3462, %v3407
        %vm3469 = vcmask 457728
        %v3470 = vsel %vm3469, %v3464, %v3419
        %v3471 = vsel %vm3469, %v3465, %v3421
        %v3472 = vsel %vm3469, %v3466, %v3423
        %v3473 = vsel %vm3469, %v3467, %v3425
        %v3474 = vsel %vm3469, %v3468, %v3427
        %3476 = vset.pattern.permute.xlu0 0
        %3477 = vperm.xlu0 %3476, %v295
        %v3478 = vpop.permute.xlu0 %3477
        %vm3480 = vcmask 293888
        %v3482 = vsel %vm3480, %v293, 0
        %vm3484 = vcmask 1043456
        %v3486 = vsel %vm3484, %v3474, 0
        %3488 = vmatprep.subr.mxu0 0.0
        %3489 = vmatpush1.msra.mxu0 %v3470
        %3490 = vmatprep.subr.mxu0 0.0
        %3491 = vmatpush1.msra.mxu0 %v3471
        %3492 = vmatprep.subr.mxu0 0.0
        %3493 = vmatpush1.msra.mxu0 %v3472
        %3494 = vmatprep.subr.mxu0 0.0
        %3495 = vmatpush1.msra.mxu0 %v3473
        %3496 = vmatprep.subr.mxu0 0.0
        %3497 = vmatpush1.msra.mxu0 %v3486
        %3498 = vmatprep.subr.mxu0 0.0
        %3499 = vmatpush1.msra.mxu0 0.0
        %3500 = vmatprep.subr.mxu0 0.0
        %3501 = vmatpush1.msra.mxu0 0.0
        %3502 = vmatprep.subr.mxu0 0.0
        %3503 = vmatpush1.msra.mxu0 0.0
        %3504 = vmatprep.subr.mxu0 0.0
        %3505 = vmatpush1.msra.mxu0 0.0
        %3506 = vmatprep.subr.mxu0 0.0
        %3507 = vmatpush1.msra.mxu0 0.0
        %3508 = vmatprep.subr.mxu0 0.0
        %3509 = vmatpush1.msra.mxu0 0.0
        %3510 = vmatprep.subr.mxu0 0.0
        %3511 = vmatpush1.msra.mxu0 0.0
        %3512 = vmatprep.subr.mxu0 0.0
        %3513 = vmatpush1.msra.mxu0 0.0
        %3514 = vmatprep.subr.mxu0 0.0
        %3515 = vmatpush1.msra.mxu0 0.0
        %3516 = vmatprep.subr.mxu0 0.0
        %3517 = vmatpush1.msra.mxu0 0.0
        %3518 = vmatprep.subr.mxu0 0.0
        %3519 = vmatpush1.msra.mxu0 0.0
        %3520 = vmatprep.subr.mxu0 0.0
        %3521 = vmatpush1.msra.mxu0 0.0
        %3522 = vmatprep.subr.mxu0 0.0
        %3523 = vmatpush1.msra.mxu0 0.0
        %3524 = vmatprep.subr.mxu0 0.0
        %3525 = vmatpush1.msra.mxu0 0.0
        %3526 = vmatprep.subr.mxu0 0.0
        %3527 = vmatpush1.msra.mxu0 0.0
        %3528 = vmatprep.subr.mxu0 0.0
        %3529 = vmatpush1.msra.mxu0 0.0
        %3530 = vmatprep.subr.mxu0 0.0
        %3531 = vmatpush1.msra.mxu0 0.0
        %3532 = vmatprep.subr.mxu0 0.0
        %3533 = vmatpush1.msra.mxu0 0.0
        %3534 = vmatprep.subr.mxu0 0.0
        %3535 = vmatpush1.msra.mxu0 0.0
        %3536 = vmatprep.subr.mxu0 0.0
        %3537 = vmatpush1.msra.mxu0 0.0
        %3538 = vmatprep.subr.mxu0 0.0
        %3539 = vmatpush1.msra.mxu0 0.0
        %3540 = vmatprep.subr.mxu0 0.0
        %3541 = vmatpush1.msra.mxu0 0.0
        %3542 = vmatprep.subr.mxu0 0.0
        %3543 = vmatpush1.msra.mxu0 0.0
        %3544 = vmatprep.subr.mxu0 0.0
        %3545 = vmatpush1.msra.mxu0 0.0
        %3546 = vmatprep.subr.mxu0 0.0
        %3547 = vmatpush1.msra.mxu0 0.0
        %3548 = vmatprep.subr.mxu0 0.0
        %3549 = vmatpush1.msra.mxu0 0.0
        %3550 = vmatprep.subr.mxu0 0.0
        %3551 = vmatpush1.msra.mxu0 0.0
        %3552 = vmatprep.mubr.f32.mxu0 0.0
        %3553 = vmatmul.mubr.f32.gmra.mrb[0].mxu0 %v3482
        %v3554 = vpop.f32.mrb[0].mxu0
        %v3555 = vadd.f32 %v3478, %v3554
        %v3556 = vpop.f32.mrb[0].mxu0
        %3557 = vdwg.mxu0
        %v3558 = vmax.f32 %v3555, 0.0
        %3560 = vrot.lane.b32.xlu0 %v3558, 120
        %v3561 = vpop.permute.xlu0 %3560
        %3563 = vrot.lane.b32.xlu0 %v3558, 112
        %v3564 = vpop.permute.xlu0 %3563
        %3566 = vrot.lane.b32.xlu0 %v3558, 104
        %v3567 = vpop.permute.xlu0 %3566
        %3569 = vrot.lane.b32.xlu0 %v3558, 96
        %v3570 = vpop.permute.xlu0 %3569
        %3572 = vrot.lane.b32.xlu0 %v3558, 88
        %v3573 = vpop.permute.xlu0 %3572
        %3575 = vrot.lane.b32.xlu0 %v3558, 80
        %v3576 = vpop.permute.xlu0 %3575
        %3578 = vrot.lane.b32.xlu0 %v3558, 72
        %v3579 = vpop.permute.xlu0 %3578
        %v3581 = vcombine.low %v3558, %v3564
        %v3582 = vcombine.high %v3558, %v3564
        %v3584 = vunpack.c.l.s4 1983009808
        %v3585 = vunpack.c.0.s8 %v3584
        %v3586 = vlaneseq
        %v3587 = vshrl.u32 %v3586, 7
        %v3588 = vsub.s32 %v3585, %v3587
        %v3589 = vrot.slane %v3581, %v3588
        %v3591 = vunpack.c.l.s4 1983009808
        %v3592 = vunpack.c.0.s8 %v3591
        %v3593 = vlaneseq
        %v3594 = vshrl.u32 %v3593, 7
        %v3595 = vsub.s32 %v3592, %v3594
        %v3596 = vrot.slane %v3582, %v3595
        %v3597 = vcombine.low %v3561, %v3567
        %v3598 = vcombine.high %v3561, %v3567
        %v3600 = vunpack.c.l.s4 1983009808
        %v3601 = vunpack.c.0.s8 %v3600
        %v3602 = vlaneseq
        %v3603 = vshrl.u32 %v3602, 7
        %v3604 = vsub.s32 %v3601, %v3603
        %v3605 = vrot.slane %v3597, %v3604
        %v3607 = vunpack.c.l.s4 1983009808
        %v3608 = vunpack.c.0.s8 %v3607
        %v3609 = vlaneseq
        %v3610 = vshrl.u32 %v3609, 7
        %v3611 = vsub.s32 %v3608, %v3610
        %v3612 = vrot.slane %v3598, %v3611
        %v3613 = vcombine.low %v3570, %v3576
        %v3614 = vcombine.high %v3570, %v3576
        %v3616 = vunpack.c.l.s4 1983009808
        %v3617 = vunpack.c.0.s8 %v3616
        %v3618 = vlaneseq
        %v3619 = vshrl.u32 %v3618, 7
        %v3620 = vsub.s32 %v3617, %v3619
        %v3621 = vrot.slane %v3613, %v3620
        %v3623 = vunpack.c.l.s4 1983009808
        %v3624 = vunpack.c.0.s8 %v3623
        %v3625 = vlaneseq
        %v3626 = vshrl.u32 %v3625, 7
        %v3627 = vsub.s32 %v3624, %v3626
        %v3628 = vrot.slane %v3614, %v3627
        %v3629 = vcombine.low %v3573, %v3579
        %v3630 = vcombine.high %v3573, %v3579
        %v3632 = vunpack.c.l.s4 1983009808
        %v3633 = vunpack.c.0.s8 %v3632
        %v3634 = vlaneseq
        %v3635 = vshrl.u32 %v3634, 7
        %v3636 = vsub.s32 %v3633, %v3635
        %v3637 = vrot.slane %v3629, %v3636
        %v3639 = vunpack.c.l.s4 1983009808
        %v3640 = vunpack.c.0.s8 %v3639
        %v3641 = vlaneseq
        %v3642 = vshrl.u32 %v3641, 7
        %v3643 = vsub.s32 %v3640, %v3642
        %v3644 = vrot.slane %v3630, %v3643
        %v3645 = vcombine.low %v3589, %v3605
        %v3646 = vcombine.high %v3589, %v3605
        %v3648 = vunpack.c.l.s4 1934713408
        %v3649 = vunpack.c.0.s8 %v3648
        %v3650 = vlaneseq
        %v3651 = vshrl.u32 %v3650, 7
        %v3652 = vsub.s32 %v3649, %v3651
        %v3653 = vrot.slane %v3645, %v3652
        %v3655 = vunpack.c.l.s4 1934713408
        %v3656 = vunpack.c.0.s8 %v3655
        %v3657 = vlaneseq
        %v3658 = vshrl.u32 %v3657, 7
        %v3659 = vsub.s32 %v3656, %v3658
        %v3660 = vrot.slane %v3646, %v3659
        %v3661 = vcombine.low %v3596, %v3612
        %v3662 = vcombine.high %v3596, %v3612
        %v3664 = vunpack.c.l.s4 1934713408
        %v3665 = vunpack.c.0.s8 %v3664
        %v3666 = vlaneseq
        %v3667 = vshrl.u32 %v3666, 7
        %v3668 = vsub.s32 %v3665, %v3667
        %v3669 = vrot.slane %v3661, %v3668
        %v3671 = vunpack.c.l.s4 1934713408
        %v3672 = vunpack.c.0.s8 %v3671
        %v3673 = vlaneseq
        %v3674 = vshrl.u32 %v3673, 7
        %v3675 = vsub.s32 %v3672, %v3674
        %v3676 = vrot.slane %v3662, %v3675
        %v3677 = vcombine.low %v3621, %v3637
        %v3678 = vcombine.high %v3621, %v3637
        %v3680 = vunpack.c.l.s4 1934713408
        %v3681 = vunpack.c.0.s8 %v3680
        %v3682 = vlaneseq
        %v3683 = vshrl.u32 %v3682, 7
        %v3684 = vsub.s32 %v3681, %v3683
        %v3685 = vrot.slane %v3677, %v3684
        %v3687 = vunpack.c.l.s4 1934713408
        %v3688 = vunpack.c.0.s8 %v3687
        %v3689 = vlaneseq
        %v3690 = vshrl.u32 %v3689, 7
        %v3691 = vsub.s32 %v3688, %v3690
        %v3692 = vrot.slane %v3678, %v3691
        %v3693 = vcombine.low %v3628, %v3644
        %v3694 = vcombine.high %v3628, %v3644
        %v3696 = vunpack.c.l.s4 1934713408
        %v3697 = vunpack.c.0.s8 %v3696
        %v3698 = vlaneseq
        %v3699 = vshrl.u32 %v3698, 7
        %v3700 = vsub.s32 %v3697, %v3699
        %v3701 = vrot.slane %v3693, %v3700
        %v3703 = vunpack.c.l.s4 1934713408
        %v3704 = vunpack.c.0.s8 %v3703
        %v3705 = vlaneseq
        %v3706 = vshrl.u32 %v3705, 7
        %v3707 = vsub.s32 %v3704, %v3706
        %v3708 = vrot.slane %v3694, %v3707
        %v3709 = vcombine.low %v3653, %v3685
        %v3710 = vcombine.high %v3653, %v3685
        %v3711 = vcombine.low %v3660, %v3692
        %v3712 = vcombine.high %v3660, %v3692
        %v3713 = vcombine.low %v3669, %v3701
        %v3714 = vcombine.high %v3669, %v3701
        %v3715 = vcombine.low %v3676, %v3708
        %v3716 = vcombine.high %v3676, %v3708
        %v3725 = vrot.slane %v3709, 7
        %v3726 = vrot.slane %v3710, 7
        %v3727 = vrot.slane %v3711, 7
        %v3728 = vrot.slane %v3712, 7
        %v3729 = vrot.slane %v3713, 7
        %v3730 = vrot.slane %v3714, 7
        %v3731 = vrot.slane %v3715, 7
        %v3732 = vrot.slane %v3716, 7
        %v3741 = vsel %vm2508, 0.0, %v3725
        %v3742 = vsel %vm2508, 0.0, %v3726
        %v3743 = vsel %vm2508, 0.0, %v3727
        %v3744 = vsel %vm2508, 0.0, %v3728
        %v3745 = vsel %vm2508, 0.0, %v3729
        %v3746 = vsel %vm2508, 0.0, %v3730
        %v3747 = vsel %vm2508, 0.0, %v3731
        %v3748 = vsel %vm2508, 0.0, %v3732
        %v3749 = vsel %vm2508, %v3725, 0.0
        %v3750 = vsel %vm2508, %v3726, 0.0
        %v3751 = vsel %vm2508, %v3727, 0.0
        %v3752 = vsel %vm2508, %v3728, 0.0
        %v3753 = vsel %vm2508, %v3729, 0.0
        %v3754 = vsel %vm2508, %v3730, 0.0
        %v3755 = vsel %vm2508, %v3731, 0.0
        %v3756 = vsel %vm2508, %v3732, 0.0
        %3773 = vrot.lane.b32.xlu0 %v3741, 1
        %v3774 = vpop.permute.xlu0 %3773
        %3775 = vrot.lane.b32.xlu0 %v3749, 1
        %v3776 = vpop.permute.xlu0 %3775
        %3777 = vrot.lane.b32.xlu0 %v3742, 1
        %v3778 = vpop.permute.xlu0 %3777
        %3779 = vrot.lane.b32.xlu0 %v3750, 1
        %v3780 = vpop.permute.xlu0 %3779
        %3781 = vrot.lane.b32.xlu0 %v3743, 1
        %v3782 = vpop.permute.xlu0 %3781
        %3783 = vrot.lane.b32.xlu0 %v3751, 1
        %v3784 = vpop.permute.xlu0 %3783
        %3785 = vrot.lane.b32.xlu0 %v3744, 1
        %v3786 = vpop.permute.xlu0 %3785
        %3787 = vrot.lane.b32.xlu0 %v3752, 1
        %v3788 = vpop.permute.xlu0 %3787
        %3789 = vrot.lane.b32.xlu0 %v3745, 1
        %v3790 = vpop.permute.xlu0 %3789
        %3791 = vrot.lane.b32.xlu0 %v3753, 1
        %v3792 = vpop.permute.xlu0 %3791
        %3793 = vrot.lane.b32.xlu0 %v3746, 1
        %v3794 = vpop.permute.xlu0 %3793
        %3795 = vrot.lane.b32.xlu0 %v3754, 1
        %v3796 = vpop.permute.xlu0 %3795
        %3797 = vrot.lane.b32.xlu0 %v3747, 1
        %v3798 = vpop.permute.xlu0 %3797
        %3799 = vrot.lane.b32.xlu0 %v3755, 1
        %v3800 = vpop.permute.xlu0 %3799
        %3801 = vrot.lane.b32.xlu0 %v3748, 1
        %v3802 = vpop.permute.xlu0 %3801
        %3803 = vrot.lane.b32.xlu0 %v3756, 1
        %v3804 = vpop.permute.xlu0 %3803
        %v3821 = vsel %vm2549, 0.0, %v3774
        %v3822 = vsel %vm2549, 0.0, %v3776
        %v3823 = vsel %vm2549, 0.0, %v3778
        %v3824 = vsel %vm2549, 0.0, %v3780
        %v3825 = vsel %vm2549, 0.0, %v3782
        %v3826 = vsel %vm2549, 0.0, %v3784
        %v3827 = vsel %vm2549, 0.0, %v3786
        %v3828 = vsel %vm2549, 0.0, %v3788
        %v3829 = vsel %vm2549, 0.0, %v3790
        %v3830 = vsel %vm2549, 0.0, %v3792
        %v3831 = vsel %vm2549, 0.0, %v3794
        %v3832 = vsel %vm2549, 0.0, %v3796
        %v3833 = vsel %vm2549, 0.0, %v3798
        %v3834 = vsel %vm2549, 0.0, %v3800
        %v3835 = vsel %vm2549, 0.0, %v3802
        %v3836 = vsel %vm2549, 0.0, %v3804
        %v3837 = vsel %vm2558, %v3821, 0.0
        %v3838 = vsel %vm2558, %v3822, 0.0
        %v3839 = vsel %vm2558, %v3823, 0.0
        %v3840 = vsel %vm2558, %v3824, 0.0
        %v3841 = vsel %vm2558, %v3825, 0.0
        %v3842 = vsel %vm2558, %v3826, 0.0
        %v3843 = vsel %vm2558, %v3827, 0.0
        %v3844 = vsel %vm2558, %v3828, 0.0
        %v3845 = vsel %vm2558, %v3829, 0.0
        %v3846 = vsel %vm2558, %v3830, 0.0
        %v3847 = vsel %vm2558, %v3831, 0.0
        %v3848 = vsel %vm2558, %v3832, 0.0
        %v3849 = vsel %vm2558, %v3833, 0.0
        %v3850 = vsel %vm2558, %v3834, 0.0
        %v3851 = vsel %vm2558, %v3835, 0.0
        %v3852 = vsel %vm2558, %v3836, 0.0
        %3861 = vrot.lane.b32.xlu0 %v3837, 127
        %v3862 = vpop.permute.xlu0 %3861
        %3863 = vrot.lane.b32.xlu0 %v3839, 127
        %v3864 = vpop.permute.xlu0 %3863
        %3865 = vrot.lane.b32.xlu0 %v3841, 127
        %v3866 = vpop.permute.xlu0 %3865
        %3867 = vrot.lane.b32.xlu0 %v3843, 127
        %v3868 = vpop.permute.xlu0 %3867
        %3869 = vrot.lane.b32.xlu0 %v3845, 127
        %v3870 = vpop.permute.xlu0 %3869
        %3871 = vrot.lane.b32.xlu0 %v3847, 127
        %v3872 = vpop.permute.xlu0 %3871
        %3873 = vrot.lane.b32.xlu0 %v3849, 127
        %v3874 = vpop.permute.xlu0 %3873
        %3875 = vrot.lane.b32.xlu0 %v3851, 127
        %v3876 = vpop.permute.xlu0 %3875
        %3885 = vrot.lane.b32.xlu0 %v3837, 126
        %v3886 = vpop.permute.xlu0 %3885
        %3887 = vrot.lane.b32.xlu0 %v3839, 126
        %v3888 = vpop.permute.xlu0 %3887
        %3889 = vrot.lane.b32.xlu0 %v3841, 126
        %v3890 = vpop.permute.xlu0 %3889
        %3891 = vrot.lane.b32.xlu0 %v3843, 126
        %v3892 = vpop.permute.xlu0 %3891
        %3893 = vrot.lane.b32.xlu0 %v3845, 126
        %v3894 = vpop.permute.xlu0 %3893
        %3895 = vrot.lane.b32.xlu0 %v3847, 126
        %v3896 = vpop.permute.xlu0 %3895
        %3897 = vrot.lane.b32.xlu0 %v3849, 126
        %v3898 = vpop.permute.xlu0 %3897
        %3899 = vrot.lane.b32.xlu0 %v3851, 126
        %v3900 = vpop.permute.xlu0 %3899
        %v3917 = vrot.slane %v3837, 1
        %v3918 = vrot.slane %v3838, 1
        %v3919 = vsel %vm2599, %v3917, %v3918
        %v3920 = vrot.slane %v3839, 1
        %v3921 = vrot.slane %v3840, 1
        %v3922 = vsel %vm2599, %v3920, %v3921
        %v3923 = vrot.slane %v3841, 1
        %v3924 = vrot.slane %v3842, 1
        %v3925 = vsel %vm2599, %v3923, %v3924
        %v3926 = vrot.slane %v3843, 1
        %v3927 = vrot.slane %v3844, 1
        %v3928 = vsel %vm2599, %v3926, %v3927
        %v3929 = vrot.slane %v3845, 1
        %v3930 = vrot.slane %v3846, 1
        %v3931 = vsel %vm2599, %v3929, %v3930
        %v3932 = vrot.slane %v3847, 1
        %v3933 = vrot.slane %v3848, 1
        %v3934 = vsel %vm2599, %v3932, %v3933
        %v3935 = vrot.slane %v3849, 1
        %v3936 = vrot.slane %v3850, 1
        %v3937 = vsel %vm2599, %v3935, %v3936
        %v3938 = vrot.slane %v3851, 1
        %v3939 = vrot.slane %v3852, 1
        %v3940 = vsel %vm2599, %v3938, %v3939
        %3949 = vrot.lane.b32.xlu0 %v3919, 127
        %v3950 = vpop.permute.xlu0 %3949
        %3951 = vrot.lane.b32.xlu0 %v3922, 127
        %v3952 = vpop.permute.xlu0 %3951
        %3953 = vrot.lane.b32.xlu0 %v3925, 127
        %v3954 = vpop.permute.xlu0 %3953
        %3955 = vrot.lane.b32.xlu0 %v3928, 127
        %v3956 = vpop.permute.xlu0 %3955
        %3957 = vrot.lane.b32.xlu0 %v3931, 127
        %v3958 = vpop.permute.xlu0 %3957
        %3959 = vrot.lane.b32.xlu0 %v3934, 127
        %v3960 = vpop.permute.xlu0 %3959
        %3961 = vrot.lane.b32.xlu0 %v3937, 127
        %v3962 = vpop.permute.xlu0 %3961
        %3963 = vrot.lane.b32.xlu0 %v3940, 127
        %v3964 = vpop.permute.xlu0 %3963
        %3973 = vrot.lane.b32.xlu0 %v3919, 126
        %v3974 = vpop.permute.xlu0 %3973
        %3975 = vrot.lane.b32.xlu0 %v3922, 126
        %v3976 = vpop.permute.xlu0 %3975
        %3977 = vrot.lane.b32.xlu0 %v3925, 126
        %v3978 = vpop.permute.xlu0 %3977
        %3979 = vrot.lane.b32.xlu0 %v3928, 126
        %v3980 = vpop.permute.xlu0 %3979
        %3981 = vrot.lane.b32.xlu0 %v3931, 126
        %v3982 = vpop.permute.xlu0 %3981
        %3983 = vrot.lane.b32.xlu0 %v3934, 126
        %v3984 = vpop.permute.xlu0 %3983
        %3985 = vrot.lane.b32.xlu0 %v3937, 126
        %v3986 = vpop.permute.xlu0 %3985
        %3987 = vrot.lane.b32.xlu0 %v3940, 126
        %v3988 = vpop.permute.xlu0 %3987
        %v3997 = vrot.slane %v3837, 2
        %v3998 = vrot.slane %v3838, 2
        %v3999 = vsel %vm2640, %v3997, %v3998
        %v4000 = vrot.slane %v3839, 2
        %v4001 = vrot.slane %v3840, 2
        %v4002 = vsel %vm2640, %v4000, %v4001
        %v4003 = vrot.slane %v3841, 2
        %v4004 = vrot.slane %v3842, 2
        %v4005 = vsel %vm2640, %v4003, %v4004
        %v4006 = vrot.slane %v3843, 2
        %v4007 = vrot.slane %v3844, 2
        %v4008 = vsel %vm2640, %v4006, %v4007
        %v4009 = vrot.slane %v3845, 2
        %v4010 = vrot.slane %v3846, 2
        %v4011 = vsel %vm2640, %v4009, %v4010
        %v4012 = vrot.slane %v3847, 2
        %v4013 = vrot.slane %v3848, 2
        %v4014 = vsel %vm2640, %v4012, %v4013
        %v4015 = vrot.slane %v3849, 2
        %v4016 = vrot.slane %v3850, 2
        %v4017 = vsel %vm2640, %v4015, %v4016
        %v4018 = vrot.slane %v3851, 2
        %v4019 = vrot.slane %v3852, 2
        %v4020 = vsel %vm2640, %v4018, %v4019
        %4029 = vrot.lane.b32.xlu0 %v3999, 127
        %v4030 = vpop.permute.xlu0 %4029
        %4031 = vrot.lane.b32.xlu0 %v4002, 127
        %v4032 = vpop.permute.xlu0 %4031
        %4033 = vrot.lane.b32.xlu0 %v4005, 127
        %v4034 = vpop.permute.xlu0 %4033
        %4035 = vrot.lane.b32.xlu0 %v4008, 127
        %v4036 = vpop.permute.xlu0 %4035
        %4037 = vrot.lane.b32.xlu0 %v4011, 127
        %v4038 = vpop.permute.xlu0 %4037
        %4039 = vrot.lane.b32.xlu0 %v4014, 127
        %v4040 = vpop.permute.xlu0 %4039
        %4041 = vrot.lane.b32.xlu0 %v4017, 127
        %v4042 = vpop.permute.xlu0 %4041
        %4043 = vrot.lane.b32.xlu0 %v4020, 127
        %v4044 = vpop.permute.xlu0 %4043
        %4053 = vrot.lane.b32.xlu0 %v3999, 126
        %v4054 = vpop.permute.xlu0 %4053
        %4055 = vrot.lane.b32.xlu0 %v4002, 126
        %v4056 = vpop.permute.xlu0 %4055
        %4057 = vrot.lane.b32.xlu0 %v4005, 126
        %v4058 = vpop.permute.xlu0 %4057
        %4059 = vrot.lane.b32.xlu0 %v4008, 126
        %v4060 = vpop.permute.xlu0 %4059
        %4061 = vrot.lane.b32.xlu0 %v4011, 126
        %v4062 = vpop.permute.xlu0 %4061
        %4063 = vrot.lane.b32.xlu0 %v4014, 126
        %v4064 = vpop.permute.xlu0 %4063
        %4065 = vrot.lane.b32.xlu0 %v4017, 126
        %v4066 = vpop.permute.xlu0 %4065
        %4067 = vrot.lane.b32.xlu0 %v4020, 126
        %v4068 = vpop.permute.xlu0 %4067
        %v4077 = vcombine.low %v3837, %v3841
        %v4078 = vcombine.high %v3837, %v3841
        %v4080 = vunpack.c.l.s4 1983009808
        %v4081 = vunpack.c.0.s8 %v4080
        %v4082 = vlaneseq
        %v4083 = vshrl.u32 %v4082, 7
        %v4084 = vsub.s32 %v4081, %v4083
        %v4085 = vrot.slane %v4077, %v4084
        %v4087 = vunpack.c.l.s4 1983009808
        %v4088 = vunpack.c.0.s8 %v4087
        %v4089 = vlaneseq
        %v4090 = vshrl.u32 %v4089, 7
        %v4091 = vsub.s32 %v4088, %v4090
        %v4092 = vrot.slane %v4078, %v4091
        %v4093 = vcombine.low %v3839, %v3843
        %v4094 = vcombine.high %v3839, %v3843
        %v4096 = vunpack.c.l.s4 1983009808
        %v4097 = vunpack.c.0.s8 %v4096
        %v4098 = vlaneseq
        %v4099 = vshrl.u32 %v4098, 7
        %v4100 = vsub.s32 %v4097, %v4099
        %v4101 = vrot.slane %v4093, %v4100
        %v4103 = vunpack.c.l.s4 1983009808
        %v4104 = vunpack.c.0.s8 %v4103
        %v4105 = vlaneseq
        %v4106 = vshrl.u32 %v4105, 7
        %v4107 = vsub.s32 %v4104, %v4106
        %v4108 = vrot.slane %v4094, %v4107
        %v4109 = vcombine.low %v3845, %v3849
        %v4110 = vcombine.high %v3845, %v3849
        %v4112 = vunpack.c.l.s4 1983009808
        %v4113 = vunpack.c.0.s8 %v4112
        %v4114 = vlaneseq
        %v4115 = vshrl.u32 %v4114, 7
        %v4116 = vsub.s32 %v4113, %v4115
        %v4117 = vrot.slane %v4109, %v4116
        %v4119 = vunpack.c.l.s4 1983009808
        %v4120 = vunpack.c.0.s8 %v4119
        %v4121 = vlaneseq
        %v4122 = vshrl.u32 %v4121, 7
        %v4123 = vsub.s32 %v4120, %v4122
        %v4124 = vrot.slane %v4110, %v4123
        %v4125 = vcombine.low %v3847, %v3851
        %v4126 = vcombine.high %v3847, %v3851
        %v4128 = vunpack.c.l.s4 1983009808
        %v4129 = vunpack.c.0.s8 %v4128
        %v4130 = vlaneseq
        %v4131 = vshrl.u32 %v4130, 7
        %v4132 = vsub.s32 %v4129, %v4131
        %v4133 = vrot.slane %v4125, %v4132
        %v4135 = vunpack.c.l.s4 1983009808
        %v4136 = vunpack.c.0.s8 %v4135
        %v4137 = vlaneseq
        %v4138 = vshrl.u32 %v4137, 7
        %v4139 = vsub.s32 %v4136, %v4138
        %v4140 = vrot.slane %v4126, %v4139
        %v4141 = vcombine.low %v4085, %v4101
        %v4142 = vcombine.high %v4085, %v4101
        %v4144 = vunpack.c.l.s4 1934713408
        %v4145 = vunpack.c.0.s8 %v4144
        %v4146 = vlaneseq
        %v4147 = vshrl.u32 %v4146, 7
        %v4148 = vsub.s32 %v4145, %v4147
        %v4149 = vrot.slane %v4141, %v4148
        %v4151 = vunpack.c.l.s4 1934713408
        %v4152 = vunpack.c.0.s8 %v4151
        %v4153 = vlaneseq
        %v4154 = vshrl.u32 %v4153, 7
        %v4155 = vsub.s32 %v4152, %v4154
        %v4156 = vrot.slane %v4142, %v4155
        %v4157 = vcombine.low %v4092, %v4108
        %v4158 = vcombine.high %v4092, %v4108
        %v4160 = vunpack.c.l.s4 1934713408
        %v4161 = vunpack.c.0.s8 %v4160
        %v4162 = vlaneseq
        %v4163 = vshrl.u32 %v4162, 7
        %v4164 = vsub.s32 %v4161, %v4163
        %v4165 = vrot.slane %v4157, %v4164
        %v4167 = vunpack.c.l.s4 1934713408
        %v4168 = vunpack.c.0.s8 %v4167
        %v4169 = vlaneseq
        %v4170 = vshrl.u32 %v4169, 7
        %v4171 = vsub.s32 %v4168, %v4170
        %v4172 = vrot.slane %v4158, %v4171
        %v4173 = vcombine.low %v4117, %v4133
        %v4174 = vcombine.high %v4117, %v4133
        %v4176 = vunpack.c.l.s4 1934713408
        %v4177 = vunpack.c.0.s8 %v4176
        %v4178 = vlaneseq
        %v4179 = vshrl.u32 %v4178, 7
        %v4180 = vsub.s32 %v4177, %v4179
        %v4181 = vrot.slane %v4173, %v4180
        %v4183 = vunpack.c.l.s4 1934713408
        %v4184 = vunpack.c.0.s8 %v4183
        %v4185 = vlaneseq
        %v4186 = vshrl.u32 %v4185, 7
        %v4187 = vsub.s32 %v4184, %v4186
        %v4188 = vrot.slane %v4174, %v4187
        %v4189 = vcombine.low %v4124, %v4140
        %v4190 = vcombine.high %v4124, %v4140
        %v4192 = vunpack.c.l.s4 1934713408
        %v4193 = vunpack.c.0.s8 %v4192
        %v4194 = vlaneseq
        %v4195 = vshrl.u32 %v4194, 7
        %v4196 = vsub.s32 %v4193, %v4195
        %v4197 = vrot.slane %v4189, %v4196
        %v4199 = vunpack.c.l.s4 1934713408
        %v4200 = vunpack.c.0.s8 %v4199
        %v4201 = vlaneseq
        %v4202 = vshrl.u32 %v4201, 7
        %v4203 = vsub.s32 %v4200, %v4202
        %v4204 = vrot.slane %v4190, %v4203
        %v4205 = vcombine.low %v4149, %v4181
        %v4206 = vcombine.high %v4149, %v4181
        %v4207 = vcombine.low %v4156, %v4188
        %v4208 = vcombine.high %v4156, %v4188
        %v4209 = vcombine.low %v4165, %v4197
        %v4210 = vcombine.high %v4165, %v4197
        %v4211 = vcombine.low %v4172, %v4204
        %v4212 = vcombine.high %v4172, %v4204
        %v4213 = vcombine.low %v3862, %v3866
        %v4214 = vcombine.high %v3862, %v3866
        %v4216 = vunpack.c.l.s4 1983009808
        %v4217 = vunpack.c.0.s8 %v4216
        %v4218 = vlaneseq
        %v4219 = vshrl.u32 %v4218, 7
        %v4220 = vsub.s32 %v4217, %v4219
        %v4221 = vrot.slane %v4213, %v4220
        %v4223 = vunpack.c.l.s4 1983009808
        %v4224 = vunpack.c.0.s8 %v4223
        %v4225 = vlaneseq
        %v4226 = vshrl.u32 %v4225, 7
        %v4227 = vsub.s32 %v4224, %v4226
        %v4228 = vrot.slane %v4214, %v4227
        %v4229 = vcombine.low %v3864, %v3868
        %v4230 = vcombine.high %v3864, %v3868
        %v4232 = vunpack.c.l.s4 1983009808
        %v4233 = vunpack.c.0.s8 %v4232
        %v4234 = vlaneseq
        %v4235 = vshrl.u32 %v4234, 7
        %v4236 = vsub.s32 %v4233, %v4235
        %v4237 = vrot.slane %v4229, %v4236
        %v4239 = vunpack.c.l.s4 1983009808
        %v4240 = vunpack.c.0.s8 %v4239
        %v4241 = vlaneseq
        %v4242 = vshrl.u32 %v4241, 7
        %v4243 = vsub.s32 %v4240, %v4242
        %v4244 = vrot.slane %v4230, %v4243
        %v4245 = vcombine.low %v3870, %v3874
        %v4246 = vcombine.high %v3870, %v3874
        %v4248 = vunpack.c.l.s4 1983009808
        %v4249 = vunpack.c.0.s8 %v4248
        %v4250 = vlaneseq
        %v4251 = vshrl.u32 %v4250, 7
        %v4252 = vsub.s32 %v4249, %v4251
        %v4253 = vrot.slane %v4245, %v4252
        %v4255 = vunpack.c.l.s4 1983009808
        %v4256 = vunpack.c.0.s8 %v4255
        %v4257 = vlaneseq
        %v4258 = vshrl.u32 %v4257, 7
        %v4259 = vsub.s32 %v4256, %v4258
        %v4260 = vrot.slane %v4246, %v4259
        %v4261 = vcombine.low %v3872, %v3876
        %v4262 = vcombine.high %v3872, %v3876
        %v4264 = vunpack.c.l.s4 1983009808
        %v4265 = vunpack.c.0.s8 %v4264
        %v4266 = vlaneseq
        %v4267 = vshrl.u32 %v4266, 7
        %v4268 = vsub.s32 %v4265, %v4267
        %v4269 = vrot.slane %v4261, %v4268
        %v4271 = vunpack.c.l.s4 1983009808
        %v4272 = vunpack.c.0.s8 %v4271
        %v4273 = vlaneseq
        %v4274 = vshrl.u32 %v4273, 7
        %v4275 = vsub.s32 %v4272, %v4274
        %v4276 = vrot.slane %v4262, %v4275
        %v4277 = vcombine.low %v4221, %v4237
        %v4278 = vcombine.high %v4221, %v4237
        %v4280 = vunpack.c.l.s4 1934713408
        %v4281 = vunpack.c.0.s8 %v4280
        %v4282 = vlaneseq
        %v4283 = vshrl.u32 %v4282, 7
        %v4284 = vsub.s32 %v4281, %v4283
        %v4285 = vrot.slane %v4277, %v4284
        %v4287 = vunpack.c.l.s4 1934713408
        %v4288 = vunpack.c.0.s8 %v4287
        %v4289 = vlaneseq
        %v4290 = vshrl.u32 %v4289, 7
        %v4291 = vsub.s32 %v4288, %v4290
        %v4292 = vrot.slane %v4278, %v4291
        %v4293 = vcombine.low %v4228, %v4244
        %v4294 = vcombine.high %v4228, %v4244
        %v4296 = vunpack.c.l.s4 1934713408
        %v4297 = vunpack.c.0.s8 %v4296
        %v4298 = vlaneseq
        %v4299 = vshrl.u32 %v4298, 7
        %v4300 = vsub.s32 %v4297, %v4299
        %v4301 = vrot.slane %v4293, %v4300
        %v4303 = vunpack.c.l.s4 1934713408
        %v4304 = vunpack.c.0.s8 %v4303
        %v4305 = vlaneseq
        %v4306 = vshrl.u32 %v4305, 7
        %v4307 = vsub.s32 %v4304, %v4306
        %v4308 = vrot.slane %v4294, %v4307
        %v4309 = vcombine.low %v4253, %v4269
        %v4310 = vcombine.high %v4253, %v4269
        %v4312 = vunpack.c.l.s4 1934713408
        %v4313 = vunpack.c.0.s8 %v4312
        %v4314 = vlaneseq
        %v4315 = vshrl.u32 %v4314, 7
        %v4316 = vsub.s32 %v4313, %v4315
        %v4317 = vrot.slane %v4309, %v4316
        %v4319 = vunpack.c.l.s4 1934713408
        %v4320 = vunpack.c.0.s8 %v4319
        %v4321 = vlaneseq
        %v4322 = vshrl.u32 %v4321, 7
        %v4323 = vsub.s32 %v4320, %v4322
        %v4324 = vrot.slane %v4310, %v4323
        %v4325 = vcombine.low %v4260, %v4276
        %v4326 = vcombine.high %v4260, %v4276
        %v4328 = vunpack.c.l.s4 1934713408
        %v4329 = vunpack.c.0.s8 %v4328
        %v4330 = vlaneseq
        %v4331 = vshrl.u32 %v4330, 7
        %v4332 = vsub.s32 %v4329, %v4331
        %v4333 = vrot.slane %v4325, %v4332
        %v4335 = vunpack.c.l.s4 1934713408
        %v4336 = vunpack.c.0.s8 %v4335
        %v4337 = vlaneseq
        %v4338 = vshrl.u32 %v4337, 7
        %v4339 = vsub.s32 %v4336, %v4338
        %v4340 = vrot.slane %v4326, %v4339
        %v4341 = vcombine.low %v4285, %v4317
        %v4342 = vcombine.high %v4285, %v4317
        %v4343 = vcombine.low %v4292, %v4324
        %v4344 = vcombine.high %v4292, %v4324
        %v4345 = vcombine.low %v4301, %v4333
        %v4346 = vcombine.high %v4301, %v4333
        %v4347 = vcombine.low %v4308, %v4340
        %v4348 = vcombine.high %v4308, %v4340
        %v4349 = vcombine.low %v3886, %v3890
        %v4350 = vcombine.high %v3886, %v3890
        %v4352 = vunpack.c.l.s4 1983009808
        %v4353 = vunpack.c.0.s8 %v4352
        %v4354 = vlaneseq
        %v4355 = vshrl.u32 %v4354, 7
        %v4356 = vsub.s32 %v4353, %v4355
        %v4357 = vrot.slane %v4349, %v4356
        %v4359 = vunpack.c.l.s4 1983009808
        %v4360 = vunpack.c.0.s8 %v4359
        %v4361 = vlaneseq
        %v4362 = vshrl.u32 %v4361, 7
        %v4363 = vsub.s32 %v4360, %v4362
        %v4364 = vrot.slane %v4350, %v4363
        %v4365 = vcombine.low %v3888, %v3892
        %v4366 = vcombine.high %v3888, %v3892
        %v4368 = vunpack.c.l.s4 1983009808
        %v4369 = vunpack.c.0.s8 %v4368
        %v4370 = vlaneseq
        %v4371 = vshrl.u32 %v4370, 7
        %v4372 = vsub.s32 %v4369, %v4371
        %v4373 = vrot.slane %v4365, %v4372
        %v4375 = vunpack.c.l.s4 1983009808
        %v4376 = vunpack.c.0.s8 %v4375
        %v4377 = vlaneseq
        %v4378 = vshrl.u32 %v4377, 7
        %v4379 = vsub.s32 %v4376, %v4378
        %v4380 = vrot.slane %v4366, %v4379
        %v4381 = vcombine.low %v3894, %v3898
        %v4382 = vcombine.high %v3894, %v3898
        %v4384 = vunpack.c.l.s4 1983009808
        %v4385 = vunpack.c.0.s8 %v4384
        %v4386 = vlaneseq
        %v4387 = vshrl.u32 %v4386, 7
        %v4388 = vsub.s32 %v4385, %v4387
        %v4389 = vrot.slane %v4381, %v4388
        %v4391 = vunpack.c.l.s4 1983009808
        %v4392 = vunpack.c.0.s8 %v4391
        %v4393 = vlaneseq
        %v4394 = vshrl.u32 %v4393, 7
        %v4395 = vsub.s32 %v4392, %v4394
        %v4396 = vrot.slane %v4382, %v4395
        %v4397 = vcombine.low %v3896, %v3900
        %v4398 = vcombine.high %v3896, %v3900
        %v4400 = vunpack.c.l.s4 1983009808
        %v4401 = vunpack.c.0.s8 %v4400
        %v4402 = vlaneseq
        %v4403 = vshrl.u32 %v4402, 7
        %v4404 = vsub.s32 %v4401, %v4403
        %v4405 = vrot.slane %v4397, %v4404
        %v4407 = vunpack.c.l.s4 1983009808
        %v4408 = vunpack.c.0.s8 %v4407
        %v4409 = vlaneseq
        %v4410 = vshrl.u32 %v4409, 7
        %v4411 = vsub.s32 %v4408, %v4410
        %v4412 = vrot.slane %v4398, %v4411
        %v4413 = vcombine.low %v4357, %v4373
        %v4414 = vcombine.high %v4357, %v4373
        %v4416 = vunpack.c.l.s4 1934713408
        %v4417 = vunpack.c.0.s8 %v4416
        %v4418 = vlaneseq
        %v4419 = vshrl.u32 %v4418, 7
        %v4420 = vsub.s32 %v4417, %v4419
        %v4421 = vrot.slane %v4413, %v4420
        %v4423 = vunpack.c.l.s4 1934713408
        %v4424 = vunpack.c.0.s8 %v4423
        %v4425 = vlaneseq
        %v4426 = vshrl.u32 %v4425, 7
        %v4427 = vsub.s32 %v4424, %v4426
        %v4428 = vrot.slane %v4414, %v4427
        %v4429 = vcombine.low %v4364, %v4380
        %v4430 = vcombine.high %v4364, %v4380
        %v4432 = vunpack.c.l.s4 1934713408
        %v4433 = vunpack.c.0.s8 %v4432
        %v4434 = vlaneseq
        %v4435 = vshrl.u32 %v4434, 7
        %v4436 = vsub.s32 %v4433, %v4435
        %v4437 = vrot.slane %v4429, %v4436
        %v4439 = vunpack.c.l.s4 1934713408
        %v4440 = vunpack.c.0.s8 %v4439
        %v4441 = vlaneseq
        %v4442 = vshrl.u32 %v4441, 7
        %v4443 = vsub.s32 %v4440, %v4442
        %v4444 = vrot.slane %v4430, %v4443
        %v4445 = vcombine.low %v4389, %v4405
        %v4446 = vcombine.high %v4389, %v4405
        %v4448 = vunpack.c.l.s4 1934713408
        %v4449 = vunpack.c.0.s8 %v4448
        %v4450 = vlaneseq
        %v4451 = vshrl.u32 %v4450, 7
        %v4452 = vsub.s32 %v4449, %v4451
        %v4453 = vrot.slane %v4445, %v4452
        %v4455 = vunpack.c.l.s4 1934713408
        %v4456 = vunpack.c.0.s8 %v4455
        %v4457 = vlaneseq
        %v4458 = vshrl.u32 %v4457, 7
        %v4459 = vsub.s32 %v4456, %v4458
        %v4460 = vrot.slane %v4446, %v4459
        %v4461 = vcombine.low %v4396, %v4412
        %v4462 = vcombine.high %v4396, %v4412
        %v4464 = vunpack.c.l.s4 1934713408
        %v4465 = vunpack.c.0.s8 %v4464
        %v4466 = vlaneseq
        %v4467 = vshrl.u32 %v4466, 7
        %v4468 = vsub.s32 %v4465, %v4467
        %v4469 = vrot.slane %v4461, %v4468
        %v4471 = vunpack.c.l.s4 1934713408
        %v4472 = vunpack.c.0.s8 %v4471
        %v4473 = vlaneseq
        %v4474 = vshrl.u32 %v4473, 7
        %v4475 = vsub.s32 %v4472, %v4474
        %v4476 = vrot.slane %v4462, %v4475
        %v4477 = vcombine.low %v4421, %v4453
        %v4478 = vcombine.high %v4421, %v4453
        %v4479 = vcombine.low %v4428, %v4460
        %v4480 = vcombine.high %v4428, %v4460
        %v4481 = vcombine.low %v4437, %v4469
        %v4482 = vcombine.high %v4437, %v4469
        %v4483 = vcombine.low %v4444, %v4476
        %v4484 = vcombine.high %v4444, %v4476
        %v4485 = vcombine.low %v3919, %v3925
        %v4486 = vcombine.high %v3919, %v3925
        %v4488 = vunpack.c.l.s4 1983009808
        %v4489 = vunpack.c.0.s8 %v4488
        %v4490 = vlaneseq
        %v4491 = vshrl.u32 %v4490, 7
        %v4492 = vsub.s32 %v4489, %v4491
        %v4493 = vrot.slane %v4485, %v4492
        %v4495 = vunpack.c.l.s4 1983009808
        %v4496 = vunpack.c.0.s8 %v4495
        %v4497 = vlaneseq
        %v4498 = vshrl.u32 %v4497, 7
        %v4499 = vsub.s32 %v4496, %v4498
        %v4500 = vrot.slane %v4486, %v4499
        %v4501 = vcombine.low %v3922, %v3928
        %v4502 = vcombine.high %v3922, %v3928
        %v4504 = vunpack.c.l.s4 1983009808
        %v4505 = vunpack.c.0.s8 %v4504
        %v4506 = vlaneseq
        %v4507 = vshrl.u32 %v4506, 7
        %v4508 = vsub.s32 %v4505, %v4507
        %v4509 = vrot.slane %v4501, %v4508
        %v4511 = vunpack.c.l.s4 1983009808
        %v4512 = vunpack.c.0.s8 %v4511
        %v4513 = vlaneseq
        %v4514 = vshrl.u32 %v4513, 7
        %v4515 = vsub.s32 %v4512, %v4514
        %v4516 = vrot.slane %v4502, %v4515
        %v4517 = vcombine.low %v3931, %v3937
        %v4518 = vcombine.high %v3931, %v3937
        %v4520 = vunpack.c.l.s4 1983009808
        %v4521 = vunpack.c.0.s8 %v4520
        %v4522 = vlaneseq
        %v4523 = vshrl.u32 %v4522, 7
        %v4524 = vsub.s32 %v4521, %v4523
        %v4525 = vrot.slane %v4517, %v4524
        %v4527 = vunpack.c.l.s4 1983009808
        %v4528 = vunpack.c.0.s8 %v4527
        %v4529 = vlaneseq
        %v4530 = vshrl.u32 %v4529, 7
        %v4531 = vsub.s32 %v4528, %v4530
        %v4532 = vrot.slane %v4518, %v4531
        %v4533 = vcombine.low %v3934, %v3940
        %v4534 = vcombine.high %v3934, %v3940
        %v4536 = vunpack.c.l.s4 1983009808
        %v4537 = vunpack.c.0.s8 %v4536
        %v4538 = vlaneseq
        %v4539 = vshrl.u32 %v4538, 7
        %v4540 = vsub.s32 %v4537, %v4539
        %v4541 = vrot.slane %v4533, %v4540
        %v4543 = vunpack.c.l.s4 1983009808
        %v4544 = vunpack.c.0.s8 %v4543
        %v4545 = vlaneseq
        %v4546 = vshrl.u32 %v4545, 7
        %v4547 = vsub.s32 %v4544, %v4546
        %v4548 = vrot.slane %v4534, %v4547
        %v4549 = vcombine.low %v4493, %v4509
        %v4550 = vcombine.high %v4493, %v4509
        %v4552 = vunpack.c.l.s4 1934713408
        %v4553 = vunpack.c.0.s8 %v4552
        %v4554 = vlaneseq
        %v4555 = vshrl.u32 %v4554, 7
        %v4556 = vsub.s32 %v4553, %v4555
        %v4557 = vrot.slane %v4549, %v4556
        %v4559 = vunpack.c.l.s4 1934713408
        %v4560 = vunpack.c.0.s8 %v4559
        %v4561 = vlaneseq
        %v4562 = vshrl.u32 %v4561, 7
        %v4563 = vsub.s32 %v4560, %v4562
        %v4564 = vrot.slane %v4550, %v4563
        %v4565 = vcombine.low %v4500, %v4516
        %v4566 = vcombine.high %v4500, %v4516
        %v4568 = vunpack.c.l.s4 1934713408
        %v4569 = vunpack.c.0.s8 %v4568
        %v4570 = vlaneseq
        %v4571 = vshrl.u32 %v4570, 7
        %v4572 = vsub.s32 %v4569, %v4571
        %v4573 = vrot.slane %v4565, %v4572
        %v4575 = vunpack.c.l.s4 1934713408
        %v4576 = vunpack.c.0.s8 %v4575
        %v4577 = vlaneseq
        %v4578 = vshrl.u32 %v4577, 7
        %v4579 = vsub.s32 %v4576, %v4578
        %v4580 = vrot.slane %v4566, %v4579
        %v4581 = vcombine.low %v4525, %v4541
        %v4582 = vcombine.high %v4525, %v4541
        %v4584 = vunpack.c.l.s4 1934713408
        %v4585 = vunpack.c.0.s8 %v4584
        %v4586 = vlaneseq
        %v4587 = vshrl.u32 %v4586, 7
        %v4588 = vsub.s32 %v4585, %v4587
        %v4589 = vrot.slane %v4581, %v4588
        %v4591 = vunpack.c.l.s4 1934713408
        %v4592 = vunpack.c.0.s8 %v4591
        %v4593 = vlaneseq
        %v4594 = vshrl.u32 %v4593, 7
        %v4595 = vsub.s32 %v4592, %v4594
        %v4596 = vrot.slane %v4582, %v4595
        %v4597 = vcombine.low %v4532, %v4548
        %v4598 = vcombine.high %v4532, %v4548
        %v4600 = vunpack.c.l.s4 1934713408
        %v4601 = vunpack.c.0.s8 %v4600
        %v4602 = vlaneseq
        %v4603 = vshrl.u32 %v4602, 7
        %v4604 = vsub.s32 %v4601, %v4603
        %v4605 = vrot.slane %v4597, %v4604
        %v4607 = vunpack.c.l.s4 1934713408
        %v4608 = vunpack.c.0.s8 %v4607
        %v4609 = vlaneseq
        %v4610 = vshrl.u32 %v4609, 7
        %v4611 = vsub.s32 %v4608, %v4610
        %v4612 = vrot.slane %v4598, %v4611
        %v4613 = vcombine.low %v4557, %v4589
        %v4614 = vcombine.high %v4557, %v4589
        %v4615 = vcombine.low %v4564, %v4596
        %v4616 = vcombine.high %v4564, %v4596
        %v4617 = vcombine.low %v4573, %v4605
        %v4618 = vcombine.high %v4573, %v4605
        %v4619 = vcombine.low %v4580, %v4612
        %v4620 = vcombine.high %v4580, %v4612
        %v4621 = vcombine.low %v3950, %v3954
        %v4622 = vcombine.high %v3950, %v3954
        %v4624 = vunpack.c.l.s4 1983009808
        %v4625 = vunpack.c.0.s8 %v4624
        %v4626 = vlaneseq
        %v4627 = vshrl.u32 %v4626, 7
        %v4628 = vsub.s32 %v4625, %v4627
        %v4629 = vrot.slane %v4621, %v4628
        %v4631 = vunpack.c.l.s4 1983009808
        %v4632 = vunpack.c.0.s8 %v4631
        %v4633 = vlaneseq
        %v4634 = vshrl.u32 %v4633, 7
        %v4635 = vsub.s32 %v4632, %v4634
        %v4636 = vrot.slane %v4622, %v4635
        %v4637 = vcombine.low %v3952, %v3956
        %v4638 = vcombine.high %v3952, %v3956
        %v4640 = vunpack.c.l.s4 1983009808
        %v4641 = vunpack.c.0.s8 %v4640
        %v4642 = vlaneseq
        %v4643 = vshrl.u32 %v4642, 7
        %v4644 = vsub.s32 %v4641, %v4643
        %v4645 = vrot.slane %v4637, %v4644
        %v4647 = vunpack.c.l.s4 1983009808
        %v4648 = vunpack.c.0.s8 %v4647
        %v4649 = vlaneseq
        %v4650 = vshrl.u32 %v4649, 7
        %v4651 = vsub.s32 %v4648, %v4650
        %v4652 = vrot.slane %v4638, %v4651
        %v4653 = vcombine.low %v3958, %v3962
        %v4654 = vcombine.high %v3958, %v3962
        %v4656 = vunpack.c.l.s4 1983009808
        %v4657 = vunpack.c.0.s8 %v4656
        %v4658 = vlaneseq
        %v4659 = vshrl.u32 %v4658, 7
        %v4660 = vsub.s32 %v4657, %v4659
        %v4661 = vrot.slane %v4653, %v4660
        %v4663 = vunpack.c.l.s4 1983009808
        %v4664 = vunpack.c.0.s8 %v4663
        %v4665 = vlaneseq
        %v4666 = vshrl.u32 %v4665, 7
        %v4667 = vsub.s32 %v4664, %v4666
        %v4668 = vrot.slane %v4654, %v4667
        %v4669 = vcombine.low %v3960, %v3964
        %v4670 = vcombine.high %v3960, %v3964
        %v4672 = vunpack.c.l.s4 1983009808
        %v4673 = vunpack.c.0.s8 %v4672
        %v4674 = vlaneseq
        %v4675 = vshrl.u32 %v4674, 7
        %v4676 = vsub.s32 %v4673, %v4675
        %v4677 = vrot.slane %v4669, %v4676
        %v4679 = vunpack.c.l.s4 1983009808
        %v4680 = vunpack.c.0.s8 %v4679
        %v4681 = vlaneseq
        %v4682 = vshrl.u32 %v4681, 7
        %v4683 = vsub.s32 %v4680, %v4682
        %v4684 = vrot.slane %v4670, %v4683
        %v4685 = vcombine.low %v4629, %v4645
        %v4686 = vcombine.high %v4629, %v4645
        %v4688 = vunpack.c.l.s4 1934713408
        %v4689 = vunpack.c.0.s8 %v4688
        %v4690 = vlaneseq
        %v4691 = vshrl.u32 %v4690, 7
        %v4692 = vsub.s32 %v4689, %v4691
        %v4693 = vrot.slane %v4685, %v4692
        %v4695 = vunpack.c.l.s4 1934713408
        %v4696 = vunpack.c.0.s8 %v4695
        %v4697 = vlaneseq
        %v4698 = vshrl.u32 %v4697, 7
        %v4699 = vsub.s32 %v4696, %v4698
        %v4700 = vrot.slane %v4686, %v4699
        %v4701 = vcombine.low %v4636, %v4652
        %v4702 = vcombine.high %v4636, %v4652
        %v4704 = vunpack.c.l.s4 1934713408
        %v4705 = vunpack.c.0.s8 %v4704
        %v4706 = vlaneseq
        %v4707 = vshrl.u32 %v4706, 7
        %v4708 = vsub.s32 %v4705, %v4707
        %v4709 = vrot.slane %v4701, %v4708
        %v4711 = vunpack.c.l.s4 1934713408
        %v4712 = vunpack.c.0.s8 %v4711
        %v4713 = vlaneseq
        %v4714 = vshrl.u32 %v4713, 7
        %v4715 = vsub.s32 %v4712, %v4714
        %v4716 = vrot.slane %v4702, %v4715
        %v4717 = vcombine.low %v4661, %v4677
        %v4718 = vcombine.high %v4661, %v4677
        %v4720 = vunpack.c.l.s4 1934713408
        %v4721 = vunpack.c.0.s8 %v4720
        %v4722 = vlaneseq
        %v4723 = vshrl.u32 %v4722, 7
        %v4724 = vsub.s32 %v4721, %v4723
        %v4725 = vrot.slane %v4717, %v4724
        %v4727 = vunpack.c.l.s4 1934713408
        %v4728 = vunpack.c.0.s8 %v4727
        %v4729 = vlaneseq
        %v4730 = vshrl.u32 %v4729, 7
        %v4731 = vsub.s32 %v4728, %v4730
        %v4732 = vrot.slane %v4718, %v4731
        %v4733 = vcombine.low %v4668, %v4684
        %v4734 = vcombine.high %v4668, %v4684
        %v4736 = vunpack.c.l.s4 1934713408
        %v4737 = vunpack.c.0.s8 %v4736
        %v4738 = vlaneseq
        %v4739 = vshrl.u32 %v4738, 7
        %v4740 = vsub.s32 %v4737, %v4739
        %v4741 = vrot.slane %v4733, %v4740
        %v4743 = vunpack.c.l.s4 1934713408
        %v4744 = vunpack.c.0.s8 %v4743
        %v4745 = vlaneseq
        %v4746 = vshrl.u32 %v4745, 7
        %v4747 = vsub.s32 %v4744, %v4746
        %v4748 = vrot.slane %v4734, %v4747
        %v4749 = vcombine.low %v4693, %v4725
        %v4750 = vcombine.high %v4693, %v4725
        %v4751 = vcombine.low %v4700, %v4732
        %v4752 = vcombine.high %v4700, %v4732
        %v4753 = vcombine.low %v4709, %v4741
        %v4754 = vcombine.high %v4709, %v4741
        %v4755 = vcombine.low %v4716, %v4748
        %v4756 = vcombine.high %v4716, %v4748
        %v4757 = vcombine.low %v3974, %v3978
        %v4758 = vcombine.high %v3974, %v3978
        %v4760 = vunpack.c.l.s4 1983009808
        %v4761 = vunpack.c.0.s8 %v4760
        %v4762 = vlaneseq
        %v4763 = vshrl.u32 %v4762, 7
        %v4764 = vsub.s32 %v4761, %v4763
        %v4765 = vrot.slane %v4757, %v4764
        %v4767 = vunpack.c.l.s4 1983009808
        %v4768 = vunpack.c.0.s8 %v4767
        %v4769 = vlaneseq
        %v4770 = vshrl.u32 %v4769, 7
        %v4771 = vsub.s32 %v4768, %v4770
        %v4772 = vrot.slane %v4758, %v4771
        %v4773 = vcombine.low %v3976, %v3980
        %v4774 = vcombine.high %v3976, %v3980
        %v4776 = vunpack.c.l.s4 1983009808
        %v4777 = vunpack.c.0.s8 %v4776
        %v4778 = vlaneseq
        %v4779 = vshrl.u32 %v4778, 7
        %v4780 = vsub.s32 %v4777, %v4779
        %v4781 = vrot.slane %v4773, %v4780
        %v4783 = vunpack.c.l.s4 1983009808
        %v4784 = vunpack.c.0.s8 %v4783
        %v4785 = vlaneseq
        %v4786 = vshrl.u32 %v4785, 7
        %v4787 = vsub.s32 %v4784, %v4786
        %v4788 = vrot.slane %v4774, %v4787
        %v4789 = vcombine.low %v3982, %v3986
        %v4790 = vcombine.high %v3982, %v3986
        %v4792 = vunpack.c.l.s4 1983009808
        %v4793 = vunpack.c.0.s8 %v4792
        %v4794 = vlaneseq
        %v4795 = vshrl.u32 %v4794, 7
        %v4796 = vsub.s32 %v4793, %v4795
        %v4797 = vrot.slane %v4789, %v4796
        %v4799 = vunpack.c.l.s4 1983009808
        %v4800 = vunpack.c.0.s8 %v4799
        %v4801 = vlaneseq
        %v4802 = vshrl.u32 %v4801, 7
        %v4803 = vsub.s32 %v4800, %v4802
        %v4804 = vrot.slane %v4790, %v4803
        %v4805 = vcombine.low %v3984, %v3988
        %v4806 = vcombine.high %v3984, %v3988
        %v4808 = vunpack.c.l.s4 1983009808
        %v4809 = vunpack.c.0.s8 %v4808
        %v4810 = vlaneseq
        %v4811 = vshrl.u32 %v4810, 7
        %v4812 = vsub.s32 %v4809, %v4811
        %v4813 = vrot.slane %v4805, %v4812
        %v4815 = vunpack.c.l.s4 1983009808
        %v4816 = vunpack.c.0.s8 %v4815
        %v4817 = vlaneseq
        %v4818 = vshrl.u32 %v4817, 7
        %v4819 = vsub.s32 %v4816, %v4818
        %v4820 = vrot.slane %v4806, %v4819
        %v4821 = vcombine.low %v4765, %v4781
        %v4822 = vcombine.high %v4765, %v4781
        %v4824 = vunpack.c.l.s4 1934713408
        %v4825 = vunpack.c.0.s8 %v4824
        %v4826 = vlaneseq
        %v4827 = vshrl.u32 %v4826, 7
        %v4828 = vsub.s32 %v4825, %v4827
        %v4829 = vrot.slane %v4821, %v4828
        %v4831 = vunpack.c.l.s4 1934713408
        %v4832 = vunpack.c.0.s8 %v4831
        %v4833 = vlaneseq
        %v4834 = vshrl.u32 %v4833, 7
        %v4835 = vsub.s32 %v4832, %v4834
        %v4836 = vrot.slane %v4822, %v4835
        %v4837 = vcombine.low %v4772, %v4788
        %v4838 = vcombine.high %v4772, %v4788
        %v4840 = vunpack.c.l.s4 1934713408
        %v4841 = vunpack.c.0.s8 %v4840
        %v4842 = vlaneseq
        %v4843 = vshrl.u32 %v4842, 7
        %v4844 = vsub.s32 %v4841, %v4843
        %v4845 = vrot.slane %v4837, %v4844
        %v4847 = vunpack.c.l.s4 1934713408
        %v4848 = vunpack.c.0.s8 %v4847
        %v4849 = vlaneseq
        %v4850 = vshrl.u32 %v4849, 7
        %v4851 = vsub.s32 %v4848, %v4850
        %v4852 = vrot.slane %v4838, %v4851
        %v4853 = vcombine.low %v4797, %v4813
        %v4854 = vcombine.high %v4797, %v4813
        %v4856 = vunpack.c.l.s4 1934713408
        %v4857 = vunpack.c.0.s8 %v4856
        %v4858 = vlaneseq
        %v4859 = vshrl.u32 %v4858, 7
        %v4860 = vsub.s32 %v4857, %v4859
        %v4861 = vrot.slane %v4853, %v4860
        %v4863 = vunpack.c.l.s4 1934713408
        %v4864 = vunpack.c.0.s8 %v4863
        %v4865 = vlaneseq
        %v4866 = vshrl.u32 %v4865, 7
        %v4867 = vsub.s32 %v4864, %v4866
        %v4868 = vrot.slane %v4854, %v4867
        %v4869 = vcombine.low %v4804, %v4820
        %v4870 = vcombine.high %v4804, %v4820
        %v4872 = vunpack.c.l.s4 1934713408
        %v4873 = vunpack.c.0.s8 %v4872
        %v4874 = vlaneseq
        %v4875 = vshrl.u32 %v4874, 7
        %v4876 = vsub.s32 %v4873, %v4875
        %v4877 = vrot.slane %v4869, %v4876
        %v4879 = vunpack.c.l.s4 1934713408
        %v4880 = vunpack.c.0.s8 %v4879
        %v4881 = vlaneseq
        %v4882 = vshrl.u32 %v4881, 7
        %v4883 = vsub.s32 %v4880, %v4882
        %v4884 = vrot.slane %v4870, %v4883
        %v4885 = vcombine.low %v4829, %v4861
        %v4886 = vcombine.high %v4829, %v4861
        %v4887 = vcombine.low %v4836, %v4868
        %v4888 = vcombine.high %v4836, %v4868
        %v4889 = vcombine.low %v4845, %v4877
        %v4890 = vcombine.high %v4845, %v4877
        %v4891 = vcombine.low %v4852, %v4884
        %v4892 = vcombine.high %v4852, %v4884
        %v4893 = vcombine.low %v3999, %v4005
        %v4894 = vcombine.high %v3999, %v4005
        %v4896 = vunpack.c.l.s4 1983009808
        %v4897 = vunpack.c.0.s8 %v4896
        %v4898 = vlaneseq
        %v4899 = vshrl.u32 %v4898, 7
        %v4900 = vsub.s32 %v4897, %v4899
        %v4901 = vrot.slane %v4893, %v4900
        %v4903 = vunpack.c.l.s4 1983009808
        %v4904 = vunpack.c.0.s8 %v4903
        %v4905 = vlaneseq
        %v4906 = vshrl.u32 %v4905, 7
        %v4907 = vsub.s32 %v4904, %v4906
        %v4908 = vrot.slane %v4894, %v4907
        %v4909 = vcombine.low %v4002, %v4008
        %v4910 = vcombine.high %v4002, %v4008
        %v4912 = vunpack.c.l.s4 1983009808
        %v4913 = vunpack.c.0.s8 %v4912
        %v4914 = vlaneseq
        %v4915 = vshrl.u32 %v4914, 7
        %v4916 = vsub.s32 %v4913, %v4915
        %v4917 = vrot.slane %v4909, %v4916
        %v4919 = vunpack.c.l.s4 1983009808
        %v4920 = vunpack.c.0.s8 %v4919
        %v4921 = vlaneseq
        %v4922 = vshrl.u32 %v4921, 7
        %v4923 = vsub.s32 %v4920, %v4922
        %v4924 = vrot.slane %v4910, %v4923
        %v4925 = vcombine.low %v4011, %v4017
        %v4926 = vcombine.high %v4011, %v4017
        %v4928 = vunpack.c.l.s4 1983009808
        %v4929 = vunpack.c.0.s8 %v4928
        %v4930 = vlaneseq
        %v4931 = vshrl.u32 %v4930, 7
        %v4932 = vsub.s32 %v4929, %v4931
        %v4933 = vrot.slane %v4925, %v4932
        %v4935 = vunpack.c.l.s4 1983009808
        %v4936 = vunpack.c.0.s8 %v4935
        %v4937 = vlaneseq
        %v4938 = vshrl.u32 %v4937, 7
        %v4939 = vsub.s32 %v4936, %v4938
        %v4940 = vrot.slane %v4926, %v4939
        %v4941 = vcombine.low %v4014, %v4020
        %v4942 = vcombine.high %v4014, %v4020
        %v4944 = vunpack.c.l.s4 1983009808
        %v4945 = vunpack.c.0.s8 %v4944
        %v4946 = vlaneseq
        %v4947 = vshrl.u32 %v4946, 7
        %v4948 = vsub.s32 %v4945, %v4947
        %v4949 = vrot.slane %v4941, %v4948
        %v4951 = vunpack.c.l.s4 1983009808
        %v4952 = vunpack.c.0.s8 %v4951
        %v4953 = vlaneseq
        %v4954 = vshrl.u32 %v4953, 7
        %v4955 = vsub.s32 %v4952, %v4954
        %v4956 = vrot.slane %v4942, %v4955
        %v4957 = vcombine.low %v4901, %v4917
        %v4958 = vcombine.high %v4901, %v4917
        %v4960 = vunpack.c.l.s4 1934713408
        %v4961 = vunpack.c.0.s8 %v4960
        %v4962 = vlaneseq
        %v4963 = vshrl.u32 %v4962, 7
        %v4964 = vsub.s32 %v4961, %v4963
        %v4965 = vrot.slane %v4957, %v4964
        %v4967 = vunpack.c.l.s4 1934713408
        %v4968 = vunpack.c.0.s8 %v4967
        %v4969 = vlaneseq
        %v4970 = vshrl.u32 %v4969, 7
        %v4971 = vsub.s32 %v4968, %v4970
        %v4972 = vrot.slane %v4958, %v4971
        %v4973 = vcombine.low %v4908, %v4924
        %v4974 = vcombine.high %v4908, %v4924
        %v4976 = vunpack.c.l.s4 1934713408
        %v4977 = vunpack.c.0.s8 %v4976
        %v4978 = vlaneseq
        %v4979 = vshrl.u32 %v4978, 7
        %v4980 = vsub.s32 %v4977, %v4979
        %v4981 = vrot.slane %v4973, %v4980
        %v4983 = vunpack.c.l.s4 1934713408
        %v4984 = vunpack.c.0.s8 %v4983
        %v4985 = vlaneseq
        %v4986 = vshrl.u32 %v4985, 7
        %v4987 = vsub.s32 %v4984, %v4986
        %v4988 = vrot.slane %v4974, %v4987
        %v4989 = vcombine.low %v4933, %v4949
        %v4990 = vcombine.high %v4933, %v4949
        %v4992 = vunpack.c.l.s4 1934713408
        %v4993 = vunpack.c.0.s8 %v4992
        %v4994 = vlaneseq
        %v4995 = vshrl.u32 %v4994, 7
        %v4996 = vsub.s32 %v4993, %v4995
        %v4997 = vrot.slane %v4989, %v4996
        %v4999 = vunpack.c.l.s4 1934713408
        %v5000 = vunpack.c.0.s8 %v4999
        %v5001 = vlaneseq
        %v5002 = vshrl.u32 %v5001, 7
        %v5003 = vsub.s32 %v5000, %v5002
        %v5004 = vrot.slane %v4990, %v5003
        %v5005 = vcombine.low %v4940, %v4956
        %v5006 = vcombine.high %v4940, %v4956
        %v5008 = vunpack.c.l.s4 1934713408
        %v5009 = vunpack.c.0.s8 %v5008
        %v5010 = vlaneseq
        %v5011 = vshrl.u32 %v5010, 7
        %v5012 = vsub.s32 %v5009, %v5011
        %v5013 = vrot.slane %v5005, %v5012
        %v5015 = vunpack.c.l.s4 1934713408
        %v5016 = vunpack.c.0.s8 %v5015
        %v5017 = vlaneseq
        %v5018 = vshrl.u32 %v5017, 7
        %v5019 = vsub.s32 %v5016, %v5018
        %v5020 = vrot.slane %v5006, %v5019
        %v5021 = vcombine.low %v4965, %v4997
        %v5022 = vcombine.high %v4965, %v4997
        %v5023 = vcombine.low %v4972, %v5004
        %v5024 = vcombine.high %v4972, %v5004
        %v5025 = vcombine.low %v4981, %v5013
        %v5026 = vcombine.high %v4981, %v5013
        %v5027 = vcombine.low %v4988, %v5020
        %v5028 = vcombine.high %v4988, %v5020
        %v5029 = vcombine.low %v4030, %v4034
        %v5030 = vcombine.high %v4030, %v4034
        %v5032 = vunpack.c.l.s4 1983009808
        %v5033 = vunpack.c.0.s8 %v5032
        %v5034 = vlaneseq
        %v5035 = vshrl.u32 %v5034, 7
        %v5036 = vsub.s32 %v5033, %v5035
        %v5037 = vrot.slane %v5029, %v5036
        %v5039 = vunpack.c.l.s4 1983009808
        %v5040 = vunpack.c.0.s8 %v5039
        %v5041 = vlaneseq
        %v5042 = vshrl.u32 %v5041, 7
        %v5043 = vsub.s32 %v5040, %v5042
        %v5044 = vrot.slane %v5030, %v5043
        %v5045 = vcombine.low %v4032, %v4036
        %v5046 = vcombine.high %v4032, %v4036
        %v5048 = vunpack.c.l.s4 1983009808
        %v5049 = vunpack.c.0.s8 %v5048
        %v5050 = vlaneseq
        %v5051 = vshrl.u32 %v5050, 7
        %v5052 = vsub.s32 %v5049, %v5051
        %v5053 = vrot.slane %v5045, %v5052
        %v5055 = vunpack.c.l.s4 1983009808
        %v5056 = vunpack.c.0.s8 %v5055
        %v5057 = vlaneseq
        %v5058 = vshrl.u32 %v5057, 7
        %v5059 = vsub.s32 %v5056, %v5058
        %v5060 = vrot.slane %v5046, %v5059
        %v5061 = vcombine.low %v4038, %v4042
        %v5062 = vcombine.high %v4038, %v4042
        %v5064 = vunpack.c.l.s4 1983009808
        %v5065 = vunpack.c.0.s8 %v5064
        %v5066 = vlaneseq
        %v5067 = vshrl.u32 %v5066, 7
        %v5068 = vsub.s32 %v5065, %v5067
        %v5069 = vrot.slane %v5061, %v5068
        %v5071 = vunpack.c.l.s4 1983009808
        %v5072 = vunpack.c.0.s8 %v5071
        %v5073 = vlaneseq
        %v5074 = vshrl.u32 %v5073, 7
        %v5075 = vsub.s32 %v5072, %v5074
        %v5076 = vrot.slane %v5062, %v5075
        %v5077 = vcombine.low %v4040, %v4044
        %v5078 = vcombine.high %v4040, %v4044
        %v5080 = vunpack.c.l.s4 1983009808
        %v5081 = vunpack.c.0.s8 %v5080
        %v5082 = vlaneseq
        %v5083 = vshrl.u32 %v5082, 7
        %v5084 = vsub.s32 %v5081, %v5083
        %v5085 = vrot.slane %v5077, %v5084
        %v5087 = vunpack.c.l.s4 1983009808
        %v5088 = vunpack.c.0.s8 %v5087
        %v5089 = vlaneseq
        %v5090 = vshrl.u32 %v5089, 7
        %v5091 = vsub.s32 %v5088, %v5090
        %v5092 = vrot.slane %v5078, %v5091
        %v5093 = vcombine.low %v5037, %v5053
        %v5094 = vcombine.high %v5037, %v5053
        %v5096 = vunpack.c.l.s4 1934713408
        %v5097 = vunpack.c.0.s8 %v5096
        %v5098 = vlaneseq
        %v5099 = vshrl.u32 %v5098, 7
        %v5100 = vsub.s32 %v5097, %v5099
        %v5101 = vrot.slane %v5093, %v5100
        %v5103 = vunpack.c.l.s4 1934713408
        %v5104 = vunpack.c.0.s8 %v5103
        %v5105 = vlaneseq
        %v5106 = vshrl.u32 %v5105, 7
        %v5107 = vsub.s32 %v5104, %v5106
        %v5108 = vrot.slane %v5094, %v5107
        %v5109 = vcombine.low %v5044, %v5060
        %v5110 = vcombine.high %v5044, %v5060
        %v5112 = vunpack.c.l.s4 1934713408
        %v5113 = vunpack.c.0.s8 %v5112
        %v5114 = vlaneseq
        %v5115 = vshrl.u32 %v5114, 7
        %v5116 = vsub.s32 %v5113, %v5115
        %v5117 = vrot.slane %v5109, %v5116
        %v5119 = vunpack.c.l.s4 1934713408
        %v5120 = vunpack.c.0.s8 %v5119
        %v5121 = vlaneseq
        %v5122 = vshrl.u32 %v5121, 7
        %v5123 = vsub.s32 %v5120, %v5122
        %v5124 = vrot.slane %v5110, %v5123
        %v5125 = vcombine.low %v5069, %v5085
        %v5126 = vcombine.high %v5069, %v5085
        %v5128 = vunpack.c.l.s4 1934713408
        %v5129 = vunpack.c.0.s8 %v5128
        %v5130 = vlaneseq
        %v5131 = vshrl.u32 %v5130, 7
        %v5132 = vsub.s32 %v5129, %v5131
        %v5133 = vrot.slane %v5125, %v5132
        %v5135 = vunpack.c.l.s4 1934713408
        %v5136 = vunpack.c.0.s8 %v5135
        %v5137 = vlaneseq
        %v5138 = vshrl.u32 %v5137, 7
        %v5139 = vsub.s32 %v5136, %v5138
        %v5140 = vrot.slane %v5126, %v5139
        %v5141 = vcombine.low %v5076, %v5092
        %v5142 = vcombine.high %v5076, %v5092
        %v5144 = vunpack.c.l.s4 1934713408
        %v5145 = vunpack.c.0.s8 %v5144
        %v5146 = vlaneseq
        %v5147 = vshrl.u32 %v5146, 7
        %v5148 = vsub.s32 %v5145, %v5147
        %v5149 = vrot.slane %v5141, %v5148
        %v5151 = vunpack.c.l.s4 1934713408
        %v5152 = vunpack.c.0.s8 %v5151
        %v5153 = vlaneseq
        %v5154 = vshrl.u32 %v5153, 7
        %v5155 = vsub.s32 %v5152, %v5154
        %v5156 = vrot.slane %v5142, %v5155
        %v5157 = vcombine.low %v5101, %v5133
        %v5158 = vcombine.high %v5101, %v5133
        %v5159 = vcombine.low %v5108, %v5140
        %v5160 = vcombine.high %v5108, %v5140
        %v5161 = vcombine.low %v5117, %v5149
        %v5162 = vcombine.high %v5117, %v5149
        %v5163 = vcombine.low %v5124, %v5156
        %v5164 = vcombine.high %v5124, %v5156
        %v5165 = vcombine.low %v4054, %v4058
        %v5166 = vcombine.high %v4054, %v4058
        %v5168 = vunpack.c.l.s4 1983009808
        %v5169 = vunpack.c.0.s8 %v5168
        %v5170 = vlaneseq
        %v5171 = vshrl.u32 %v5170, 7
        %v5172 = vsub.s32 %v5169, %v5171
        %v5173 = vrot.slane %v5165, %v5172
        %v5175 = vunpack.c.l.s4 1983009808
        %v5176 = vunpack.c.0.s8 %v5175
        %v5177 = vlaneseq
        %v5178 = vshrl.u32 %v5177, 7
        %v5179 = vsub.s32 %v5176, %v5178
        %v5180 = vrot.slane %v5166, %v5179
        %v5181 = vcombine.low %v4056, %v4060
        %v5182 = vcombine.high %v4056, %v4060
        %v5184 = vunpack.c.l.s4 1983009808
        %v5185 = vunpack.c.0.s8 %v5184
        %v5186 = vlaneseq
        %v5187 = vshrl.u32 %v5186, 7
        %v5188 = vsub.s32 %v5185, %v5187
        %v5189 = vrot.slane %v5181, %v5188
        %v5191 = vunpack.c.l.s4 1983009808
        %v5192 = vunpack.c.0.s8 %v5191
        %v5193 = vlaneseq
        %v5194 = vshrl.u32 %v5193, 7
        %v5195 = vsub.s32 %v5192, %v5194
        %v5196 = vrot.slane %v5182, %v5195
        %v5197 = vcombine.low %v4062, %v4066
        %v5198 = vcombine.high %v4062, %v4066
        %v5200 = vunpack.c.l.s4 1983009808
        %v5201 = vunpack.c.0.s8 %v5200
        %v5202 = vlaneseq
        %v5203 = vshrl.u32 %v5202, 7
        %v5204 = vsub.s32 %v5201, %v5203
        %v5205 = vrot.slane %v5197, %v5204
        %v5207 = vunpack.c.l.s4 1983009808
        %v5208 = vunpack.c.0.s8 %v5207
        %v5209 = vlaneseq
        %v5210 = vshrl.u32 %v5209, 7
        %v5211 = vsub.s32 %v5208, %v5210
        %v5212 = vrot.slane %v5198, %v5211
        %v5213 = vcombine.low %v4064, %v4068
        %v5214 = vcombine.high %v4064, %v4068
        %v5216 = vunpack.c.l.s4 1983009808
        %v5217 = vunpack.c.0.s8 %v5216
        %v5218 = vlaneseq
        %v5219 = vshrl.u32 %v5218, 7
        %v5220 = vsub.s32 %v5217, %v5219
        %v5221 = vrot.slane %v5213, %v5220
        %v5223 = vunpack.c.l.s4 1983009808
        %v5224 = vunpack.c.0.s8 %v5223
        %v5225 = vlaneseq
        %v5226 = vshrl.u32 %v5225, 7
        %v5227 = vsub.s32 %v5224, %v5226
        %v5228 = vrot.slane %v5214, %v5227
        %v5229 = vcombine.low %v5173, %v5189
        %v5230 = vcombine.high %v5173, %v5189
        %v5232 = vunpack.c.l.s4 1934713408
        %v5233 = vunpack.c.0.s8 %v5232
        %v5234 = vlaneseq
        %v5235 = vshrl.u32 %v5234, 7
        %v5236 = vsub.s32 %v5233, %v5235
        %v5237 = vrot.slane %v5229, %v5236
        %v5239 = vunpack.c.l.s4 1934713408
        %v5240 = vunpack.c.0.s8 %v5239
        %v5241 = vlaneseq
        %v5242 = vshrl.u32 %v5241, 7
        %v5243 = vsub.s32 %v5240, %v5242
        %v5244 = vrot.slane %v5230, %v5243
        %v5245 = vcombine.low %v5180, %v5196
        %v5246 = vcombine.high %v5180, %v5196
        %v5248 = vunpack.c.l.s4 1934713408
        %v5249 = vunpack.c.0.s8 %v5248
        %v5250 = vlaneseq
        %v5251 = vshrl.u32 %v5250, 7
        %v5252 = vsub.s32 %v5249, %v5251
        %v5253 = vrot.slane %v5245, %v5252
        %v5255 = vunpack.c.l.s4 1934713408
        %v5256 = vunpack.c.0.s8 %v5255
        %v5257 = vlaneseq
        %v5258 = vshrl.u32 %v5257, 7
        %v5259 = vsub.s32 %v5256, %v5258
        %v5260 = vrot.slane %v5246, %v5259
        %v5261 = vcombine.low %v5205, %v5221
        %v5262 = vcombine.high %v5205, %v5221
        %v5264 = vunpack.c.l.s4 1934713408
        %v5265 = vunpack.c.0.s8 %v5264
        %v5266 = vlaneseq
        %v5267 = vshrl.u32 %v5266, 7
        %v5268 = vsub.s32 %v5265, %v5267
        %v5269 = vrot.slane %v5261, %v5268
        %v5271 = vunpack.c.l.s4 1934713408
        %v5272 = vunpack.c.0.s8 %v5271
        %v5273 = vlaneseq
        %v5274 = vshrl.u32 %v5273, 7
        %v5275 = vsub.s32 %v5272, %v5274
        %v5276 = vrot.slane %v5262, %v5275
        %v5277 = vcombine.low %v5212, %v5228
        %v5278 = vcombine.high %v5212, %v5228
        %v5280 = vunpack.c.l.s4 1934713408
        %v5281 = vunpack.c.0.s8 %v5280
        %v5282 = vlaneseq
        %v5283 = vshrl.u32 %v5282, 7
        %v5284 = vsub.s32 %v5281, %v5283
        %v5285 = vrot.slane %v5277, %v5284
        %v5287 = vunpack.c.l.s4 1934713408
        %v5288 = vunpack.c.0.s8 %v5287
        %v5289 = vlaneseq
        %v5290 = vshrl.u32 %v5289, 7
        %v5291 = vsub.s32 %v5288, %v5290
        %v5292 = vrot.slane %v5278, %v5291
        %v5293 = vcombine.low %v5237, %v5269
        %v5294 = vcombine.high %v5237, %v5269
        %v5295 = vcombine.low %v5244, %v5276
        %v5296 = vcombine.high %v5244, %v5276
        %v5297 = vcombine.low %v5253, %v5285
        %v5298 = vcombine.high %v5253, %v5285
        %v5299 = vcombine.low %v5260, %v5292
        %v5300 = vcombine.high %v5260, %v5292
        %5310 = vrot.lane.b32.xlu0 %v4206, 8
        %v5311 = vpop.permute.xlu0 %5310
        %5312 = vrot.lane.b32.xlu0 %v4342, 8
        %v5313 = vpop.permute.xlu0 %5312
        %5314 = vrot.lane.b32.xlu0 %v4478, 8
        %v5315 = vpop.permute.xlu0 %5314
        %5316 = vrot.lane.b32.xlu0 %v4614, 8
        %v5317 = vpop.permute.xlu0 %5316
        %5318 = vrot.lane.b32.xlu0 %v4750, 8
        %v5319 = vpop.permute.xlu0 %5318
        %5320 = vrot.lane.b32.xlu0 %v4886, 8
        %v5321 = vpop.permute.xlu0 %5320
        %5322 = vrot.lane.b32.xlu0 %v5022, 8
        %v5323 = vpop.permute.xlu0 %5322
        %5324 = vrot.lane.b32.xlu0 %v5158, 8
        %v5325 = vpop.permute.xlu0 %5324
        %5326 = vrot.lane.b32.xlu0 %v5294, 8
        %v5327 = vpop.permute.xlu0 %5326
        %5346 = vrot.lane.b32.xlu0 %v4207, 16
        %v5347 = vpop.permute.xlu0 %5346
        %5348 = vrot.lane.b32.xlu0 %v4343, 16
        %v5349 = vpop.permute.xlu0 %5348
        %5350 = vrot.lane.b32.xlu0 %v4479, 16
        %v5351 = vpop.permute.xlu0 %5350
        %5352 = vrot.lane.b32.xlu0 %v4615, 16
        %v5353 = vpop.permute.xlu0 %5352
        %5354 = vrot.lane.b32.xlu0 %v4751, 16
        %v5355 = vpop.permute.xlu0 %5354
        %5356 = vrot.lane.b32.xlu0 %v4887, 16
        %v5357 = vpop.permute.xlu0 %5356
        %5358 = vrot.lane.b32.xlu0 %v5023, 16
        %v5359 = vpop.permute.xlu0 %5358
        %5360 = vrot.lane.b32.xlu0 %v5159, 16
        %v5361 = vpop.permute.xlu0 %5360
        %5362 = vrot.lane.b32.xlu0 %v5295, 16
        %v5363 = vpop.permute.xlu0 %5362
        %5382 = vrot.lane.b32.xlu0 %v4208, 24
        %v5383 = vpop.permute.xlu0 %5382
        %5384 = vrot.lane.b32.xlu0 %v4344, 24
        %v5385 = vpop.permute.xlu0 %5384
        %5386 = vrot.lane.b32.xlu0 %v4480, 24
        %v5387 = vpop.permute.xlu0 %5386
        %5388 = vrot.lane.b32.xlu0 %v4616, 24
        %v5389 = vpop.permute.xlu0 %5388
        %5390 = vrot.lane.b32.xlu0 %v4752, 24
        %v5391 = vpop.permute.xlu0 %5390
        %5392 = vrot.lane.b32.xlu0 %v4888, 24
        %v5393 = vpop.permute.xlu0 %5392
        %5394 = vrot.lane.b32.xlu0 %v5024, 24
        %v5395 = vpop.permute.xlu0 %5394
        %5396 = vrot.lane.b32.xlu0 %v5160, 24
        %v5397 = vpop.permute.xlu0 %5396
        %5398 = vrot.lane.b32.xlu0 %v5296, 24
        %v5399 = vpop.permute.xlu0 %5398
        %5418 = vrot.lane.b32.xlu0 %v4209, 32
        %v5419 = vpop.permute.xlu0 %5418
        %5420 = vrot.lane.b32.xlu0 %v4345, 32
        %v5421 = vpop.permute.xlu0 %5420
        %5422 = vrot.lane.b32.xlu0 %v4481, 32
        %v5423 = vpop.permute.xlu0 %5422
        %5424 = vrot.lane.b32.xlu0 %v4617, 32
        %v5425 = vpop.permute.xlu0 %5424
        %5426 = vrot.lane.b32.xlu0 %v4753, 32
        %v5427 = vpop.permute.xlu0 %5426
        %5428 = vrot.lane.b32.xlu0 %v4889, 32
        %v5429 = vpop.permute.xlu0 %5428
        %5430 = vrot.lane.b32.xlu0 %v5025, 32
        %v5431 = vpop.permute.xlu0 %5430
        %5432 = vrot.lane.b32.xlu0 %v5161, 32
        %v5433 = vpop.permute.xlu0 %5432
        %5434 = vrot.lane.b32.xlu0 %v5297, 32
        %v5435 = vpop.permute.xlu0 %5434
        %5454 = vrot.lane.b32.xlu0 %v4210, 40
        %v5455 = vpop.permute.xlu0 %5454
        %5456 = vrot.lane.b32.xlu0 %v4346, 40
        %v5457 = vpop.permute.xlu0 %5456
        %5458 = vrot.lane.b32.xlu0 %v4482, 40
        %v5459 = vpop.permute.xlu0 %5458
        %5460 = vrot.lane.b32.xlu0 %v4618, 40
        %v5461 = vpop.permute.xlu0 %5460
        %5462 = vrot.lane.b32.xlu0 %v4754, 40
        %v5463 = vpop.permute.xlu0 %5462
        %5464 = vrot.lane.b32.xlu0 %v4890, 40
        %v5465 = vpop.permute.xlu0 %5464
        %5466 = vrot.lane.b32.xlu0 %v5026, 40
        %v5467 = vpop.permute.xlu0 %5466
        %5468 = vrot.lane.b32.xlu0 %v5162, 40
        %v5469 = vpop.permute.xlu0 %5468
        %5470 = vrot.lane.b32.xlu0 %v5298, 40
        %v5471 = vpop.permute.xlu0 %5470
        %5490 = vrot.lane.b32.xlu0 %v4211, 48
        %v5491 = vpop.permute.xlu0 %5490
        %5492 = vrot.lane.b32.xlu0 %v4347, 48
        %v5493 = vpop.permute.xlu0 %5492
        %5494 = vrot.lane.b32.xlu0 %v4483, 48
        %v5495 = vpop.permute.xlu0 %5494
        %5496 = vrot.lane.b32.xlu0 %v4619, 48
        %v5497 = vpop.permute.xlu0 %5496
        %5498 = vrot.lane.b32.xlu0 %v4755, 48
        %v5499 = vpop.permute.xlu0 %5498
        %5500 = vrot.lane.b32.xlu0 %v4891, 48
        %v5501 = vpop.permute.xlu0 %5500
        %5502 = vrot.lane.b32.xlu0 %v5027, 48
        %v5503 = vpop.permute.xlu0 %5502
        %5504 = vrot.lane.b32.xlu0 %v5163, 48
        %v5505 = vpop.permute.xlu0 %5504
        %5506 = vrot.lane.b32.xlu0 %v5299, 48
        %v5507 = vpop.permute.xlu0 %5506
        %5526 = vrot.lane.b32.xlu0 %v4212, 56
        %v5527 = vpop.permute.xlu0 %5526
        %5528 = vrot.lane.b32.xlu0 %v4348, 56
        %v5529 = vpop.permute.xlu0 %5528
        %5530 = vrot.lane.b32.xlu0 %v4484, 56
        %v5531 = vpop.permute.xlu0 %5530
        %5532 = vrot.lane.b32.xlu0 %v4620, 56
        %v5533 = vpop.permute.xlu0 %5532
        %5534 = vrot.lane.b32.xlu0 %v4756, 56
        %v5535 = vpop.permute.xlu0 %5534
        %5536 = vrot.lane.b32.xlu0 %v4892, 56
        %v5537 = vpop.permute.xlu0 %5536
        %5538 = vrot.lane.b32.xlu0 %v5028, 56
        %v5539 = vpop.permute.xlu0 %5538
        %5540 = vrot.lane.b32.xlu0 %v5164, 56
        %v5541 = vpop.permute.xlu0 %5540
        %5542 = vrot.lane.b32.xlu0 %v5300, 56
        %v5543 = vpop.permute.xlu0 %5542
        %v5553 = vsel %vm3433, %v4205, %v5311
        %v5554 = vsel %vm3433, %v4341, %v5313
        %v5555 = vsel %vm3433, %v4477, %v5315
        %v5556 = vsel %vm3433, %v4613, %v5317
        %v5557 = vsel %vm3433, %v4749, %v5319
        %v5558 = vsel %vm3433, %v4885, %v5321
        %v5559 = vsel %vm3433, %v5021, %v5323
        %v5560 = vsel %vm3433, %v5157, %v5325
        %v5561 = vsel %vm3433, %v5293, %v5327
        %v5562 = vsel %vm3439, %v5553, %v5347
        %v5563 = vsel %vm3439, %v5554, %v5349
        %v5564 = vsel %vm3439, %v5555, %v5351
        %v5565 = vsel %vm3439, %v5556, %v5353
        %v5566 = vsel %vm3439, %v5557, %v5355
        %v5567 = vsel %vm3439, %v5558, %v5357
        %v5568 = vsel %vm3439, %v5559, %v5359
        %v5569 = vsel %vm3439, %v5560, %v5361
        %v5570 = vsel %vm3439, %v5561, %v5363
        %v5571 = vsel %vm3445, %v5562, %v5383
        %v5572 = vsel %vm3445, %v5563, %v5385
        %v5573 = vsel %vm3445, %v5564, %v5387
        %v5574 = vsel %vm3445, %v5565, %v5389
        %v5575 = vsel %vm3445, %v5566, %v5391
        %v5576 = vsel %vm3445, %v5567, %v5393
        %v5577 = vsel %vm3445, %v5568, %v5395
        %v5578 = vsel %vm3445, %v5569, %v5397
        %v5579 = vsel %vm3445, %v5570, %v5399
        %v5580 = vsel %vm3451, %v5571, %v5419
        %v5581 = vsel %vm3451, %v5572, %v5421
        %v5582 = vsel %vm3451, %v5573, %v5423
        %v5583 = vsel %vm3451, %v5574, %v5425
        %v5584 = vsel %vm3451, %v5575, %v5427
        %v5585 = vsel %vm3451, %v5576, %v5429
        %v5586 = vsel %vm3451, %v5577, %v5431
        %v5587 = vsel %vm3451, %v5578, %v5433
        %v5588 = vsel %vm3451, %v5579, %v5435
        %v5589 = vsel %vm3457, %v5580, %v5455
        %v5590 = vsel %vm3457, %v5581, %v5457
        %v5591 = vsel %vm3457, %v5582, %v5459
        %v5592 = vsel %vm3457, %v5583, %v5461
        %v5593 = vsel %vm3457, %v5584, %v5463
        %v5594 = vsel %vm3457, %v5585, %v5465
        %v5595 = vsel %vm3457, %v5586, %v5467
        %v5596 = vsel %vm3457, %v5587, %v5469
        %v5597 = vsel %vm3457, %v5588, %v5471
        %v5598 = vsel %vm3463, %v5589, %v5491
        %v5599 = vsel %vm3463, %v5590, %v5493
        %v5600 = vsel %vm3463, %v5591, %v5495
        %v5601 = vsel %vm3463, %v5592, %v5497
        %v5602 = vsel %vm3463, %v5593, %v5499
        %v5603 = vsel %vm3463, %v5594, %v5501
        %v5604 = vsel %vm3463, %v5595, %v5503
        %v5605 = vsel %vm3463, %v5596, %v5505
        %v5606 = vsel %vm3463, %v5597, %v5507
        %v5607 = vsel %vm3469, %v5598, %v5527
        %v5608 = vsel %vm3469, %v5599, %v5529
        %v5609 = vsel %vm3469, %v5600, %v5531
        %v5610 = vsel %vm3469, %v5601, %v5533
        %v5611 = vsel %vm3469, %v5602, %v5535
        %v5612 = vsel %vm3469, %v5603, %v5537
        %v5613 = vsel %vm3469, %v5604, %v5539
        %v5614 = vsel %vm3469, %v5605, %v5541
        %v5615 = vsel %vm3469, %v5606, %v5543
        %5617 = vset.pattern.permute.xlu0 0
        %5618 = vperm.xlu0 %5617, %v296
        %v5619 = vpop.permute.xlu0 %5618
        %vm5621 = vcmask 588800
        %v5623 = vsel %vm5621, %v294, 0
        %5625 = vmatprep.subr.mxu0 0.0
        %5626 = vmatpush1.msra.mxu0 %v5607
        %5627 = vmatprep.subr.mxu0 0.0
        %5628 = vmatpush1.msra.mxu0 %v5608
        %5629 = vmatprep.subr.mxu0 0.0
        %5630 = vmatpush1.msra.mxu0 %v5609
        %5631 = vmatprep.subr.mxu0 0.0
        %5632 = vmatpush1.msra.mxu0 %v5610
        %5633 = vmatprep.subr.mxu0 0.0
        %5634 = vmatpush1.msra.mxu0 %v5611
        %5635 = vmatprep.subr.mxu0 0.0
        %5636 = vmatpush1.msra.mxu0 %v5612
        %5637 = vmatprep.subr.mxu0 0.0
        %5638 = vmatpush1.msra.mxu0 %v5613
        %5639 = vmatprep.subr.mxu0 0.0
        %5640 = vmatpush1.msra.mxu0 %v5614
        %5641 = vmatprep.subr.mxu0 0.0
        %5642 = vmatpush1.msra.mxu0 %v5615
        %5643 = vmatprep.subr.mxu0 0.0
        %5644 = vmatpush1.msra.mxu0 0.0
        %5645 = vmatprep.subr.mxu0 0.0
        %5646 = vmatpush1.msra.mxu0 0.0
        %5647 = vmatprep.subr.mxu0 0.0
        %5648 = vmatpush1.msra.mxu0 0.0
        %5649 = vmatprep.subr.mxu0 0.0
        %5650 = vmatpush1.msra.mxu0 0.0
        %5651 = vmatprep.subr.mxu0 0.0
        %5652 = vmatpush1.msra.mxu0 0.0
        %5653 = vmatprep.subr.mxu0 0.0
        %5654 = vmatpush1.msra.mxu0 0.0
        %5655 = vmatprep.subr.mxu0 0.0
        %5656 = vmatpush1.msra.mxu0 0.0
        %5657 = vmatprep.subr.mxu0 0.0
        %5658 = vmatpush1.msra.mxu0 0.0
        %5659 = vmatprep.subr.mxu0 0.0
        %5660 = vmatpush1.msra.mxu0 0.0
        %5661 = vmatprep.subr.mxu0 0.0
        %5662 = vmatpush1.msra.mxu0 0.0
        %5663 = vmatprep.subr.mxu0 0.0
        %5664 = vmatpush1.msra.mxu0 0.0
        %5665 = vmatprep.subr.mxu0 0.0
        %5666 = vmatpush1.msra.mxu0 0.0
        %5667 = vmatprep.subr.mxu0 0.0
        %5668 = vmatpush1.msra.mxu0 0.0
        %5669 = vmatprep.subr.mxu0 0.0
        %5670 = vmatpush1.msra.mxu0 0.0
        %5671 = vmatprep.subr.mxu0 0.0
        %5672 = vmatpush1.msra.mxu0 0.0
        %5673 = vmatprep.subr.mxu0 0.0
        %5674 = vmatpush1.msra.mxu0 0.0
        %5675 = vmatprep.subr.mxu0 0.0
        %5676 = vmatpush1.msra.mxu0 0.0
        %5677 = vmatprep.subr.mxu0 0.0
        %5678 = vmatpush1.msra.mxu0 0.0
        %5679 = vmatprep.subr.mxu0 0.0
        %5680 = vmatpush1.msra.mxu0 0.0
        %5681 = vmatprep.subr.mxu0 0.0
        %5682 = vmatpush1.msra.mxu0 0.0
        %5683 = vmatprep.subr.mxu0 0.0
        %5684 = vmatpush1.msra.mxu0 0.0
        %5685 = vmatprep.subr.mxu0 0.0
        %5686 = vmatpush1.msra.mxu0 0.0
        %5687 = vmatprep.subr.mxu0 0.0
        %5688 = vmatpush1.msra.mxu0 0.0
        %5689 = vmatprep.mubr.f32.mxu0 0.0
        %5690 = vmatmul.mubr.f32.gmra.mrb[0].mxu0 %v5623
        %v5691 = vpop.f32.mrb[0].mxu0
        %v5692 = vadd.f32 %v5619, %v5691
        %v5693 = vpop.f32.mrb[0].mxu0
        %5694 = vdwg.mxu0
        %v5695 = vmax.f32 %v5692, 0.0
        %vm5696 = vcmask 523264
        %5697 = vst.msk [vmem:[%s292] sm:$0xff] %vm5696, %v5695
        %s5698 = sand.u32 %s142, 1
        %s5699 = scalar_lea.sflag [#allocation4], %s5698
        %s5700 = sand.u32 %s142, 1
        %s5701 = smul.addr %s5700, 8
        %s5702 = scalar_lea.vmem [#allocation11], %s5701
        // Predicated region
        $region61: #{tpu_custom_call.1} parent=39 // pred_check
          %p5703 = pneg %p152
        $region62: #{tpu_custom_call.1} parent=39 // pred_check_branch
          %5705 = sbr.rel (%p5703) target = $region64
        $region63: #{tpu_custom_call.1} parent=39 // pred_region
          %s5707 = ssub.s32 128, 128
          %5708 = vsyncadd %s5699, %s5707
          %s5709 = smul.addr %s24, 128
          %s5710 = scalar_lea.hbm %s5, %s5709
          %s5712 = sshll.u32 %s5702, 4
          %s5713 = int_to_ptr.vmem [resolvable:$true] %s5712
          %5715 = dma.vmem_to_hbm [thread:$0]  %s5713, 128, %s5710, %s5699
        $region64: #{tpu_custom_call.1} parent=39 // pred_fallthru
          _
      $region40: #{tpu_custom_call.1} parent=5 // pred_fallthru
        _
      %p5716 = scmp.le.s32.totalorder 2, %s19
      // Predicated region
      $region65: #{tpu_custom_call.1} parent=5 // pred_check
        %p5717 = pneg %p5716
      $region66: #{tpu_custom_call.1} parent=5 // pred_check_branch
        %5719 = sbr.rel (%p5717) target = $region68
      $region67: #{tpu_custom_call.1} parent=5 // pred_region
        %s5720 = ssub.s32 %s19, 2
        // Predicated region
        $region69: #{tpu_custom_call.1} parent=67 // pred_check
          %p5721 = pneg %p158
        $region70: #{tpu_custom_call.1} parent=67 // pred_check_branch
          %5723 = sbr.rel (%p5721) target = $region72
        $region71: #{tpu_custom_call.1} parent=67 // pred_region
          %s5724 = sand.u32 %s143, 1
          %s5725 = scalar_lea.sflag [#allocation4], %s5724
          %s5726 = sand.u32 %s143, 1
          %s5727 = smul.addr %s5726, 8
          %s5728 = scalar_lea.vmem [#allocation11], %s5727
          %5729 = dma.done %s5725, 128
        $region72: #{tpu_custom_call.1} parent=67 // pred_fallthru
          _
      $region68: #{tpu_custom_call.1} parent=5 // pred_fallthru
        _
    $region6: #{tpu_custom_call.1} parent=1 // loop_footer
      %s23 = sadd.s32 1, %s19
    $region7: #{tpu_custom_call.1} parent=1 // loop_footer_branch
      %18 = sbr.rel target = $region3
    $region8: #{tpu_custom_call.1} parent=1 // loop_exit
      _
    %5730 = vsyncpa [#allocation3], 1
    %s5731 = scalar_lea.sflag [#allocation3], 1
    %5732 = vsyncpa %s5731, 1
    %5733 = vsyncpa [#allocation6], 1
    %5734 = vsyncpa [#allocation9], 1
    %5735 = vsyncpa [#allocation4], 1
    %s5736 = scalar_lea.sflag [#allocation4], 1
    %5737 = vsyncpa %s5736, 1

</llo_original>
